<compile_context>
chip_gen: v7x
topology: tpu7x:2x2x1
jax: 0.10.0
libtpu: 0.0.40
codegen_flags: <defaults>
</compile_context>

<pallas_src>
import functools

import jax
import jax.numpy as jnp
import numpy as np
from jax import lax
from jax.experimental import pallas as pl
from jax.experimental.pallas import tpu as pltpu


def _csr_kernel(xpf_ref, mask_ref, colmask_ref, wall_ref, bias_ref,
                wqk_ref, vw_ref, out_ref, patch_ref, *,
                channels, width, hw, tq, taps, shift_idx, pad_top):
    C = channels
    W = width
    f32 = jnp.float32
    bf16 = jnp.bfloat16

    # ---- in-kernel im2col: build the 74-tap patch matrix in VMEM ----------
    cms = {s: colmask_ref[i:i + 1, :] for s, i in shift_idx.items()}
    for t, (dh, dw) in enumerate(taps):
        start = (pad_top + dh) * W + dw          # static flat offset
        xs = xpf_ref[:, start:start + hw]        # (C, HW) f32 shifted view
        if dw != 0:
            xs = xs * cms[dw]                    # zero horizontally-wrapped cols
        patch_ref[t * C:(t + 1) * C, :] = xs.astype(bf16)

    b_multi = bias_ref[:, 0:1]                   # (C, 1) f32
    v_b = bias_ref[:, 1:2]                       # (C, 1) f32
    r_w = bias_ref[:, 2:3]                       # (C, 1) f32  (= k_w^T q_b)

    # ---- fused local + wide + combine context: one deep bf16 MXU matmul ---
    multi = jnp.dot(wall_ref[...], patch_ref[...],
                    preferred_element_type=f32) + b_multi        # (C, HW) f32
    multi_bf = multi.astype(bf16)

    # ---- folded Q/K and V projections --------------------------------------
    temp = jnp.dot(wqk_ref[...], multi_bf, preferred_element_type=f32)
    temp_bf = temp.astype(bf16)                                   # (C, HW)
    r = jnp.sum(r_w * multi, axis=0, keepdims=True)               # (1, HW) f32
    v = jnp.dot(vw_ref[...], multi_bf, preferred_element_type=f32) + v_b
    v_bf = v.astype(bf16)                                         # (C, HW)

    # ---- blocked softmax(Q^T K) and V @ attn^T -----------------------------
    for qb in range(hw // tq):
        i0 = qb * tq
        mb = multi_bf[:, i0:i0 + tq]                              # (C, TQ)
        logits = lax.dot_general(mb, temp_bf, (((0,), (0,)), ((), ())),
                                 preferred_element_type=f32) + r  # (TQ, HW)
        logits = logits - jnp.max(logits, axis=-1, keepdims=True)
        e = jnp.exp(logits)
        denom = jnp.sum(e, axis=-1, keepdims=True)
        attn = (e * pl.reciprocal(denom, approx=True)).astype(bf16)
        outb = lax.dot_general(v_bf, attn, (((1,), (1,)), ((), ())),
                               preferred_element_type=f32)        # (C, TQ)
        scale = 1.0 + mask_ref[:, i0:i0 + tq]                     # (1, TQ)
        out_ref[:, i0:i0 + tq] = (outb * scale).astype(out_ref.dtype)


def context_shadow_reasoning(x, mask, params):
    """x: (B, C, H, W) NCHW float32;  mask: (B, 1, MH, MW) float32."""
    B, C, H, W = x.shape
    HW = H * W
    PT = 7                                   # row pad: max |dh| = 6, +1 for column wrap
    PADHW = (H + 2 * PT) * W

    # nearest-neighbour mask resize (matches F.interpolate 'nearest')
    _, _, MH, MW = mask.shape
    ih = (jnp.arange(H) * MH) // H
    iw = (jnp.arange(W) * MW) // W
    mask_flat = mask[:, :, ih][:, :, :, iw].reshape(B, 1, HW).astype(jnp.float32)

    # row-padded, flattened activation: xpf[b, c, (PT+h)*W + w] = x[b, c, h, w]
    xpf = jnp.pad(x, ((0, 0), (0, 0), (PT, PT), (0, 0))).reshape(B, C, PADHW)
    xpf = xpf.astype(jnp.float32)

    # tap offsets (dh, dw): 7x7 dil=1 then 5x5 dil=3, same order as Wall columns
    taps = [(kh - 3, kw - 3) for kh in range(7) for kw in range(7)]
    taps += [(3 * (kh - 2), 3 * (kw - 2)) for kh in range(5) for kw in range(5)]
    n_taps = len(taps)                       # 74

    # column-validity masks for the non-zero horizontal shifts
    shifts = sorted({dw for _, dw in taps if dw != 0})
    shift_idx = {s: i for i, s in enumerate(shifts)}
    widx = np.arange(HW) % W
    colmask = jnp.asarray(np.stack(
        [((widx + s >= 0) & (widx + s < W)).astype(np.float32) for s in shifts]))

    # ---- offline weight folding (trace-time linear algebra) ----------------
    A = params['comb_w'][:, :C]
    Bw = params['comb_w'][:, C:]
    W1 = jnp.einsum('om,mikl->oikl', A, params['ctx_w'])      # (C, C, 7, 7)
    W2 = jnp.einsum('om,mikl->oikl', Bw, params['wide_w'])    # (C, C, 5, 5)
    wall = jnp.concatenate(
        [jnp.transpose(W1, (2, 3, 1, 0)).reshape(49 * C, C).T,
         jnp.transpose(W2, (2, 3, 1, 0)).reshape(25 * C, C).T], axis=1)  # (C, 74C)
    b_multi = A @ params['ctx_b'] + Bw @ params['wide_b'] + params['comb_b']
    w_qk = params['q_w'].T @ params['k_w']                    # (C, C)
    r_w = params['q_b'] @ params['k_w']                       # (C,)
    bias_pack = jnp.stack([b_multi, params['v_b'], r_w], axis=1).astype(jnp.float32)

    bf = lambda a: a.astype(jnp.bfloat16)
    TQ = 128 if HW % 128 == 0 else HW        # query-block size for the attention path

    kernel = functools.partial(
        _csr_kernel, channels=C, width=W, hw=HW, tq=TQ,
        taps=tuple(taps), shift_idx=shift_idx, pad_top=PT)

    full = lambda shape: pl.BlockSpec(shape, lambda b: (0,) * len(shape))

    out_flat = pl.pallas_call(
        kernel,
        out_shape=jax.ShapeDtypeStruct((B, C, HW), jnp.float32),
        grid=(B,),
        in_specs=[
            pl.BlockSpec((None, C, PADHW), lambda b: (b, 0, 0)),  # padded activation
            pl.BlockSpec((None, 1, HW), lambda b: (b, 0, 0)),     # resized mask
            full((len(shifts), HW)),                              # column masks
            full((C, n_taps * C)),                                # folded conv weights
            full((C, 3)),                                         # packed biases
            full((C, C)),                                         # W_qk = q_w^T k_w
            full((C, C)),                                         # v_w
        ],
        out_specs=pl.BlockSpec((None, C, HW), lambda b: (b, 0, 0)),
        scratch_shapes=[pltpu.VMEM((n_taps * C, HW), jnp.bfloat16)],  # patch matrix
        compiler_params=pltpu.CompilerParams(
            dimension_semantics=("parallel",),        # v7x: 2 TCs split the batch
            vmem_limit_bytes=16 * 1024 * 1024),       # per-step footprint ~1-2 MiB
    )(xpf, mask_flat, colmask, bf(wall), bias_pack, bf(w_qk), bf(params['v_w']))

    return out_flat.reshape(B, C, H, W)


def reference(x, mask, params):
    """Pure-JAX f32 reference mirroring the PyTorch forward."""
    B, C, H, W = x.shape
    HW = H * W
    dn = ('NCHW', 'OIHW', 'NCHW')
    bias = lambda b: b[None, :, None, None]
    local = lax.conv_general_dilated(x, params['ctx_w'], (1, 1),
                                     ((3, 3), (3, 3)),
                                     dimension_numbers=dn) + bias(params['ctx_b'])
    wide = lax.conv_general_dilated(x, params['wide_w'], (1, 1),
                                    ((6, 6), (6, 6)), rhs_dilation=(3, 3),
                                    dimension_numbers=dn) + bias(params['wide_b'])
    cat = jnp.concatenate([local, wide], axis=1)
    multi = jnp.einsum('oi,bihw->bohw', params['comb_w'], cat) + bias(params['comb_b'])
    q = (jnp.einsum('oi,bihw->bohw', params['q_w'], multi) + bias(params['q_b'])).reshape(B, -1, HW)
    k = (jnp.einsum('oi,bihw->bohw', params['k_w'], multi) + bias(params['k_b'])).reshape(B, -1, HW)
    v = (jnp.einsum('oi,bihw->bohw', params['v_w'], multi) + bias(params['v_b'])).reshape(B, -1, HW)
    attn = jax.nn.softmax(jnp.einsum('bci,bcj->bij', q, k), axis=-1)
    out = jnp.einsum('bcj,bij->bci', v, attn).reshape(B, C, H, W)
    _, _, MH, MW = mask.shape
    ih = (jnp.arange(H) * MH) // H
    iw = (jnp.arange(W) * MW) // W
    mask_rs = mask[:, :, ih][:, :, :, iw]
    return out * (1.0 + mask_rs)


if __name__ == "__main__":
    key = jax.random.PRNGKey(0)
    B, C, H, W = 2, 16, 16, 16
    C8 = C // 8
    ks = jax.random.split(key, 16)

    def w(k, shape, fan_in):
        return (jax.random.normal(k, shape, jnp.float32) / np.sqrt(fan_in)).astype(jnp.float32)

    params = dict(
        ctx_w=w(ks[0], (C, C, 7, 7), C * 49), ctx_b=w(ks[1], (C,), C * 49),
        wide_w=w(ks[2], (C, C, 5, 5), C * 25), wide_b=w(ks[3], (C,), C * 25),
        comb_w=w(ks[4], (C, 2 * C), 2 * C), comb_b=w(ks[5], (C,), 2 * C),
        q_w=w(ks[6], (C8, C), C), q_b=w(ks[7], (C8,), C),
        k_w=w(ks[8], (C8, C), C), k_b=w(ks[9], (C8,), C),
        v_w=w(ks[10], (C, C), C), v_b=w(ks[11], (C,), C),
    )

    x = jax.random.normal(ks[12], (B, C, H, W), jnp.float32)
    mask = (jax.random.uniform(ks[13], (B, 1, H // 2, W // 2)) > 0.5).astype(jnp.float32)

    out = jax.block_until_ready(context_shadow_reasoning(x, mask, params))
    ref = jax.block_until_ready(reference(x, mask, params))

    assert out.shape == (B, C, H, W)
    assert bool(jnp.all(jnp.isfinite(out)))
    np.testing.assert_allclose(np.asarray(out), np.asarray(ref), rtol=5e-2, atol=5e-2)
    print("KERNEL_OK")
</pallas_src>

<mosaic_0001>
module attributes {stable_mosaic.version = 11 : i64} {
  func.func @_csr_kernel(%arg0: i32, %arg1: memref<1x16x480xf32, #tpu.memory_space<vmem>>, %arg2: memref<1x1x256xf32, #tpu.memory_space<vmem>>, %arg3: memref<8x256xf32, #tpu.memory_space<vmem>>, %arg4: memref<16x1184xbf16, #tpu.memory_space<vmem>>, %arg5: memref<16x3xf32, #tpu.memory_space<vmem>>, %arg6: memref<16x16xbf16, #tpu.memory_space<vmem>>, %arg7: memref<16x16xbf16, #tpu.memory_space<vmem>>, %arg8: memref<1x16x256xf32, #tpu.memory_space<vmem>>, %arg9: memref<1184x256xbf16, #tpu.memory_space<vmem>>) attributes {dimension_semantics = [#tpu.dimension_semantics<parallel>], iteration_bounds = array<i64: 2>, scalar_prefetch = 0 : i64, scratch_operands = 1 : i64, tpu.core_type = #tpu.core_type<tc>, window_params = [{transform_indices = @transform_0, window_bounds = array<i64: 1, 16, 480>}, {transform_indices = @transform_1, window_bounds = array<i64: 1, 1, 256>}, {pipeline_mode = #tpu.pipeline_mode<synchronous>, transform_indices = @transform_2, window_bounds = array<i64: 8, 256>}, {pipeline_mode = #tpu.pipeline_mode<synchronous>, transform_indices = @transform_3, window_bounds = array<i64: 16, 1184>}, {pipeline_mode = #tpu.pipeline_mode<synchronous>, transform_indices = @transform_4, window_bounds = array<i64: 16, 3>}, {pipeline_mode = #tpu.pipeline_mode<synchronous>, transform_indices = @transform_5, window_bounds = array<i64: 16, 16>}, {pipeline_mode = #tpu.pipeline_mode<synchronous>, transform_indices = @transform_6, window_bounds = array<i64: 16, 16>}, {transform_indices = @transform_7, window_bounds = array<i64: 1, 16, 256>}]} {
    %c0 = arith.constant 0 : index
    %c0_0 = arith.constant 0 : index
    %0 = vector.load %arg3[%c0, %c0_0] : memref<8x256xf32, #tpu.memory_space<vmem>>, vector<1x256xf32>
    %c1 = arith.constant 1 : index
    %c0_1 = arith.constant 0 : index
    %1 = vector.load %arg3[%c1, %c0_1] : memref<8x256xf32, #tpu.memory_space<vmem>>, vector<1x256xf32>
    %c2 = arith.constant 2 : index
    %c0_2 = arith.constant 0 : index
    %2 = vector.load %arg3[%c2, %c0_2] : memref<8x256xf32, #tpu.memory_space<vmem>>, vector<1x256xf32>
    %c3 = arith.constant 3 : index
    %c0_3 = arith.constant 0 : index
    %3 = vector.load %arg3[%c3, %c0_3] : memref<8x256xf32, #tpu.memory_space<vmem>>, vector<1x256xf32>
    %c4 = arith.constant 4 : index
    %c0_4 = arith.constant 0 : index
    %4 = vector.load %arg3[%c4, %c0_4] : memref<8x256xf32, #tpu.memory_space<vmem>>, vector<1x256xf32>
    %c5 = arith.constant 5 : index
    %c0_5 = arith.constant 0 : index
    %5 = vector.load %arg3[%c5, %c0_5] : memref<8x256xf32, #tpu.memory_space<vmem>>, vector<1x256xf32>
    %c6 = arith.constant 6 : index
    %c0_6 = arith.constant 0 : index
    %6 = vector.load %arg3[%c6, %c0_6] : memref<8x256xf32, #tpu.memory_space<vmem>>, vector<1x256xf32>
    %c7 = arith.constant 7 : index
    %c0_7 = arith.constant 0 : index
    %7 = vector.load %arg3[%c7, %c0_7] : memref<8x256xf32, #tpu.memory_space<vmem>>, vector<1x256xf32>
    %c0_8 = arith.constant 0 : index
    %c0_9 = arith.constant 0 : index
    %c61 = arith.constant 61 : index
    %8 = vector.load %arg1[%c0_8, %c0_9, %c61] : memref<1x16x480xf32, #tpu.memory_space<vmem>>, vector<1x16x256xf32>
    %9 = vector.shape_cast %8 : vector<1x16x256xf32> to vector<16x256xf32>
    %10 = vector.broadcast %1 : vector<1x256xf32> to vector<16x256xf32>
    %11 = arith.mulf %9, %10 : vector<16x256xf32>
    %12 = arith.truncf %11 : vector<16x256xf32> to vector<16x256xbf16>
    %c0_10 = arith.constant 0 : index
    %c0_11 = arith.constant 0 : index
    %13 = vector.load %arg9[%c0_10, %c0_11] : memref<1184x256xbf16, #tpu.memory_space<vmem>>, vector<16x256xbf16>
    tpu.vector_store %arg9[%c0_10, %c0_11], %12 {strides = array<i32>} : memref<1184x256xbf16, #tpu.memory_space<vmem>>, vector<16x256xbf16>,
    %c0_12 = arith.constant 0 : index
    %c0_13 = arith.constant 0 : index
    %c62 = arith.constant 62 : index
    %14 = vector.load %arg1[%c0_12, %c0_13, %c62] : memref<1x16x480xf32, #tpu.memory_space<vmem>>, vector<1x16x256xf32>
    %15 = vector.shape_cast %14 : vector<1x16x256xf32> to vector<16x256xf32>
    %16 = vector.broadcast %2 : vector<1x256xf32> to vector<16x256xf32>
    %17 = arith.mulf %15, %16 : vector<16x256xf32>
    %18 = arith.truncf %17 : vector<16x256xf32> to vector<16x256xbf16>
    %c16 = arith.constant 16 : index
    %c0_14 = arith.constant 0 : index
    %19 = vector.load %arg9[%c16, %c0_14] : memref<1184x256xbf16, #tpu.memory_space<vmem>>, vector<16x256xbf16>
    tpu.vector_store %arg9[%c16, %c0_14], %18 {strides = array<i32>} : memref<1184x256xbf16, #tpu.memory_space<vmem>>, vector<16x256xbf16>,
    %c0_15 = arith.constant 0 : index
    %c0_16 = arith.constant 0 : index
    %c63 = arith.constant 63 : index
    %20 = vector.load %arg1[%c0_15, %c0_16, %c63] : memref<1x16x480xf32, #tpu.memory_space<vmem>>, vector<1x16x256xf32>
    %21 = vector.shape_cast %20 : vector<1x16x256xf32> to vector<16x256xf32>
    %22 = vector.broadcast %3 : vector<1x256xf32> to vector<16x256xf32>
    %23 = arith.mulf %21, %22 : vector<16x256xf32>
    %24 = arith.truncf %23 : vector<16x256xf32> to vector<16x256xbf16>
    %c32 = arith.constant 32 : index
    %c0_17 = arith.constant 0 : index
    %25 = vector.load %arg9[%c32, %c0_17] : memref<1184x256xbf16, #tpu.memory_space<vmem>>, vector<16x256xbf16>
    tpu.vector_store %arg9[%c32, %c0_17], %24 {strides = array<i32>} : memref<1184x256xbf16, #tpu.memory_space<vmem>>, vector<16x256xbf16>,
    %c0_18 = arith.constant 0 : index
    %c0_19 = arith.constant 0 : index
    %c64 = arith.constant 64 : index
    %26 = vector.load %arg1[%c0_18, %c0_19, %c64] : memref<1x16x480xf32, #tpu.memory_space<vmem>>, vector<1x16x256xf32>
    %27 = vector.shape_cast %26 : vector<1x16x256xf32> to vector<16x256xf32>
    %28 = arith.truncf %27 : vector<16x256xf32> to vector<16x256xbf16>
    %c48 = arith.constant 48 : index
    %c0_20 = arith.constant 0 : index
    %29 = vector.load %arg9[%c48, %c0_20] : memref<1184x256xbf16, #tpu.memory_space<vmem>>, vector<16x256xbf16>
    tpu.vector_store %arg9[%c48, %c0_20], %28 {strides = array<i32>} : memref<1184x256xbf16, #tpu.memory_space<vmem>>, vector<16x256xbf16>,
    %c0_21 = arith.constant 0 : index
    %c0_22 = arith.constant 0 : index
    %c65 = arith.constant 65 : index
    %30 = vector.load %arg1[%c0_21, %c0_22, %c65] : memref<1x16x480xf32, #tpu.memory_space<vmem>>, vector<1x16x256xf32>
    %31 = vector.shape_cast %30 : vector<1x16x256xf32> to vector<16x256xf32>
    %32 = vector.broadcast %4 : vector<1x256xf32> to vector<16x256xf32>
    %33 = arith.mulf %31, %32 : vector<16x256xf32>
    %34 = arith.truncf %33 : vector<16x256xf32> to vector<16x256xbf16>
    %c64_23 = arith.constant 64 : index
    %c0_24 = arith.constant 0 : index
    %35 = vector.load %arg9[%c64_23, %c0_24] : memref<1184x256xbf16, #tpu.memory_space<vmem>>, vector<16x256xbf16>
    tpu.vector_store %arg9[%c64_23, %c0_24], %34 {strides = array<i32>} : memref<1184x256xbf16, #tpu.memory_space<vmem>>, vector<16x256xbf16>,
    %c0_25 = arith.constant 0 : index
    %c0_26 = arith.constant 0 : index
    %c66 = arith.constant 66 : index
    %36 = vector.load %arg1[%c0_25, %c0_26, %c66] : memref<1x16x480xf32, #tpu.memory_space<vmem>>, vector<1x16x256xf32>
    %37 = vector.shape_cast %36 : vector<1x16x256xf32> to vector<16x256xf32>
    %38 = vector.broadcast %5 : vector<1x256xf32> to vector<16x256xf32>
    %39 = arith.mulf %37, %38 : vector<16x256xf32>
    %40 = arith.truncf %39 : vector<16x256xf32> to vector<16x256xbf16>
    %c80 = arith.constant 80 : index
    %c0_27 = arith.constant 0 : index
    %41 = vector.load %arg9[%c80, %c0_27] : memref<1184x256xbf16, #tpu.memory_space<vmem>>, vector<16x256xbf16>
    tpu.vector_store %arg9[%c80, %c0_27], %40 {strides = array<i32>} : memref<1184x256xbf16, #tpu.memory_space<vmem>>, vector<16x256xbf16>,
    %c0_28 = arith.constant 0 : index
    %c0_29 = arith.constant 0 : index
    %c67 = arith.constant 67 : index
    %42 = vector.load %arg1[%c0_28, %c0_29, %c67] : memref<1x16x480xf32, #tpu.memory_space<vmem>>, vector<1x16x256xf32>
    %43 = vector.shape_cast %42 : vector<1x16x256xf32> to vector<16x256xf32>
    %44 = vector.broadcast %6 : vector<1x256xf32> to vector<16x256xf32>
    %45 = arith.mulf %43, %44 : vector<16x256xf32>
    %46 = arith.truncf %45 : vector<16x256xf32> to vector<16x256xbf16>
    %c96 = arith.constant 96 : index
    %c0_30 = arith.constant 0 : index
    %47 = vector.load %arg9[%c96, %c0_30] : memref<1184x256xbf16, #tpu.memory_space<vmem>>, vector<16x256xbf16>
    tpu.vector_store %arg9[%c96, %c0_30], %46 {strides = array<i32>} : memref<1184x256xbf16, #tpu.memory_space<vmem>>, vector<16x256xbf16>,
    %c0_31 = arith.constant 0 : index
    %c0_32 = arith.constant 0 : index
    %c77 = arith.constant 77 : index
    %48 = vector.load %arg1[%c0_31, %c0_32, %c77] : memref<1x16x480xf32, #tpu.memory_space<vmem>>, vector<1x16x256xf32>
    %49 = vector.shape_cast %48 : vector<1x16x256xf32> to vector<16x256xf32>
    %50 = vector.broadcast %1 : vector<1x256xf32> to vector<16x256xf32>
    %51 = arith.mulf %49, %50 : vector<16x256xf32>
    %52 = arith.truncf %51 : vector<16x256xf32> to vector<16x256xbf16>
    %c112 = arith.constant 112 : index
    %c0_33 = arith.constant 0 : index
    %53 = vector.load %arg9[%c112, %c0_33] : memref<1184x256xbf16, #tpu.memory_space<vmem>>, vector<16x256xbf16>
    tpu.vector_store %arg9[%c112, %c0_33], %52 {strides = array<i32>} : memref<1184x256xbf16, #tpu.memory_space<vmem>>, vector<16x256xbf16>,
    %c0_34 = arith.constant 0 : index
    %c0_35 = arith.constant 0 : index
    %c78 = arith.constant 78 : index
    %54 = vector.load %arg1[%c0_34, %c0_35, %c78] : memref<1x16x480xf32, #tpu.memory_space<vmem>>, vector<1x16x256xf32>
    %55 = vector.shape_cast %54 : vector<1x16x256xf32> to vector<16x256xf32>
    %56 = vector.broadcast %2 : vector<1x256xf32> to vector<16x256xf32>
    %57 = arith.mulf %55, %56 : vector<16x256xf32>
    %58 = arith.truncf %57 : vector<16x256xf32> to vector<16x256xbf16>
    %c128 = arith.constant 128 : index
    %c0_36 = arith.constant 0 : index
    %59 = vector.load %arg9[%c128, %c0_36] : memref<1184x256xbf16, #tpu.memory_space<vmem>>, vector<16x256xbf16>
    tpu.vector_store %arg9[%c128, %c0_36], %58 {strides = array<i32>} : memref<1184x256xbf16, #tpu.memory_space<vmem>>, vector<16x256xbf16>,
    %c0_37 = arith.constant 0 : index
    %c0_38 = arith.constant 0 : index
    %c79 = arith.constant 79 : index
    %60 = vector.load %arg1[%c0_37, %c0_38, %c79] : memref<1x16x480xf32, #tpu.memory_space<vmem>>, vector<1x16x256xf32>
    %61 = vector.shape_cast %60 : vector<1x16x256xf32> to vector<16x256xf32>
    %62 = vector.broadcast %3 : vector<1x256xf32> to vector<16x256xf32>
    %63 = arith.mulf %61, %62 : vector<16x256xf32>
    %64 = arith.truncf %63 : vector<16x256xf32> to vector<16x256xbf16>
    %c144 = arith.constant 144 : index
    %c0_39 = arith.constant 0 : index
    %65 = vector.load %arg9[%c144, %c0_39] : memref<1184x256xbf16, #tpu.memory_space<vmem>>, vector<16x256xbf16>
    tpu.vector_store %arg9[%c144, %c0_39], %64 {strides = array<i32>} : memref<1184x256xbf16, #tpu.memory_space<vmem>>, vector<16x256xbf16>,
    %c0_40 = arith.constant 0 : index
    %c0_41 = arith.constant 0 : index
    %c80_42 = arith.constant 80 : index
    %66 = vector.load %arg1[%c0_40, %c0_41, %c80_42] : memref<1x16x480xf32, #tpu.memory_space<vmem>>, vector<1x16x256xf32>
    %67 = vector.shape_cast %66 : vector<1x16x256xf32> to vector<16x256xf32>
    %68 = arith.truncf %67 : vector<16x256xf32> to vector<16x256xbf16>
    %c160 = arith.constant 160 : index
    %c0_43 = arith.constant 0 : index
    %69 = vector.load %arg9[%c160, %c0_43] : memref<1184x256xbf16, #tpu.memory_space<vmem>>, vector<16x256xbf16>
    tpu.vector_store %arg9[%c160, %c0_43], %68 {strides = array<i32>} : memref<1184x256xbf16, #tpu.memory_space<vmem>>, vector<16x256xbf16>,
    %c0_44 = arith.constant 0 : index
    %c0_45 = arith.constant 0 : index
    %c81 = arith.constant 81 : index
    %70 = vector.load %arg1[%c0_44, %c0_45, %c81] : memref<1x16x480xf32, #tpu.memory_space<vmem>>, vector<1x16x256xf32>
    %71 = vector.shape_cast %70 : vector<1x16x256xf32> to vector<16x256xf32>
    %72 = vector.broadcast %4 : vector<1x256xf32> to vector<16x256xf32>
    %73 = arith.mulf %71, %72 : vector<16x256xf32>
    %74 = arith.truncf %73 : vector<16x256xf32> to vector<16x256xbf16>
    %c176 = arith.constant 176 : index
    %c0_46 = arith.constant 0 : index
    %75 = vector.load %arg9[%c176, %c0_46] : memref<1184x256xbf16, #tpu.memory_space<vmem>>, vector<16x256xbf16>
    tpu.vector_store %arg9[%c176, %c0_46], %74 {strides = array<i32>} : memref<1184x256xbf16, #tpu.memory_space<vmem>>, vector<16x256xbf16>,
    %c0_47 = arith.constant 0 : index
    %c0_48 = arith.constant 0 : index
    %c82 = arith.constant 82 : index
    %76 = vector.load %arg1[%c0_47, %c0_48, %c82] : memref<1x16x480xf32, #tpu.memory_space<vmem>>, vector<1x16x256xf32>
    %77 = vector.shape_cast %76 : vector<1x16x256xf32> to vector<16x256xf32>
    %78 = vector.broadcast %5 : vector<1x256xf32> to vector<16x256xf32>
    %79 = arith.mulf %77, %78 : vector<16x256xf32>
    %80 = arith.truncf %79 : vector<16x256xf32> to vector<16x256xbf16>
    %c192 = arith.constant 192 : index
    %c0_49 = arith.constant 0 : index
    %81 = vector.load %arg9[%c192, %c0_49] : memref<1184x256xbf16, #tpu.memory_space<vmem>>, vector<16x256xbf16>
    tpu.vector_store %arg9[%c192, %c0_49], %80 {strides = array<i32>} : memref<1184x256xbf16, #tpu.memory_space<vmem>>, vector<16x256xbf16>,
    %c0_50 = arith.constant 0 : index
    %c0_51 = arith.constant 0 : index
    %c83 = arith.constant 83 : index
    %82 = vector.load %arg1[%c0_50, %c0_51, %c83] : memref<1x16x480xf32, #tpu.memory_space<vmem>>, vector<1x16x256xf32>
    %83 = vector.shape_cast %82 : vector<1x16x256xf32> to vector<16x256xf32>
    %84 = vector.broadcast %6 : vector<1x256xf32> to vector<16x256xf32>
    %85 = arith.mulf %83, %84 : vector<16x256xf32>
    %86 = arith.truncf %85 : vector<16x256xf32> to vector<16x256xbf16>
    %c208 = arith.constant 208 : index
    %c0_52 = arith.constant 0 : index
    %87 = vector.load %arg9[%c208, %c0_52] : memref<1184x256xbf16, #tpu.memory_space<vmem>>, vector<16x256xbf16>
    tpu.vector_store %arg9[%c208, %c0_52], %86 {strides = array<i32>} : memref<1184x256xbf16, #tpu.memory_space<vmem>>, vector<16x256xbf16>,
    %c0_53 = arith.constant 0 : index
    %c0_54 = arith.constant 0 : index
    %c93 = arith.constant 93 : index
    %88 = vector.load %arg1[%c0_53, %c0_54, %c93] : memref<1x16x480xf32, #tpu.memory_space<vmem>>, vector<1x16x256xf32>
    %89 = vector.shape_cast %88 : vector<1x16x256xf32> to vector<16x256xf32>
    %90 = vector.broadcast %1 : vector<1x256xf32> to vector<16x256xf32>
    %91 = arith.mulf %89, %90 : vector<16x256xf32>
    %92 = arith.truncf %91 : vector<16x256xf32> to vector<16x256xbf16>
    %c224 = arith.constant 224 : index
    %c0_55 = arith.constant 0 : index
    %93 = vector.load %arg9[%c224, %c0_55] : memref<1184x256xbf16, #tpu.memory_space<vmem>>, vector<16x256xbf16>
    tpu.vector_store %arg9[%c224, %c0_55], %92 {strides = array<i32>} : memref<1184x256xbf16, #tpu.memory_space<vmem>>, vector<16x256xbf16>,
    %c0_56 = arith.constant 0 : index
    %c0_57 = arith.constant 0 : index
    %c94 = arith.constant 94 : index
    %94 = vector.load %arg1[%c0_56, %c0_57, %c94] : memref<1x16x480xf32, #tpu.memory_space<vmem>>, vector<1x16x256xf32>
    %95 = vector.shape_cast %94 : vector<1x16x256xf32> to vector<16x256xf32>
    %96 = vector.broadcast %2 : vector<1x256xf32> to vector<16x256xf32>
    %97 = arith.mulf %95, %96 : vector<16x256xf32>
    %98 = arith.truncf %97 : vector<16x256xf32> to vector<16x256xbf16>
    %c240 = arith.constant 240 : index
    %c0_58 = arith.constant 0 : index
    %99 = vector.load %arg9[%c240, %c0_58] : memref<1184x256xbf16, #tpu.memory_space<vmem>>, vector<16x256xbf16>
    tpu.vector_store %arg9[%c240, %c0_58], %98 {strides = array<i32>} : memref<1184x256xbf16, #tpu.memory_space<vmem>>, vector<16x256xbf16>,
    %c0_59 = arith.constant 0 : index
    %c0_60 = arith.constant 0 : index
    %c95 = arith.constant 95 : index
    %100 = vector.load %arg1[%c0_59, %c0_60, %c95] : memref<1x16x480xf32, #tpu.memory_space<vmem>>, vector<1x16x256xf32>
    %101 = vector.shape_cast %100 : vector<1x16x256xf32> to vector<16x256xf32>
    %102 = vector.broadcast %3 : vector<1x256xf32> to vector<16x256xf32>
    %103 = arith.mulf %101, %102 : vector<16x256xf32>
    %104 = arith.truncf %103 : vector<16x256xf32> to vector<16x256xbf16>
    %c256 = arith.constant 256 : index
    %c0_61 = arith.constant 0 : index
    %105 = vector.load %arg9[%c256, %c0_61] : memref<1184x256xbf16, #tpu.memory_space<vmem>>, vector<16x256xbf16>
    tpu.vector_store %arg9[%c256, %c0_61], %104 {strides = array<i32>} : memref<1184x256xbf16, #tpu.memory_space<vmem>>, vector<16x256xbf16>,
    %c0_62 = arith.constant 0 : index
    %c0_63 = arith.constant 0 : index
    %c96_64 = arith.constant 96 : index
    %106 = vector.load %arg1[%c0_62, %c0_63, %c96_64] : memref<1x16x480xf32, #tpu.memory_space<vmem>>, vector<1x16x256xf32>
    %107 = vector.shape_cast %106 : vector<1x16x256xf32> to vector<16x256xf32>
    %108 = arith.truncf %107 : vector<16x256xf32> to vector<16x256xbf16>
    %c272 = arith.constant 272 : index
    %c0_65 = arith.constant 0 : index
    %109 = vector.load %arg9[%c272, %c0_65] : memref<1184x256xbf16, #tpu.memory_space<vmem>>, vector<16x256xbf16>
    tpu.vector_store %arg9[%c272, %c0_65], %108 {strides = array<i32>} : memref<1184x256xbf16, #tpu.memory_space<vmem>>, vector<16x256xbf16>,
    %c0_66 = arith.constant 0 : index
    %c0_67 = arith.constant 0 : index
    %c97 = arith.constant 97 : index
    %110 = vector.load %arg1[%c0_66, %c0_67, %c97] : memref<1x16x480xf32, #tpu.memory_space<vmem>>, vector<1x16x256xf32>
    %111 = vector.shape_cast %110 : vector<1x16x256xf32> to vector<16x256xf32>
    %112 = vector.broadcast %4 : vector<1x256xf32> to vector<16x256xf32>
    %113 = arith.mulf %111, %112 : vector<16x256xf32>
    %114 = arith.truncf %113 : vector<16x256xf32> to vector<16x256xbf16>
    %c288 = arith.constant 288 : index
    %c0_68 = arith.constant 0 : index
    %115 = vector.load %arg9[%c288, %c0_68] : memref<1184x256xbf16, #tpu.memory_space<vmem>>, vector<16x256xbf16>
    tpu.vector_store %arg9[%c288, %c0_68], %114 {strides = array<i32>} : memref<1184x256xbf16, #tpu.memory_space<vmem>>, vector<16x256xbf16>,
    %c0_69 = arith.constant 0 : index
    %c0_70 = arith.constant 0 : index
    %c98 = arith.constant 98 : index
    %116 = vector.load %arg1[%c0_69, %c0_70, %c98] : memref<1x16x480xf32, #tpu.memory_space<vmem>>, vector<1x16x256xf32>
    %117 = vector.shape_cast %116 : vector<1x16x256xf32> to vector<16x256xf32>
    %118 = vector.broadcast %5 : vector<1x256xf32> to vector<16x256xf32>
    %119 = arith.mulf %117, %118 : vector<16x256xf32>
    %120 = arith.truncf %119 : vector<16x256xf32> to vector<16x256xbf16>
    %c304 = arith.constant 304 : index
    %c0_71 = arith.constant 0 : index
    %121 = vector.load %arg9[%c304, %c0_71] : memref<1184x256xbf16, #tpu.memory_space<vmem>>, vector<16x256xbf16>
    tpu.vector_store %arg9[%c304, %c0_71], %120 {strides = array<i32>} : memref<1184x256xbf16, #tpu.memory_space<vmem>>, vector<16x256xbf16>,
    %c0_72 = arith.constant 0 : index
    %c0_73 = arith.constant 0 : index
    %c99 = arith.constant 99 : index
    %122 = vector.load %arg1[%c0_72, %c0_73, %c99] : memref<1x16x480xf32, #tpu.memory_space<vmem>>, vector<1x16x256xf32>
    %123 = vector.shape_cast %122 : vector<1x16x256xf32> to vector<16x256xf32>
    %124 = vector.broadcast %6 : vector<1x256xf32> to vector<16x256xf32>
    %125 = arith.mulf %123, %124 : vector<16x256xf32>
    %126 = arith.truncf %125 : vector<16x256xf32> to vector<16x256xbf16>
    %c320 = arith.constant 320 : index
    %c0_74 = arith.constant 0 : index
    %127 = vector.load %arg9[%c320, %c0_74] : memref<1184x256xbf16, #tpu.memory_space<vmem>>, vector<16x256xbf16>
    tpu.vector_store %arg9[%c320, %c0_74], %126 {strides = array<i32>} : memref<1184x256xbf16, #tpu.memory_space<vmem>>, vector<16x256xbf16>,
    %c0_75 = arith.constant 0 : index
    %c0_76 = arith.constant 0 : index
    %c109 = arith.constant 109 : index
    %128 = vector.load %arg1[%c0_75, %c0_76, %c109] : memref<1x16x480xf32, #tpu.memory_space<vmem>>, vector<1x16x256xf32>
    %129 = vector.shape_cast %128 : vector<1x16x256xf32> to vector<16x256xf32>
    %130 = vector.broadcast %1 : vector<1x256xf32> to vector<16x256xf32>
    %131 = arith.mulf %129, %130 : vector<16x256xf32>
    %132 = arith.truncf %131 : vector<16x256xf32> to vector<16x256xbf16>
    %c336 = arith.constant 336 : index
    %c0_77 = arith.constant 0 : index
    %133 = vector.load %arg9[%c336, %c0_77] : memref<1184x256xbf16, #tpu.memory_space<vmem>>, vector<16x256xbf16>
    tpu.vector_store %arg9[%c336, %c0_77], %132 {strides = array<i32>} : memref<1184x256xbf16, #tpu.memory_space<vmem>>, vector<16x256xbf16>,
    %c0_78 = arith.constant 0 : index
    %c0_79 = arith.constant 0 : index
    %c110 = arith.constant 110 : index
    %134 = vector.load %arg1[%c0_78, %c0_79, %c110] : memref<1x16x480xf32, #tpu.memory_space<vmem>>, vector<1x16x256xf32>
    %135 = vector.shape_cast %134 : vector<1x16x256xf32> to vector<16x256xf32>
    %136 = vector.broadcast %2 : vector<1x256xf32> to vector<16x256xf32>
    %137 = arith.mulf %135, %136 : vector<16x256xf32>
    %138 = arith.truncf %137 : vector<16x256xf32> to vector<16x256xbf16>
    %c352 = arith.constant 352 : index
    %c0_80 = arith.constant 0 : index
    %139 = vector.load %arg9[%c352, %c0_80] : memref<1184x256xbf16, #tpu.memory_space<vmem>>, vector<16x256xbf16>
    tpu.vector_store %arg9[%c352, %c0_80], %138 {strides = array<i32>} : memref<1184x256xbf16, #tpu.memory_space<vmem>>, vector<16x256xbf16>,
    %c0_81 = arith.constant 0 : index
    %c0_82 = arith.constant 0 : index
    %c111 = arith.constant 111 : index
    %140 = vector.load %arg1[%c0_81, %c0_82, %c111] : memref<1x16x480xf32, #tpu.memory_space<vmem>>, vector<1x16x256xf32>
    %141 = vector.shape_cast %140 : vector<1x16x256xf32> to vector<16x256xf32>
    %142 = vector.broadcast %3 : vector<1x256xf32> to vector<16x256xf32>
    %143 = arith.mulf %141, %142 : vector<16x256xf32>
    %144 = arith.truncf %143 : vector<16x256xf32> to vector<16x256xbf16>
    %c368 = arith.constant 368 : index
    %c0_83 = arith.constant 0 : index
    %145 = vector.load %arg9[%c368, %c0_83] : memref<1184x256xbf16, #tpu.memory_space<vmem>>, vector<16x256xbf16>
    tpu.vector_store %arg9[%c368, %c0_83], %144 {strides = array<i32>} : memref<1184x256xbf16, #tpu.memory_space<vmem>>, vector<16x256xbf16>,
    %c0_84 = arith.constant 0 : index
    %c0_85 = arith.constant 0 : index
    %c112_86 = arith.constant 112 : index
    %146 = vector.load %arg1[%c0_84, %c0_85, %c112_86] : memref<1x16x480xf32, #tpu.memory_space<vmem>>, vector<1x16x256xf32>
    %147 = vector.shape_cast %146 : vector<1x16x256xf32> to vector<16x256xf32>
    %148 = arith.truncf %147 : vector<16x256xf32> to vector<16x256xbf16>
    %c384 = arith.constant 384 : index
    %c0_87 = arith.constant 0 : index
    %149 = vector.load %arg9[%c384, %c0_87] : memref<1184x256xbf16, #tpu.memory_space<vmem>>, vector<16x256xbf16>
    tpu.vector_store %arg9[%c384, %c0_87], %148 {strides = array<i32>} : memref<1184x256xbf16, #tpu.memory_space<vmem>>, vector<16x256xbf16>,
    %c0_88 = arith.constant 0 : index
    %c0_89 = arith.constant 0 : index
    %c113 = arith.constant 113 : index
    %150 = vector.load %arg1[%c0_88, %c0_89, %c113] : memref<1x16x480xf32, #tpu.memory_space<vmem>>, vector<1x16x256xf32>
    %151 = vector.shape_cast %150 : vector<1x16x256xf32> to vector<16x256xf32>
    %152 = vector.broadcast %4 : vector<1x256xf32> to vector<16x256xf32>
    %153 = arith.mulf %151, %152 : vector<16x256xf32>
    %154 = arith.truncf %153 : vector<16x256xf32> to vector<16x256xbf16>
    %c400 = arith.constant 400 : index
    %c0_90 = arith.constant 0 : index
    %155 = vector.load %arg9[%c400, %c0_90] : memref<1184x256xbf16, #tpu.memory_space<vmem>>, vector<16x256xbf16>
    tpu.vector_store %arg9[%c400, %c0_90], %154 {strides = array<i32>} : memref<1184x256xbf16, #tpu.memory_space<vmem>>, vector<16x256xbf16>,
    %c0_91 = arith.constant 0 : index
    %c0_92 = arith.constant 0 : index
    %c114 = arith.constant 114 : index
    %156 = vector.load %arg1[%c0_91, %c0_92, %c114] : memref<1x16x480xf32, #tpu.memory_space<vmem>>, vector<1x16x256xf32>
    %157 = vector.shape_cast %156 : vector<1x16x256xf32> to vector<16x256xf32>
    %158 = vector.broadcast %5 : vector<1x256xf32> to vector<16x256xf32>
    %159 = arith.mulf %157, %158 : vector<16x256xf32>
    %160 = arith.truncf %159 : vector<16x256xf32> to vector<16x256xbf16>
    %c416 = arith.constant 416 : index
    %c0_93 = arith.constant 0 : index
    %161 = vector.load %arg9[%c416, %c0_93] : memref<1184x256xbf16, #tpu.memory_space<vmem>>, vector<16x256xbf16>
    tpu.vector_store %arg9[%c416, %c0_93], %160 {strides = array<i32>} : memref<1184x256xbf16, #tpu.memory_space<vmem>>, vector<16x256xbf16>,
    %c0_94 = arith.constant 0 : index
    %c0_95 = arith.constant 0 : index
    %c115 = arith.constant 115 : index
    %162 = vector.load %arg1[%c0_94, %c0_95, %c115] : memref<1x16x480xf32, #tpu.memory_space<vmem>>, vector<1x16x256xf32>
    %163 = vector.shape_cast %162 : vector<1x16x256xf32> to vector<16x256xf32>
    %164 = vector.broadcast %6 : vector<1x256xf32> to vector<16x256xf32>
    %165 = arith.mulf %163, %164 : vector<16x256xf32>
    %166 = arith.truncf %165 : vector<16x256xf32> to vector<16x256xbf16>
    %c432 = arith.constant 432 : index
    %c0_96 = arith.constant 0 : index
    %167 = vector.load %arg9[%c432, %c0_96] : memref<1184x256xbf16, #tpu.memory_space<vmem>>, vector<16x256xbf16>
    tpu.vector_store %arg9[%c432, %c0_96], %166 {strides = array<i32>} : memref<1184x256xbf16, #tpu.memory_space<vmem>>, vector<16x256xbf16>,
    %c0_97 = arith.constant 0 : index
    %c0_98 = arith.constant 0 : index
    %c125 = arith.constant 125 : index
    %168 = vector.load %arg1[%c0_97, %c0_98, %c125] : memref<1x16x480xf32, #tpu.memory_space<vmem>>, vector<1x16x256xf32>
    %169 = vector.shape_cast %168 : vector<1x16x256xf32> to vector<16x256xf32>
    %170 = vector.broadcast %1 : vector<1x256xf32> to vector<16x256xf32>
    %171 = arith.mulf %169, %170 : vector<16x256xf32>
    %172 = arith.truncf %171 : vector<16x256xf32> to vector<16x256xbf16>
    %c448 = arith.constant 448 : index
    %c0_99 = arith.constant 0 : index
    %173 = vector.load %arg9[%c448, %c0_99] : memref<1184x256xbf16, #tpu.memory_space<vmem>>, vector<16x256xbf16>
    tpu.vector_store %arg9[%c448, %c0_99], %172 {strides = array<i32>} : memref<1184x256xbf16, #tpu.memory_space<vmem>>, vector<16x256xbf16>,
    %c0_100 = arith.constant 0 : index
    %c0_101 = arith.constant 0 : index
    %c126 = arith.constant 126 : index
    %174 = vector.load %arg1[%c0_100, %c0_101, %c126] : memref<1x16x480xf32, #tpu.memory_space<vmem>>, vector<1x16x256xf32>
    %175 = vector.shape_cast %174 : vector<1x16x256xf32> to vector<16x256xf32>
    %176 = vector.broadcast %2 : vector<1x256xf32> to vector<16x256xf32>
    %177 = arith.mulf %175, %176 : vector<16x256xf32>
    %178 = arith.truncf %177 : vector<16x256xf32> to vector<16x256xbf16>
    %c464 = arith.constant 464 : index
    %c0_102 = arith.constant 0 : index
    %179 = vector.load %arg9[%c464, %c0_102] : memref<1184x256xbf16, #tpu.memory_space<vmem>>, vector<16x256xbf16>
    tpu.vector_store %arg9[%c464, %c0_102], %178 {strides = array<i32>} : memref<1184x256xbf16, #tpu.memory_space<vmem>>, vector<16x256xbf16>,
    %c0_103 = arith.constant 0 : index
    %c0_104 = arith.constant 0 : index
    %c127 = arith.constant 127 : index
    %180 = vector.load %arg1[%c0_103, %c0_104, %c127] : memref<1x16x480xf32, #tpu.memory_space<vmem>>, vector<1x16x256xf32>
    %181 = vector.shape_cast %180 : vector<1x16x256xf32> to vector<16x256xf32>
    %182 = vector.broadcast %3 : vector<1x256xf32> to vector<16x256xf32>
    %183 = arith.mulf %181, %182 : vector<16x256xf32>
    %184 = arith.truncf %183 : vector<16x256xf32> to vector<16x256xbf16>
    %c480 = arith.constant 480 : index
    %c0_105 = arith.constant 0 : index
    %185 = vector.load %arg9[%c480, %c0_105] : memref<1184x256xbf16, #tpu.memory_space<vmem>>, vector<16x256xbf16>
    tpu.vector_store %arg9[%c480, %c0_105], %184 {strides = array<i32>} : memref<1184x256xbf16, #tpu.memory_space<vmem>>, vector<16x256xbf16>,
    %c0_106 = arith.constant 0 : index
    %c0_107 = arith.constant 0 : index
    %c128_108 = arith.constant 128 : index
    %186 = vector.load %arg1[%c0_106, %c0_107, %c128_108] : memref<1x16x480xf32, #tpu.memory_space<vmem>>, vector<1x16x256xf32>
    %187 = vector.shape_cast %186 : vector<1x16x256xf32> to vector<16x256xf32>
    %188 = arith.truncf %187 : vector<16x256xf32> to vector<16x256xbf16>
    %c496 = arith.constant 496 : index
    %c0_109 = arith.constant 0 : index
    %189 = vector.load %arg9[%c496, %c0_109] : memref<1184x256xbf16, #tpu.memory_space<vmem>>, vector<16x256xbf16>
    tpu.vector_store %arg9[%c496, %c0_109], %188 {strides = array<i32>} : memref<1184x256xbf16, #tpu.memory_space<vmem>>, vector<16x256xbf16>,
    %c0_110 = arith.constant 0 : index
    %c0_111 = arith.constant 0 : index
    %c129 = arith.constant 129 : index
    %190 = vector.load %arg1[%c0_110, %c0_111, %c129] : memref<1x16x480xf32, #tpu.memory_space<vmem>>, vector<1x16x256xf32>
    %191 = vector.shape_cast %190 : vector<1x16x256xf32> to vector<16x256xf32>
    %192 = vector.broadcast %4 : vector<1x256xf32> to vector<16x256xf32>
    %193 = arith.mulf %191, %192 : vector<16x256xf32>
    %194 = arith.truncf %193 : vector<16x256xf32> to vector<16x256xbf16>
    %c512 = arith.constant 512 : index
    %c0_112 = arith.constant 0 : index
    %195 = vector.load %arg9[%c512, %c0_112] : memref<1184x256xbf16, #tpu.memory_space<vmem>>, vector<16x256xbf16>
    tpu.vector_store %arg9[%c512, %c0_112], %194 {strides = array<i32>} : memref<1184x256xbf16, #tpu.memory_space<vmem>>, vector<16x256xbf16>,
    %c0_113 = arith.constant 0 : index
    %c0_114 = arith.constant 0 : index
    %c130 = arith.constant 130 : index
    %196 = vector.load %arg1[%c0_113, %c0_114, %c130] : memref<1x16x480xf32, #tpu.memory_space<vmem>>, vector<1x16x256xf32>
    %197 = vector.shape_cast %196 : vector<1x16x256xf32> to vector<16x256xf32>
    %198 = vector.broadcast %5 : vector<1x256xf32> to vector<16x256xf32>
    %199 = arith.mulf %197, %198 : vector<16x256xf32>
    %200 = arith.truncf %199 : vector<16x256xf32> to vector<16x256xbf16>
    %c528 = arith.constant 528 : index
    %c0_115 = arith.constant 0 : index
    %201 = vector.load %arg9[%c528, %c0_115] : memref<1184x256xbf16, #tpu.memory_space<vmem>>, vector<16x256xbf16>
    tpu.vector_store %arg9[%c528, %c0_115], %200 {strides = array<i32>} : memref<1184x256xbf16, #tpu.memory_space<vmem>>, vector<16x256xbf16>,
    %c0_116 = arith.constant 0 : index
    %c0_117 = arith.constant 0 : index
    %c131 = arith.constant 131 : index
    %202 = vector.load %arg1[%c0_116, %c0_117, %c131] : memref<1x16x480xf32, #tpu.memory_space<vmem>>, vector<1x16x256xf32>
    %203 = vector.shape_cast %202 : vector<1x16x256xf32> to vector<16x256xf32>
    %204 = vector.broadcast %6 : vector<1x256xf32> to vector<16x256xf32>
    %205 = arith.mulf %203, %204 : vector<16x256xf32>
    %206 = arith.truncf %205 : vector<16x256xf32> to vector<16x256xbf16>
    %c544 = arith.constant 544 : index
    %c0_118 = arith.constant 0 : index
    %207 = vector.load %arg9[%c544, %c0_118] : memref<1184x256xbf16, #tpu.memory_space<vmem>>, vector<16x256xbf16>
    tpu.vector_store %arg9[%c544, %c0_118], %206 {strides = array<i32>} : memref<1184x256xbf16, #tpu.memory_space<vmem>>, vector<16x256xbf16>,
    %c0_119 = arith.constant 0 : index
    %c0_120 = arith.constant 0 : index
    %c141 = arith.constant 141 : index
    %208 = vector.load %arg1[%c0_119, %c0_120, %c141] : memref<1x16x480xf32, #tpu.memory_space<vmem>>, vector<1x16x256xf32>
    %209 = vector.shape_cast %208 : vector<1x16x256xf32> to vector<16x256xf32>
    %210 = vector.broadcast %1 : vector<1x256xf32> to vector<16x256xf32>
    %211 = arith.mulf %209, %210 : vector<16x256xf32>
    %212 = arith.truncf %211 : vector<16x256xf32> to vector<16x256xbf16>
    %c560 = arith.constant 560 : index
    %c0_121 = arith.constant 0 : index
    %213 = vector.load %arg9[%c560, %c0_121] : memref<1184x256xbf16, #tpu.memory_space<vmem>>, vector<16x256xbf16>
    tpu.vector_store %arg9[%c560, %c0_121], %212 {strides = array<i32>} : memref<1184x256xbf16, #tpu.memory_space<vmem>>, vector<16x256xbf16>,
    %c0_122 = arith.constant 0 : index
    %c0_123 = arith.constant 0 : index
    %c142 = arith.constant 142 : index
    %214 = vector.load %arg1[%c0_122, %c0_123, %c142] : memref<1x16x480xf32, #tpu.memory_space<vmem>>, vector<1x16x256xf32>
    %215 = vector.shape_cast %214 : vector<1x16x256xf32> to vector<16x256xf32>
    %216 = vector.broadcast %2 : vector<1x256xf32> to vector<16x256xf32>
    %217 = arith.mulf %215, %216 : vector<16x256xf32>
    %218 = arith.truncf %217 : vector<16x256xf32> to vector<16x256xbf16>
    %c576 = arith.constant 576 : index
    %c0_124 = arith.constant 0 : index
    %219 = vector.load %arg9[%c576, %c0_124] : memref<1184x256xbf16, #tpu.memory_space<vmem>>, vector<16x256xbf16>
    tpu.vector_store %arg9[%c576, %c0_124], %218 {strides = array<i32>} : memref<1184x256xbf16, #tpu.memory_space<vmem>>, vector<16x256xbf16>,
    %c0_125 = arith.constant 0 : index
    %c0_126 = arith.constant 0 : index
    %c143 = arith.constant 143 : index
    %220 = vector.load %arg1[%c0_125, %c0_126, %c143] : memref<1x16x480xf32, #tpu.memory_space<vmem>>, vector<1x16x256xf32>
    %221 = vector.shape_cast %220 : vector<1x16x256xf32> to vector<16x256xf32>
    %222 = vector.broadcast %3 : vector<1x256xf32> to vector<16x256xf32>
    %223 = arith.mulf %221, %222 : vector<16x256xf32>
    %224 = arith.truncf %223 : vector<16x256xf32> to vector<16x256xbf16>
    %c592 = arith.constant 592 : index
    %c0_127 = arith.constant 0 : index
    %225 = vector.load %arg9[%c592, %c0_127] : memref<1184x256xbf16, #tpu.memory_space<vmem>>, vector<16x256xbf16>
    tpu.vector_store %arg9[%c592, %c0_127], %224 {strides = array<i32>} : memref<1184x256xbf16, #tpu.memory_space<vmem>>, vector<16x256xbf16>,
    %c0_128 = arith.constant 0 : index
    %c0_129 = arith.constant 0 : index
    %c144_130 = arith.constant 144 : index
    %226 = vector.load %arg1[%c0_128, %c0_129, %c144_130] : memref<1x16x480xf32, #tpu.memory_space<vmem>>, vector<1x16x256xf32>
    %227 = vector.shape_cast %226 : vector<1x16x256xf32> to vector<16x256xf32>
    %228 = arith.truncf %227 : vector<16x256xf32> to vector<16x256xbf16>
    %c608 = arith.constant 608 : index
    %c0_131 = arith.constant 0 : index
    %229 = vector.load %arg9[%c608, %c0_131] : memref<1184x256xbf16, #tpu.memory_space<vmem>>, vector<16x256xbf16>
    tpu.vector_store %arg9[%c608, %c0_131], %228 {strides = array<i32>} : memref<1184x256xbf16, #tpu.memory_space<vmem>>, vector<16x256xbf16>,
    %c0_132 = arith.constant 0 : index
    %c0_133 = arith.constant 0 : index
    %c145 = arith.constant 145 : index
    %230 = vector.load %arg1[%c0_132, %c0_133, %c145] : memref<1x16x480xf32, #tpu.memory_space<vmem>>, vector<1x16x256xf32>
    %231 = vector.shape_cast %230 : vector<1x16x256xf32> to vector<16x256xf32>
    %232 = vector.broadcast %4 : vector<1x256xf32> to vector<16x256xf32>
    %233 = arith.mulf %231, %232 : vector<16x256xf32>
    %234 = arith.truncf %233 : vector<16x256xf32> to vector<16x256xbf16>
    %c624 = arith.constant 624 : index
    %c0_134 = arith.constant 0 : index
    %235 = vector.load %arg9[%c624, %c0_134] : memref<1184x256xbf16, #tpu.memory_space<vmem>>, vector<16x256xbf16>
    tpu.vector_store %arg9[%c624, %c0_134], %234 {strides = array<i32>} : memref<1184x256xbf16, #tpu.memory_space<vmem>>, vector<16x256xbf16>,
    %c0_135 = arith.constant 0 : index
    %c0_136 = arith.constant 0 : index
    %c146 = arith.constant 146 : index
    %236 = vector.load %arg1[%c0_135, %c0_136, %c146] : memref<1x16x480xf32, #tpu.memory_space<vmem>>, vector<1x16x256xf32>
    %237 = vector.shape_cast %236 : vector<1x16x256xf32> to vector<16x256xf32>
    %238 = vector.broadcast %5 : vector<1x256xf32> to vector<16x256xf32>
    %239 = arith.mulf %237, %238 : vector<16x256xf32>
    %240 = arith.truncf %239 : vector<16x256xf32> to vector<16x256xbf16>
    %c640 = arith.constant 640 : index
    %c0_137 = arith.constant 0 : index
    %241 = vector.load %arg9[%c640, %c0_137] : memref<1184x256xbf16, #tpu.memory_space<vmem>>, vector<16x256xbf16>
    tpu.vector_store %arg9[%c640, %c0_137], %240 {strides = array<i32>} : memref<1184x256xbf16, #tpu.memory_space<vmem>>, vector<16x256xbf16>,
    %c0_138 = arith.constant 0 : index
    %c0_139 = arith.constant 0 : index
    %c147 = arith.constant 147 : index
    %242 = vector.load %arg1[%c0_138, %c0_139, %c147] : memref<1x16x480xf32, #tpu.memory_space<vmem>>, vector<1x16x256xf32>
    %243 = vector.shape_cast %242 : vector<1x16x256xf32> to vector<16x256xf32>
    %244 = vector.broadcast %6 : vector<1x256xf32> to vector<16x256xf32>
    %245 = arith.mulf %243, %244 : vector<16x256xf32>
    %246 = arith.truncf %245 : vector<16x256xf32> to vector<16x256xbf16>
    %c656 = arith.constant 656 : index
    %c0_140 = arith.constant 0 : index
    %247 = vector.load %arg9[%c656, %c0_140] : memref<1184x256xbf16, #tpu.memory_space<vmem>>, vector<16x256xbf16>
    tpu.vector_store %arg9[%c656, %c0_140], %246 {strides = array<i32>} : memref<1184x256xbf16, #tpu.memory_space<vmem>>, vector<16x256xbf16>,
    %c0_141 = arith.constant 0 : index
    %c0_142 = arith.constant 0 : index
    %c157 = arith.constant 157 : index
    %248 = vector.load %arg1[%c0_141, %c0_142, %c157] : memref<1x16x480xf32, #tpu.memory_space<vmem>>, vector<1x16x256xf32>
    %249 = vector.shape_cast %248 : vector<1x16x256xf32> to vector<16x256xf32>
    %250 = vector.broadcast %1 : vector<1x256xf32> to vector<16x256xf32>
    %251 = arith.mulf %249, %250 : vector<16x256xf32>
    %252 = arith.truncf %251 : vector<16x256xf32> to vector<16x256xbf16>
    %c672 = arith.constant 672 : index
    %c0_143 = arith.constant 0 : index
    %253 = vector.load %arg9[%c672, %c0_143] : memref<1184x256xbf16, #tpu.memory_space<vmem>>, vector<16x256xbf16>
    tpu.vector_store %arg9[%c672, %c0_143], %252 {strides = array<i32>} : memref<1184x256xbf16, #tpu.memory_space<vmem>>, vector<16x256xbf16>,
    %c0_144 = arith.constant 0 : index
    %c0_145 = arith.constant 0 : index
    %c158 = arith.constant 158 : index
    %254 = vector.load %arg1[%c0_144, %c0_145, %c158] : memref<1x16x480xf32, #tpu.memory_space<vmem>>, vector<1x16x256xf32>
    %255 = vector.shape_cast %254 : vector<1x16x256xf32> to vector<16x256xf32>
    %256 = vector.broadcast %2 : vector<1x256xf32> to vector<16x256xf32>
    %257 = arith.mulf %255, %256 : vector<16x256xf32>
    %258 = arith.truncf %257 : vector<16x256xf32> to vector<16x256xbf16>
    %c688 = arith.constant 688 : index
    %c0_146 = arith.constant 0 : index
    %259 = vector.load %arg9[%c688, %c0_146] : memref<1184x256xbf16, #tpu.memory_space<vmem>>, vector<16x256xbf16>
    tpu.vector_store %arg9[%c688, %c0_146], %258 {strides = array<i32>} : memref<1184x256xbf16, #tpu.memory_space<vmem>>, vector<16x256xbf16>,
    %c0_147 = arith.constant 0 : index
    %c0_148 = arith.constant 0 : index
    %c159 = arith.constant 159 : index
    %260 = vector.load %arg1[%c0_147, %c0_148, %c159] : memref<1x16x480xf32, #tpu.memory_space<vmem>>, vector<1x16x256xf32>
    %261 = vector.shape_cast %260 : vector<1x16x256xf32> to vector<16x256xf32>
    %262 = vector.broadcast %3 : vector<1x256xf32> to vector<16x256xf32>
    %263 = arith.mulf %261, %262 : vector<16x256xf32>
    %264 = arith.truncf %263 : vector<16x256xf32> to vector<16x256xbf16>
    %c704 = arith.constant 704 : index
    %c0_149 = arith.constant 0 : index
    %265 = vector.load %arg9[%c704, %c0_149] : memref<1184x256xbf16, #tpu.memory_space<vmem>>, vector<16x256xbf16>
    tpu.vector_store %arg9[%c704, %c0_149], %264 {strides = array<i32>} : memref<1184x256xbf16, #tpu.memory_space<vmem>>, vector<16x256xbf16>,
    %c0_150 = arith.constant 0 : index
    %c0_151 = arith.constant 0 : index
    %c160_152 = arith.constant 160 : index
    %266 = vector.load %arg1[%c0_150, %c0_151, %c160_152] : memref<1x16x480xf32, #tpu.memory_space<vmem>>, vector<1x16x256xf32>
    %267 = vector.shape_cast %266 : vector<1x16x256xf32> to vector<16x256xf32>
    %268 = arith.truncf %267 : vector<16x256xf32> to vector<16x256xbf16>
    %c720 = arith.constant 720 : index
    %c0_153 = arith.constant 0 : index
    %269 = vector.load %arg9[%c720, %c0_153] : memref<1184x256xbf16, #tpu.memory_space<vmem>>, vector<16x256xbf16>
    tpu.vector_store %arg9[%c720, %c0_153], %268 {strides = array<i32>} : memref<1184x256xbf16, #tpu.memory_space<vmem>>, vector<16x256xbf16>,
    %c0_154 = arith.constant 0 : index
    %c0_155 = arith.constant 0 : index
    %c161 = arith.constant 161 : index
    %270 = vector.load %arg1[%c0_154, %c0_155, %c161] : memref<1x16x480xf32, #tpu.memory_space<vmem>>, vector<1x16x256xf32>
    %271 = vector.shape_cast %270 : vector<1x16x256xf32> to vector<16x256xf32>
    %272 = vector.broadcast %4 : vector<1x256xf32> to vector<16x256xf32>
    %273 = arith.mulf %271, %272 : vector<16x256xf32>
    %274 = arith.truncf %273 : vector<16x256xf32> to vector<16x256xbf16>
    %c736 = arith.constant 736 : index
    %c0_156 = arith.constant 0 : index
    %275 = vector.load %arg9[%c736, %c0_156] : memref<1184x256xbf16, #tpu.memory_space<vmem>>, vector<16x256xbf16>
    tpu.vector_store %arg9[%c736, %c0_156], %274 {strides = array<i32>} : memref<1184x256xbf16, #tpu.memory_space<vmem>>, vector<16x256xbf16>,
    %c0_157 = arith.constant 0 : index
    %c0_158 = arith.constant 0 : index
    %c162 = arith.constant 162 : index
    %276 = vector.load %arg1[%c0_157, %c0_158, %c162] : memref<1x16x480xf32, #tpu.memory_space<vmem>>, vector<1x16x256xf32>
    %277 = vector.shape_cast %276 : vector<1x16x256xf32> to vector<16x256xf32>
    %278 = vector.broadcast %5 : vector<1x256xf32> to vector<16x256xf32>
    %279 = arith.mulf %277, %278 : vector<16x256xf32>
    %280 = arith.truncf %279 : vector<16x256xf32> to vector<16x256xbf16>
    %c752 = arith.constant 752 : index
    %c0_159 = arith.constant 0 : index
    %281 = vector.load %arg9[%c752, %c0_159] : memref<1184x256xbf16, #tpu.memory_space<vmem>>, vector<16x256xbf16>
    tpu.vector_store %arg9[%c752, %c0_159], %280 {strides = array<i32>} : memref<1184x256xbf16, #tpu.memory_space<vmem>>, vector<16x256xbf16>,
    %c0_160 = arith.constant 0 : index
    %c0_161 = arith.constant 0 : index
    %c163 = arith.constant 163 : index
    %282 = vector.load %arg1[%c0_160, %c0_161, %c163] : memref<1x16x480xf32, #tpu.memory_space<vmem>>, vector<1x16x256xf32>
    %283 = vector.shape_cast %282 : vector<1x16x256xf32> to vector<16x256xf32>
    %284 = vector.broadcast %6 : vector<1x256xf32> to vector<16x256xf32>
    %285 = arith.mulf %283, %284 : vector<16x256xf32>
    %286 = arith.truncf %285 : vector<16x256xf32> to vector<16x256xbf16>
    %c768 = arith.constant 768 : index
    %c0_162 = arith.constant 0 : index
    %287 = vector.load %arg9[%c768, %c0_162] : memref<1184x256xbf16, #tpu.memory_space<vmem>>, vector<16x256xbf16>
    tpu.vector_store %arg9[%c768, %c0_162], %286 {strides = array<i32>} : memref<1184x256xbf16, #tpu.memory_space<vmem>>, vector<16x256xbf16>,
    %c0_163 = arith.constant 0 : index
    %c0_164 = arith.constant 0 : index
    %c10 = arith.constant 10 : index
    %288 = vector.load %arg1[%c0_163, %c0_164, %c10] : memref<1x16x480xf32, #tpu.memory_space<vmem>>, vector<1x16x256xf32>
    %289 = vector.shape_cast %288 : vector<1x16x256xf32> to vector<16x256xf32>
    %290 = vector.broadcast %0 : vector<1x256xf32> to vector<16x256xf32>
    %291 = arith.mulf %289, %290 : vector<16x256xf32>
    %292 = arith.truncf %291 : vector<16x256xf32> to vector<16x256xbf16>
    %c784 = arith.constant 784 : index
    %c0_165 = arith.constant 0 : index
    %293 = vector.load %arg9[%c784, %c0_165] : memref<1184x256xbf16, #tpu.memory_space<vmem>>, vector<16x256xbf16>
    tpu.vector_store %arg9[%c784, %c0_165], %292 {strides = array<i32>} : memref<1184x256xbf16, #tpu.memory_space<vmem>>, vector<16x256xbf16>,
    %c0_166 = arith.constant 0 : index
    %c0_167 = arith.constant 0 : index
    %c13 = arith.constant 13 : index
    %294 = vector.load %arg1[%c0_166, %c0_167, %c13] : memref<1x16x480xf32, #tpu.memory_space<vmem>>, vector<1x16x256xf32>
    %295 = vector.shape_cast %294 : vector<1x16x256xf32> to vector<16x256xf32>
    %296 = vector.broadcast %1 : vector<1x256xf32> to vector<16x256xf32>
    %297 = arith.mulf %295, %296 : vector<16x256xf32>
    %298 = arith.truncf %297 : vector<16x256xf32> to vector<16x256xbf16>
    %c800 = arith.constant 800 : index
    %c0_168 = arith.constant 0 : index
    %299 = vector.load %arg9[%c800, %c0_168] : memref<1184x256xbf16, #tpu.memory_space<vmem>>, vector<16x256xbf16>
    tpu.vector_store %arg9[%c800, %c0_168], %298 {strides = array<i32>} : memref<1184x256xbf16, #tpu.memory_space<vmem>>, vector<16x256xbf16>,
    %c0_169 = arith.constant 0 : index
    %c0_170 = arith.constant 0 : index
    %c16_171 = arith.constant 16 : index
    %300 = vector.load %arg1[%c0_169, %c0_170, %c16_171] : memref<1x16x480xf32, #tpu.memory_space<vmem>>, vector<1x16x256xf32>
    %301 = vector.shape_cast %300 : vector<1x16x256xf32> to vector<16x256xf32>
    %302 = arith.truncf %301 : vector<16x256xf32> to vector<16x256xbf16>
    %c816 = arith.constant 816 : index
    %c0_172 = arith.constant 0 : index
    %303 = vector.load %arg9[%c816, %c0_172] : memref<1184x256xbf16, #tpu.memory_space<vmem>>, vector<16x256xbf16>
    tpu.vector_store %arg9[%c816, %c0_172], %302 {strides = array<i32>} : memref<1184x256xbf16, #tpu.memory_space<vmem>>, vector<16x256xbf16>,
    %c0_173 = arith.constant 0 : index
    %c0_174 = arith.constant 0 : index
    %c19 = arith.constant 19 : index
    %304 = vector.load %arg1[%c0_173, %c0_174, %c19] : memref<1x16x480xf32, #tpu.memory_space<vmem>>, vector<1x16x256xf32>
    %305 = vector.shape_cast %304 : vector<1x16x256xf32> to vector<16x256xf32>
    %306 = vector.broadcast %6 : vector<1x256xf32> to vector<16x256xf32>
    %307 = arith.mulf %305, %306 : vector<16x256xf32>
    %308 = arith.truncf %307 : vector<16x256xf32> to vector<16x256xbf16>
    %c832 = arith.constant 832 : index
    %c0_175 = arith.constant 0 : index
    %309 = vector.load %arg9[%c832, %c0_175] : memref<1184x256xbf16, #tpu.memory_space<vmem>>, vector<16x256xbf16>
    tpu.vector_store %arg9[%c832, %c0_175], %308 {strides = array<i32>} : memref<1184x256xbf16, #tpu.memory_space<vmem>>, vector<16x256xbf16>,
    %c0_176 = arith.constant 0 : index
    %c0_177 = arith.constant 0 : index
    %c22 = arith.constant 22 : index
    %310 = vector.load %arg1[%c0_176, %c0_177, %c22] : memref<1x16x480xf32, #tpu.memory_space<vmem>>, vector<1x16x256xf32>
    %311 = vector.shape_cast %310 : vector<1x16x256xf32> to vector<16x256xf32>
    %312 = vector.broadcast %7 : vector<1x256xf32> to vector<16x256xf32>
    %313 = arith.mulf %311, %312 : vector<16x256xf32>
    %314 = arith.truncf %313 : vector<16x256xf32> to vector<16x256xbf16>
    %c848 = arith.constant 848 : index
    %c0_178 = arith.constant 0 : index
    %315 = vector.load %arg9[%c848, %c0_178] : memref<1184x256xbf16, #tpu.memory_space<vmem>>, vector<16x256xbf16>
    tpu.vector_store %arg9[%c848, %c0_178], %314 {strides = array<i32>} : memref<1184x256xbf16, #tpu.memory_space<vmem>>, vector<16x256xbf16>,
    %c0_179 = arith.constant 0 : index
    %c0_180 = arith.constant 0 : index
    %c58 = arith.constant 58 : index
    %316 = vector.load %arg1[%c0_179, %c0_180, %c58] : memref<1x16x480xf32, #tpu.memory_space<vmem>>, vector<1x16x256xf32>
    %317 = vector.shape_cast %316 : vector<1x16x256xf32> to vector<16x256xf32>
    %318 = vector.broadcast %0 : vector<1x256xf32> to vector<16x256xf32>
    %319 = arith.mulf %317, %318 : vector<16x256xf32>
    %320 = arith.truncf %319 : vector<16x256xf32> to vector<16x256xbf16>
    %c864 = arith.constant 864 : index
    %c0_181 = arith.constant 0 : index
    %321 = vector.load %arg9[%c864, %c0_181] : memref<1184x256xbf16, #tpu.memory_space<vmem>>, vector<16x256xbf16>
    tpu.vector_store %arg9[%c864, %c0_181], %320 {strides = array<i32>} : memref<1184x256xbf16, #tpu.memory_space<vmem>>, vector<16x256xbf16>,
    %c0_182 = arith.constant 0 : index
    %c0_183 = arith.constant 0 : index
    %c61_184 = arith.constant 61 : index
    %322 = vector.load %arg1[%c0_182, %c0_183, %c61_184] : memref<1x16x480xf32, #tpu.memory_space<vmem>>, vector<1x16x256xf32>
    %323 = vector.shape_cast %322 : vector<1x16x256xf32> to vector<16x256xf32>
    %324 = vector.broadcast %1 : vector<1x256xf32> to vector<16x256xf32>
    %325 = arith.mulf %323, %324 : vector<16x256xf32>
    %326 = arith.truncf %325 : vector<16x256xf32> to vector<16x256xbf16>
    %c880 = arith.constant 880 : index
    %c0_185 = arith.constant 0 : index
    %327 = vector.load %arg9[%c880, %c0_185] : memref<1184x256xbf16, #tpu.memory_space<vmem>>, vector<16x256xbf16>
    tpu.vector_store %arg9[%c880, %c0_185], %326 {strides = array<i32>} : memref<1184x256xbf16, #tpu.memory_space<vmem>>, vector<16x256xbf16>,
    %c0_186 = arith.constant 0 : index
    %c0_187 = arith.constant 0 : index
    %c64_188 = arith.constant 64 : index
    %328 = vector.load %arg1[%c0_186, %c0_187, %c64_188] : memref<1x16x480xf32, #tpu.memory_space<vmem>>, vector<1x16x256xf32>
    %329 = vector.shape_cast %328 : vector<1x16x256xf32> to vector<16x256xf32>
    %330 = arith.truncf %329 : vector<16x256xf32> to vector<16x256xbf16>
    %c896 = arith.constant 896 : index
    %c0_189 = arith.constant 0 : index
    %331 = vector.load %arg9[%c896, %c0_189] : memref<1184x256xbf16, #tpu.memory_space<vmem>>, vector<16x256xbf16>
    tpu.vector_store %arg9[%c896, %c0_189], %330 {strides = array<i32>} : memref<1184x256xbf16, #tpu.memory_space<vmem>>, vector<16x256xbf16>,
    %c0_190 = arith.constant 0 : index
    %c0_191 = arith.constant 0 : index
    %c67_192 = arith.constant 67 : index
    %332 = vector.load %arg1[%c0_190, %c0_191, %c67_192] : memref<1x16x480xf32, #tpu.memory_space<vmem>>, vector<1x16x256xf32>
    %333 = vector.shape_cast %332 : vector<1x16x256xf32> to vector<16x256xf32>
    %334 = vector.broadcast %6 : vector<1x256xf32> to vector<16x256xf32>
    %335 = arith.mulf %333, %334 : vector<16x256xf32>
    %336 = arith.truncf %335 : vector<16x256xf32> to vector<16x256xbf16>
    %c912 = arith.constant 912 : index
    %c0_193 = arith.constant 0 : index
    %337 = vector.load %arg9[%c912, %c0_193] : memref<1184x256xbf16, #tpu.memory_space<vmem>>, vector<16x256xbf16>
    tpu.vector_store %arg9[%c912, %c0_193], %336 {strides = array<i32>} : memref<1184x256xbf16, #tpu.memory_space<vmem>>, vector<16x256xbf16>,
    %c0_194 = arith.constant 0 : index
    %c0_195 = arith.constant 0 : index
    %c70 = arith.constant 70 : index
    %338 = vector.load %arg1[%c0_194, %c0_195, %c70] : memref<1x16x480xf32, #tpu.memory_space<vmem>>, vector<1x16x256xf32>
    %339 = vector.shape_cast %338 : vector<1x16x256xf32> to vector<16x256xf32>
    %340 = vector.broadcast %7 : vector<1x256xf32> to vector<16x256xf32>
    %341 = arith.mulf %339, %340 : vector<16x256xf32>
    %342 = arith.truncf %341 : vector<16x256xf32> to vector<16x256xbf16>
    %c928 = arith.constant 928 : index
    %c0_196 = arith.constant 0 : index
    %343 = vector.load %arg9[%c928, %c0_196] : memref<1184x256xbf16, #tpu.memory_space<vmem>>, vector<16x256xbf16>
    tpu.vector_store %arg9[%c928, %c0_196], %342 {strides = array<i32>} : memref<1184x256xbf16, #tpu.memory_space<vmem>>, vector<16x256xbf16>,
    %c0_197 = arith.constant 0 : index
    %c0_198 = arith.constant 0 : index
    %c106 = arith.constant 106 : index
    %344 = vector.load %arg1[%c0_197, %c0_198, %c106] : memref<1x16x480xf32, #tpu.memory_space<vmem>>, vector<1x16x256xf32>
    %345 = vector.shape_cast %344 : vector<1x16x256xf32> to vector<16x256xf32>
    %346 = vector.broadcast %0 : vector<1x256xf32> to vector<16x256xf32>
    %347 = arith.mulf %345, %346 : vector<16x256xf32>
    %348 = arith.truncf %347 : vector<16x256xf32> to vector<16x256xbf16>
    %c944 = arith.constant 944 : index
    %c0_199 = arith.constant 0 : index
    %349 = vector.load %arg9[%c944, %c0_199] : memref<1184x256xbf16, #tpu.memory_space<vmem>>, vector<16x256xbf16>
    tpu.vector_store %arg9[%c944, %c0_199], %348 {strides = array<i32>} : memref<1184x256xbf16, #tpu.memory_space<vmem>>, vector<16x256xbf16>,
    %c0_200 = arith.constant 0 : index
    %c0_201 = arith.constant 0 : index
    %c109_202 = arith.constant 109 : index
    %350 = vector.load %arg1[%c0_200, %c0_201, %c109_202] : memref<1x16x480xf32, #tpu.memory_space<vmem>>, vector<1x16x256xf32>
    %351 = vector.shape_cast %350 : vector<1x16x256xf32> to vector<16x256xf32>
    %352 = vector.broadcast %1 : vector<1x256xf32> to vector<16x256xf32>
    %353 = arith.mulf %351, %352 : vector<16x256xf32>
    %354 = arith.truncf %353 : vector<16x256xf32> to vector<16x256xbf16>
    %c960 = arith.constant 960 : index
    %c0_203 = arith.constant 0 : index
    %355 = vector.load %arg9[%c960, %c0_203] : memref<1184x256xbf16, #tpu.memory_space<vmem>>, vector<16x256xbf16>
    tpu.vector_store %arg9[%c960, %c0_203], %354 {strides = array<i32>} : memref<1184x256xbf16, #tpu.memory_space<vmem>>, vector<16x256xbf16>,
    %c0_204 = arith.constant 0 : index
    %c0_205 = arith.constant 0 : index
    %c112_206 = arith.constant 112 : index
    %356 = vector.load %arg1[%c0_204, %c0_205, %c112_206] : memref<1x16x480xf32, #tpu.memory_space<vmem>>, vector<1x16x256xf32>
    %357 = vector.shape_cast %356 : vector<1x16x256xf32> to vector<16x256xf32>
    %358 = arith.truncf %357 : vector<16x256xf32> to vector<16x256xbf16>
    %c976 = arith.constant 976 : index
    %c0_207 = arith.constant 0 : index
    %359 = vector.load %arg9[%c976, %c0_207] : memref<1184x256xbf16, #tpu.memory_space<vmem>>, vector<16x256xbf16>
    tpu.vector_store %arg9[%c976, %c0_207], %358 {strides = array<i32>} : memref<1184x256xbf16, #tpu.memory_space<vmem>>, vector<16x256xbf16>,
    %c0_208 = arith.constant 0 : index
    %c0_209 = arith.constant 0 : index
    %c115_210 = arith.constant 115 : index
    %360 = vector.load %arg1[%c0_208, %c0_209, %c115_210] : memref<1x16x480xf32, #tpu.memory_space<vmem>>, vector<1x16x256xf32>
    %361 = vector.shape_cast %360 : vector<1x16x256xf32> to vector<16x256xf32>
    %362 = vector.broadcast %6 : vector<1x256xf32> to vector<16x256xf32>
    %363 = arith.mulf %361, %362 : vector<16x256xf32>
    %364 = arith.truncf %363 : vector<16x256xf32> to vector<16x256xbf16>
    %c992 = arith.constant 992 : index
    %c0_211 = arith.constant 0 : index
    %365 = vector.load %arg9[%c992, %c0_211] : memref<1184x256xbf16, #tpu.memory_space<vmem>>, vector<16x256xbf16>
    tpu.vector_store %arg9[%c992, %c0_211], %364 {strides = array<i32>} : memref<1184x256xbf16, #tpu.memory_space<vmem>>, vector<16x256xbf16>,
    %c0_212 = arith.constant 0 : index
    %c0_213 = arith.constant 0 : index
    %c118 = arith.constant 118 : index
    %366 = vector.load %arg1[%c0_212, %c0_213, %c118] : memref<1x16x480xf32, #tpu.memory_space<vmem>>, vector<1x16x256xf32>
    %367 = vector.shape_cast %366 : vector<1x16x256xf32> to vector<16x256xf32>
    %368 = vector.broadcast %7 : vector<1x256xf32> to vector<16x256xf32>
    %369 = arith.mulf %367, %368 : vector<16x256xf32>
    %370 = arith.truncf %369 : vector<16x256xf32> to vector<16x256xbf16>
    %c1008 = arith.constant 1008 : index
    %c0_214 = arith.constant 0 : index
    %371 = vector.load %arg9[%c1008, %c0_214] : memref<1184x256xbf16, #tpu.memory_space<vmem>>, vector<16x256xbf16>
    tpu.vector_store %arg9[%c1008, %c0_214], %370 {strides = array<i32>} : memref<1184x256xbf16, #tpu.memory_space<vmem>>, vector<16x256xbf16>,
    %c0_215 = arith.constant 0 : index
    %c0_216 = arith.constant 0 : index
    %c154 = arith.constant 154 : index
    %372 = vector.load %arg1[%c0_215, %c0_216, %c154] : memref<1x16x480xf32, #tpu.memory_space<vmem>>, vector<1x16x256xf32>
    %373 = vector.shape_cast %372 : vector<1x16x256xf32> to vector<16x256xf32>
    %374 = vector.broadcast %0 : vector<1x256xf32> to vector<16x256xf32>
    %375 = arith.mulf %373, %374 : vector<16x256xf32>
    %376 = arith.truncf %375 : vector<16x256xf32> to vector<16x256xbf16>
    %c1024 = arith.constant 1024 : index
    %c0_217 = arith.constant 0 : index
    %377 = vector.load %arg9[%c1024, %c0_217] : memref<1184x256xbf16, #tpu.memory_space<vmem>>, vector<16x256xbf16>
    tpu.vector_store %arg9[%c1024, %c0_217], %376 {strides = array<i32>} : memref<1184x256xbf16, #tpu.memory_space<vmem>>, vector<16x256xbf16>,
    %c0_218 = arith.constant 0 : index
    %c0_219 = arith.constant 0 : index
    %c157_220 = arith.constant 157 : index
    %378 = vector.load %arg1[%c0_218, %c0_219, %c157_220] : memref<1x16x480xf32, #tpu.memory_space<vmem>>, vector<1x16x256xf32>
    %379 = vector.shape_cast %378 : vector<1x16x256xf32> to vector<16x256xf32>
    %380 = vector.broadcast %1 : vector<1x256xf32> to vector<16x256xf32>
    %381 = arith.mulf %379, %380 : vector<16x256xf32>
    %382 = arith.truncf %381 : vector<16x256xf32> to vector<16x256xbf16>
    %c1040 = arith.constant 1040 : index
    %c0_221 = arith.constant 0 : index
    %383 = vector.load %arg9[%c1040, %c0_221] : memref<1184x256xbf16, #tpu.memory_space<vmem>>, vector<16x256xbf16>
    tpu.vector_store %arg9[%c1040, %c0_221], %382 {strides = array<i32>} : memref<1184x256xbf16, #tpu.memory_space<vmem>>, vector<16x256xbf16>,
    %c0_222 = arith.constant 0 : index
    %c0_223 = arith.constant 0 : index
    %c160_224 = arith.constant 160 : index
    %384 = vector.load %arg1[%c0_222, %c0_223, %c160_224] : memref<1x16x480xf32, #tpu.memory_space<vmem>>, vector<1x16x256xf32>
    %385 = vector.shape_cast %384 : vector<1x16x256xf32> to vector<16x256xf32>
    %386 = arith.truncf %385 : vector<16x256xf32> to vector<16x256xbf16>
    %c1056 = arith.constant 1056 : index
    %c0_225 = arith.constant 0 : index
    %387 = vector.load %arg9[%c1056, %c0_225] : memref<1184x256xbf16, #tpu.memory_space<vmem>>, vector<16x256xbf16>
    tpu.vector_store %arg9[%c1056, %c0_225], %386 {strides = array<i32>} : memref<1184x256xbf16, #tpu.memory_space<vmem>>, vector<16x256xbf16>,
    %c0_226 = arith.constant 0 : index
    %c0_227 = arith.constant 0 : index
    %c163_228 = arith.constant 163 : index
    %388 = vector.load %arg1[%c0_226, %c0_227, %c163_228] : memref<1x16x480xf32, #tpu.memory_space<vmem>>, vector<1x16x256xf32>
    %389 = vector.shape_cast %388 : vector<1x16x256xf32> to vector<16x256xf32>
    %390 = vector.broadcast %6 : vector<1x256xf32> to vector<16x256xf32>
    %391 = arith.mulf %389, %390 : vector<16x256xf32>
    %392 = arith.truncf %391 : vector<16x256xf32> to vector<16x256xbf16>
    %c1072 = arith.constant 1072 : index
    %c0_229 = arith.constant 0 : index
    %393 = vector.load %arg9[%c1072, %c0_229] : memref<1184x256xbf16, #tpu.memory_space<vmem>>, vector<16x256xbf16>
    tpu.vector_store %arg9[%c1072, %c0_229], %392 {strides = array<i32>} : memref<1184x256xbf16, #tpu.memory_space<vmem>>, vector<16x256xbf16>,
    %c0_230 = arith.constant 0 : index
    %c0_231 = arith.constant 0 : index
    %c166 = arith.constant 166 : index
    %394 = vector.load %arg1[%c0_230, %c0_231, %c166] : memref<1x16x480xf32, #tpu.memory_space<vmem>>, vector<1x16x256xf32>
    %395 = vector.shape_cast %394 : vector<1x16x256xf32> to vector<16x256xf32>
    %396 = vector.broadcast %7 : vector<1x256xf32> to vector<16x256xf32>
    %397 = arith.mulf %395, %396 : vector<16x256xf32>
    %398 = arith.truncf %397 : vector<16x256xf32> to vector<16x256xbf16>
    %c1088 = arith.constant 1088 : index
    %c0_232 = arith.constant 0 : index
    %399 = vector.load %arg9[%c1088, %c0_232] : memref<1184x256xbf16, #tpu.memory_space<vmem>>, vector<16x256xbf16>
    tpu.vector_store %arg9[%c1088, %c0_232], %398 {strides = array<i32>} : memref<1184x256xbf16, #tpu.memory_space<vmem>>, vector<16x256xbf16>,
    %c0_233 = arith.constant 0 : index
    %c0_234 = arith.constant 0 : index
    %c202 = arith.constant 202 : index
    %400 = vector.load %arg1[%c0_233, %c0_234, %c202] : memref<1x16x480xf32, #tpu.memory_space<vmem>>, vector<1x16x256xf32>
    %401 = vector.shape_cast %400 : vector<1x16x256xf32> to vector<16x256xf32>
    %402 = vector.broadcast %0 : vector<1x256xf32> to vector<16x256xf32>
    %403 = arith.mulf %401, %402 : vector<16x256xf32>
    %404 = arith.truncf %403 : vector<16x256xf32> to vector<16x256xbf16>
    %c1104 = arith.constant 1104 : index
    %c0_235 = arith.constant 0 : index
    %405 = vector.load %arg9[%c1104, %c0_235] : memref<1184x256xbf16, #tpu.memory_space<vmem>>, vector<16x256xbf16>
    tpu.vector_store %arg9[%c1104, %c0_235], %404 {strides = array<i32>} : memref<1184x256xbf16, #tpu.memory_space<vmem>>, vector<16x256xbf16>,
    %c0_236 = arith.constant 0 : index
    %c0_237 = arith.constant 0 : index
    %c205 = arith.constant 205 : index
    %406 = vector.load %arg1[%c0_236, %c0_237, %c205] : memref<1x16x480xf32, #tpu.memory_space<vmem>>, vector<1x16x256xf32>
    %407 = vector.shape_cast %406 : vector<1x16x256xf32> to vector<16x256xf32>
    %408 = vector.broadcast %1 : vector<1x256xf32> to vector<16x256xf32>
    %409 = arith.mulf %407, %408 : vector<16x256xf32>
    %410 = arith.truncf %409 : vector<16x256xf32> to vector<16x256xbf16>
    %c1120 = arith.constant 1120 : index
    %c0_238 = arith.constant 0 : index
    %411 = vector.load %arg9[%c1120, %c0_238] : memref<1184x256xbf16, #tpu.memory_space<vmem>>, vector<16x256xbf16>
    tpu.vector_store %arg9[%c1120, %c0_238], %410 {strides = array<i32>} : memref<1184x256xbf16, #tpu.memory_space<vmem>>, vector<16x256xbf16>,
    %c0_239 = arith.constant 0 : index
    %c0_240 = arith.constant 0 : index
    %c208_241 = arith.constant 208 : index
    %412 = vector.load %arg1[%c0_239, %c0_240, %c208_241] : memref<1x16x480xf32, #tpu.memory_space<vmem>>, vector<1x16x256xf32>
    %413 = vector.shape_cast %412 : vector<1x16x256xf32> to vector<16x256xf32>
    %414 = arith.truncf %413 : vector<16x256xf32> to vector<16x256xbf16>
    %c1136 = arith.constant 1136 : index
    %c0_242 = arith.constant 0 : index
    %415 = vector.load %arg9[%c1136, %c0_242] : memref<1184x256xbf16, #tpu.memory_space<vmem>>, vector<16x256xbf16>
    tpu.vector_store %arg9[%c1136, %c0_242], %414 {strides = array<i32>} : memref<1184x256xbf16, #tpu.memory_space<vmem>>, vector<16x256xbf16>,
    %c0_243 = arith.constant 0 : index
    %c0_244 = arith.constant 0 : index
    %c211 = arith.constant 211 : index
    %416 = vector.load %arg1[%c0_243, %c0_244, %c211] : memref<1x16x480xf32, #tpu.memory_space<vmem>>, vector<1x16x256xf32>
    %417 = vector.shape_cast %416 : vector<1x16x256xf32> to vector<16x256xf32>
    %418 = vector.broadcast %6 : vector<1x256xf32> to vector<16x256xf32>
    %419 = arith.mulf %417, %418 : vector<16x256xf32>
    %420 = arith.truncf %419 : vector<16x256xf32> to vector<16x256xbf16>
    %c1152 = arith.constant 1152 : index
    %c0_245 = arith.constant 0 : index
    %421 = vector.load %arg9[%c1152, %c0_245] : memref<1184x256xbf16, #tpu.memory_space<vmem>>, vector<16x256xbf16>
    tpu.vector_store %arg9[%c1152, %c0_245], %420 {strides = array<i32>} : memref<1184x256xbf16, #tpu.memory_space<vmem>>, vector<16x256xbf16>,
    %c0_246 = arith.constant 0 : index
    %c0_247 = arith.constant 0 : index
    %c214 = arith.constant 214 : index
    %422 = vector.load %arg1[%c0_246, %c0_247, %c214] : memref<1x16x480xf32, #tpu.memory_space<vmem>>, vector<1x16x256xf32>
    %423 = vector.shape_cast %422 : vector<1x16x256xf32> to vector<16x256xf32>
    %424 = vector.broadcast %7 : vector<1x256xf32> to vector<16x256xf32>
    %425 = arith.mulf %423, %424 : vector<16x256xf32>
    %426 = arith.truncf %425 : vector<16x256xf32> to vector<16x256xbf16>
    %c1168 = arith.constant 1168 : index
    %c0_248 = arith.constant 0 : index
    %427 = vector.load %arg9[%c1168, %c0_248] : memref<1184x256xbf16, #tpu.memory_space<vmem>>, vector<16x256xbf16>
    tpu.vector_store %arg9[%c1168, %c0_248], %426 {strides = array<i32>} : memref<1184x256xbf16, #tpu.memory_space<vmem>>, vector<16x256xbf16>,
    %c0_249 = arith.constant 0 : index
    %c0_250 = arith.constant 0 : index
    %428 = vector.load %arg5[%c0_249, %c0_250] : memref<16x3xf32, #tpu.memory_space<vmem>>, vector<16x1xf32>
    %c0_251 = arith.constant 0 : index
    %c1_252 = arith.constant 1 : index
    %429 = vector.load %arg5[%c0_251, %c1_252] : memref<16x3xf32, #tpu.memory_space<vmem>>, vector<16x1xf32>
    %c0_253 = arith.constant 0 : index
    %c2_254 = arith.constant 2 : index
    %430 = vector.load %arg5[%c0_253, %c2_254] : memref<16x3xf32, #tpu.memory_space<vmem>>, vector<16x1xf32>
    %c0_255 = arith.constant 0 : index
    %c0_256 = arith.constant 0 : index
    %431 = vector.load %arg4[%c0_255, %c0_256] : memref<16x1184xbf16, #tpu.memory_space<vmem>>, vector<16x1184xbf16>
    %c0_257 = arith.constant 0 : index
    %c0_258 = arith.constant 0 : index
    %432 = vector.load %arg9[%c0_257, %c0_258] : memref<1184x256xbf16, #tpu.memory_space<vmem>>, vector<1184x256xbf16>
    %cst = arith.constant dense<0.000000e+00> : vector<16x256xf32>
    %433 = tpu.matmul %431, %432, %cst {dimension_numbers = #tpu.dot_dimension_numbers<[1], [0], [0], [1], [0, 0, 1, 1], [], []>} : vector<16x1184xbf16>, vector<1184x256xbf16>, vector<16x256xf32> -> vector<16x256xf32>
    %434 = vector.broadcast %428 : vector<16x1xf32> to vector<16x256xf32>
    %435 = arith.addf %433, %434 : vector<16x256xf32>
    %436 = arith.truncf %435 : vector<16x256xf32> to vector<16x256xbf16>
    %c0_259 = arith.constant 0 : index
    %c0_260 = arith.constant 0 : index
    %437 = vector.load %arg6[%c0_259, %c0_260] : memref<16x16xbf16, #tpu.memory_space<vmem>>, vector<16x16xbf16>
    %cst_261 = arith.constant dense<0.000000e+00> : vector<16x256xf32>
    %438 = tpu.matmul %437, %436, %cst_261 {dimension_numbers = #tpu.dot_dimension_numbers<[1], [0], [0], [1], [0, 0, 1, 1], [], []>} : vector<16x16xbf16>, vector<16x256xbf16>, vector<16x256xf32> -> vector<16x256xf32>
    %439 = arith.truncf %438 : vector<16x256xf32> to vector<16x256xbf16>
    %440 = vector.broadcast %430 : vector<16x1xf32> to vector<16x256xf32>
    %441 = arith.mulf %440, %435 : vector<16x256xf32>
    %cst_262 = arith.constant dense<0.000000e+00> : vector<256xf32>
    %442 = vector.multi_reduction <add>, %441, %cst_262 [0] : vector<16x256xf32> to vector<256xf32>
    %443 = vector.shape_cast %442 : vector<256xf32> to vector<1x256xf32>
    %c0_263 = arith.constant 0 : index
    %c0_264 = arith.constant 0 : index
    %444 = vector.load %arg7[%c0_263, %c0_264] : memref<16x16xbf16, #tpu.memory_space<vmem>>, vector<16x16xbf16>
    %cst_265 = arith.constant dense<0.000000e+00> : vector<16x256xf32>
    %445 = tpu.matmul %444, %436, %cst_265 {dimension_numbers = #tpu.dot_dimension_numbers<[1], [0], [0], [1], [0, 0, 1, 1], [], []>} : vector<16x16xbf16>, vector<16x256xbf16>, vector<16x256xf32> -> vector<16x256xf32>
    %446 = vector.broadcast %429 : vector<16x1xf32> to vector<16x256xf32>
    %447 = arith.addf %445, %446 : vector<16x256xf32>
    %448 = arith.truncf %447 : vector<16x256xf32> to vector<16x256xbf16>
    %449 = vector.extract_strided_slice %436 {offsets = [0, 0], sizes = [16, 128], strides = [1, 1]} : vector<16x256xbf16> to vector<16x128xbf16>
    %cst_266 = arith.constant dense<0.000000e+00> : vector<128x256xf32>
    %450 = tpu.matmul %449, %439, %cst_266 {dimension_numbers = #tpu.dot_dimension_numbers<[0], [0], [1], [1], [0, 1, 1, 1], [], []>} : vector<16x128xbf16>, vector<16x256xbf16>, vector<128x256xf32> -> vector<128x256xf32>
    %451 = vector.broadcast %443 : vector<1x256xf32> to vector<128x256xf32>
    %452 = arith.addf %450, %451 : vector<128x256xf32>
    %cst_267 = arith.constant dense<0xFF800000> : vector<128xf32>
    %453 = vector.multi_reduction <maximumf>, %452, %cst_267 [1] : vector<128x256xf32> to vector<128xf32>
    %454 = vector.shape_cast %453 : vector<128xf32> to vector<128x1xf32>
    %455 = vector.broadcast %454 : vector<128x1xf32> to vector<128x256xf32>
    %456 = arith.subf %452, %455 : vector<128x256xf32>
    %457 = math.exp %456 : vector<128x256xf32>
    %cst_268 = arith.constant dense<0.000000e+00> : vector<128xf32>
    %458 = vector.multi_reduction <add>, %457, %cst_268 [1] : vector<128x256xf32> to vector<128xf32>
    %459 = vector.shape_cast %458 : vector<128xf32> to vector<128x1xf32>
    %460 = tpu.reciprocal %459 {approx = true} : vector<128x1xf32> -> vector<128x1xf32>
    %461 = vector.broadcast %460 : vector<128x1xf32> to vector<128x256xf32>
    %462 = arith.mulf %457, %461 : vector<128x256xf32>
    %463 = arith.truncf %462 : vector<128x256xf32> to vector<128x256xbf16>
    %cst_269 = arith.constant dense<0.000000e+00> : vector<16x128xf32>
    %464 = tpu.matmul %448, %463, %cst_269 {dimension_numbers = #tpu.dot_dimension_numbers<[1], [1], [0], [0], [0, 0, 1, 0], [], []>} : vector<16x256xbf16>, vector<128x256xbf16>, vector<16x128xf32> -> vector<16x128xf32>
    %c0_270 = arith.constant 0 : index
    %c0_271 = arith.constant 0 : index
    %c0_272 = arith.constant 0 : index
    %465 = vector.load %arg2[%c0_270, %c0_271, %c0_272] : memref<1x1x256xf32, #tpu.memory_space<vmem>>, vector<1x1x128xf32>
    %466 = vector.shape_cast %465 : vector<1x1x128xf32> to vector<1x128xf32>
    %cst_273 = arith.constant 1.000000e+00 : f32
    %467 = vector.broadcast %cst_273 : f32 to vector<1x128xf32>
    %468 = arith.addf %467, %466 : vector<1x128xf32>
    %469 = vector.broadcast %468 : vector<1x128xf32> to vector<16x128xf32>
    %470 = arith.mulf %464, %469 : vector<16x128xf32>
    %c0_274 = arith.constant 0 : index
    %c0_275 = arith.constant 0 : index
    %c0_276 = arith.constant 0 : index
    %471 = vector.load %arg8[%c0_274, %c0_275, %c0_276] : memref<1x16x256xf32, #tpu.memory_space<vmem>>, vector<1x16x128xf32>
    %472 = vector.shape_cast %471 : vector<1x16x128xf32> to vector<16x128xf32>
    %473 = vector.shape_cast %470 : vector<16x128xf32> to vector<1x16x128xf32>
    tpu.vector_store %arg8[%c0_274, %c0_275, %c0_276], %473 {strides = array<i32>} : memref<1x16x256xf32, #tpu.memory_space<vmem>>, vector<1x16x128xf32>,
    %474 = vector.extract_strided_slice %436 {offsets = [0, 128], sizes = [16, 128], strides = [1, 1]} : vector<16x256xbf16> to vector<16x128xbf16>
    %cst_277 = arith.constant dense<0.000000e+00> : vector<128x256xf32>
    %475 = tpu.matmul %474, %439, %cst_277 {dimension_numbers = #tpu.dot_dimension_numbers<[0], [0], [1], [1], [0, 1, 1, 1], [], []>} : vector<16x128xbf16>, vector<16x256xbf16>, vector<128x256xf32> -> vector<128x256xf32>
    %476 = vector.broadcast %443 : vector<1x256xf32> to vector<128x256xf32>
    %477 = arith.addf %475, %476 : vector<128x256xf32>
    %cst_278 = arith.constant dense<0xFF800000> : vector<128xf32>
    %478 = vector.multi_reduction <maximumf>, %477, %cst_278 [1] : vector<128x256xf32> to vector<128xf32>
    %479 = vector.shape_cast %478 : vector<128xf32> to vector<128x1xf32>
    %480 = vector.broadcast %479 : vector<128x1xf32> to vector<128x256xf32>
    %481 = arith.subf %477, %480 : vector<128x256xf32>
    %482 = math.exp %481 : vector<128x256xf32>
    %cst_279 = arith.constant dense<0.000000e+00> : vector<128xf32>
    %483 = vector.multi_reduction <add>, %482, %cst_279 [1] : vector<128x256xf32> to vector<128xf32>
    %484 = vector.shape_cast %483 : vector<128xf32> to vector<128x1xf32>
    %485 = tpu.reciprocal %484 {approx = true} : vector<128x1xf32> -> vector<128x1xf32>
    %486 = vector.broadcast %485 : vector<128x1xf32> to vector<128x256xf32>
    %487 = arith.mulf %482, %486 : vector<128x256xf32>
    %488 = arith.truncf %487 : vector<128x256xf32> to vector<128x256xbf16>
    %cst_280 = arith.constant dense<0.000000e+00> : vector<16x128xf32>
    %489 = tpu.matmul %448, %488, %cst_280 {dimension_numbers = #tpu.dot_dimension_numbers<[1], [1], [0], [0], [0, 0, 1, 0], [], []>} : vector<16x256xbf16>, vector<128x256xbf16>, vector<16x128xf32> -> vector<16x128xf32>
    %c0_281 = arith.constant 0 : index
    %c0_282 = arith.constant 0 : index
    %c128_283 = arith.constant 128 : index
    %490 = vector.load %arg2[%c0_281, %c0_282, %c128_283] : memref<1x1x256xf32, #tpu.memory_space<vmem>>, vector<1x1x128xf32>
    %491 = vector.shape_cast %490 : vector<1x1x128xf32> to vector<1x128xf32>
    %cst_284 = arith.constant 1.000000e+00 : f32
    %492 = vector.broadcast %cst_284 : f32 to vector<1x128xf32>
    %493 = arith.addf %492, %491 : vector<1x128xf32>
    %494 = vector.broadcast %493 : vector<1x128xf32> to vector<16x128xf32>
    %495 = arith.mulf %489, %494 : vector<16x128xf32>
    %c0_285 = arith.constant 0 : index
    %c0_286 = arith.constant 0 : index
    %c128_287 = arith.constant 128 : index
    %496 = vector.load %arg8[%c0_285, %c0_286, %c128_287] : memref<1x16x256xf32, #tpu.memory_space<vmem>>, vector<1x16x128xf32>
    %497 = vector.shape_cast %496 : vector<1x16x128xf32> to vector<16x128xf32>
    %498 = vector.shape_cast %495 : vector<16x128xf32> to vector<1x16x128xf32>
    tpu.vector_store %arg8[%c0_285, %c0_286, %c128_287], %498 {strides = array<i32>} : memref<1x16x256xf32, #tpu.memory_space<vmem>>, vector<1x16x128xf32>,
    return
  }
  func.func @transform_0(%arg0: i32) -> (i32, i32, i32) {
    %c0_i32 = arith.constant 0 : i32
    %c0_i32_0 = arith.constant 0 : i32
    %c0_i32_1 = arith.constant 0 : i32
    return %arg0, %c0_i32, %c0_i32_0 : i32, i32, i32
  }
  func.func @transform_1(%arg0: i32) -> (i32, i32, i32) {
    %c0_i32 = arith.constant 0 : i32
    %c0_i32_0 = arith.constant 0 : i32
    %c0_i32_1 = arith.constant 0 : i32
    return %arg0, %c0_i32, %c0_i32_0 : i32, i32, i32
  }
  func.func @transform_2(%arg0: i32) -> (i32, i32) {
    %c0_i32 = arith.constant 0 : i32
    %c0_i32_0 = arith.constant 0 : i32
    %c0_i32_1 = arith.constant 0 : i32
    return %c0_i32, %c0_i32_0 : i32, i32
  }
  func.func @transform_3(%arg0: i32) -> (i32, i32) {
    %c0_i32 = arith.constant 0 : i32
    %c0_i32_0 = arith.constant 0 : i32
    %c0_i32_1 = arith.constant 0 : i32
    return %c0_i32, %c0_i32_0 : i32, i32
  }
  func.func @transform_4(%arg0: i32) -> (i32, i32) {
    %c0_i32 = arith.constant 0 : i32
    %c0_i32_0 = arith.constant 0 : i32
    %c0_i32_1 = arith.constant 0 : i32
    return %c0_i32, %c0_i32_0 : i32, i32
  }
  func.func @transform_5(%arg0: i32) -> (i32, i32) {
    %c0_i32 = arith.constant 0 : i32
    %c0_i32_0 = arith.constant 0 : i32
    %c0_i32_1 = arith.constant 0 : i32
    return %c0_i32, %c0_i32_0 : i32, i32
  }
  func.func @transform_6(%arg0: i32) -> (i32, i32) {
    %c0_i32 = arith.constant 0 : i32
    %c0_i32_0 = arith.constant 0 : i32
    %c0_i32_1 = arith.constant 0 : i32
    return %c0_i32, %c0_i32_0 : i32, i32
  }
  func.func @transform_7(%arg0: i32) -> (i32, i32, i32) {
    %c0_i32 = arith.constant 0 : i32
    %c0_i32_0 = arith.constant 0 : i32
    %c0_i32_1 = arith.constant 0 : i32
    return %arg0, %c0_i32, %c0_i32_0 : i32, i32, i32
  }
}

</mosaic_0001>

<llo_original>
// kernel: tpu_custom_call.1
$region0: #{tpu_custom_call.1}
  #allocation0 [shape = 'u32[]', space=smem, size = 0x4, offset = 0x4, fixed_abs, tag = 'smem constant byte address 0x4 - core index']
  #allocation1 [shape = 'u32[144,128]{1,0:T(1,128)}', space=vmem, size = 0x12000, scoped, tag = 'internal scratch']
  #allocation2 [shape = 'bf16[1184,256]{1,0:T(16,128)(2,1)}', space=vmem, size = 0x94000, scoped, tag = 'scratch operand']
  %s0 = inlined_call_operand.hbm [shape: f32[2,16,480], index: 0, kind: input, shape index: {}]
  %s1 = inlined_call_operand.hbm [shape: f32[2,1,256], index: 1, kind: input, shape index: {}]
  %s2 = inlined_call_operand.vmem [shape: f32[8,256], index: 2, kind: input, shape index: {}]
  %s3 = inlined_call_operand.hbm [shape: bf16[16,1184], index: 3, kind: input, shape index: {}]
  %s4 = inlined_call_operand.vmem [shape: f32[16,3], index: 4, kind: input, shape index: {}]
  %s5 = inlined_call_operand.vmem [shape: bf16[16,16], index: 5, kind: input, shape index: {}]
  %s6 = inlined_call_operand.vmem [shape: bf16[16,16], index: 6, kind: input, shape index: {}]
  %s7 = inlined_call_operand.hbm [shape: f32[2,16,256], index: 7, kind: output, shape index: {}]
  %s8 = sld [smem:[#allocation0]]
  $region73: #{tpu_custom_call.1} parent=0
    _
  %s10 = ssub.s32 1, %s8
  %s11 = scalar_select 0, %s10, %s8
  $region1: #{tpu_custom_call.1} parent=0
    #allocation3 [shape = 'u8[65536]{0}', space=vmem, size = 0x10000, scoped, tag = 'input window, operand 0']
    #allocation4 [shape = 's32[2]{0}', space=sflag, size = 0x8, scoped, tag = 'scoped memory for tpu_custom_call.1']
    #allocation5 [shape = 's32[2]{0}', space=sflag, size = 0x8, scoped, tag = 'scoped memory for tpu_custom_call.1']
    #allocation6 [shape = 'u8[2048]{0}', space=vmem, size = 0x800, scoped, tag = 'input window, operand 1']
    #allocation7 [shape = 's32[2]{0}', space=sflag, size = 0x8, scoped, tag = 'scoped memory for tpu_custom_call.1']
    #allocation8 [shape = 'u8[40960]{0}', space=vmem, size = 0xa000, scoped, tag = 'input window, operand 3, single buffered']
    #allocation9 [shape = 'u8[32768]{0}', space=vmem, size = 0x8000, scoped, tag = 'output window, operand 0']
    %12 = vsyncpa [#allocation4], 0
    %s13 = scalar_lea.sflag [#allocation4], 1
    %14 = vsyncpa %s13, 0
    %15 = vsyncpa [#allocation7], 0
    %s16 = scalar_lea.sflag [#allocation7], 1
    %17 = vsyncpa %s16, 0
    %18 = vsyncpa [#allocation5], 0
    %s19 = scalar_lea.sflag [#allocation5], 1
    %20 = vsyncpa %s19, 0
    loop: start=0, step=1, limit=4
    $region2: #{tpu_custom_call.1} parent=1 // loop_pre_header
      _
    $region3: #{tpu_custom_call.1} parent=1 // loop_header
      %s22 = sphi 0, %s26
      %p23 = scmp.ge.s32.totalorder %s22, 4
      %s32 = sphi 0, %s34
      %s35 = sphi 0, %s32
      %s36 = sphi 0, %s35
      %s52 = sphi 0, %s36
      %s58 = sphi 0, %s60
      %s61 = sphi 0, %s58
      %s62 = sphi 0, %s61
      %s78 = sphi 0, %s62
      %s82 = sphi 0, %s82
      %s84 = sphi 0, %s82
      %s85 = sphi 0, %s84
      %s99 = sphi 0, %s85
      %s103 = sphi 0, %s103
      %s105 = sphi 0, %s103
      %s106 = sphi 0, %s105
      %s120 = sphi 0, %s106
      %s124 = sphi 0, %s124
      %s126 = sphi 0, %s124
      %s127 = sphi 0, %s126
      %s141 = sphi 0, %s127
      %s145 = sphi 0, %s145
      %s147 = sphi 0, %s145
      %s148 = sphi 0, %s147
      %s162 = sphi 0, %s148
      %s166 = sphi 0, %s166
      %s168 = sphi 0, %s166
      %s169 = sphi 0, %s168
      %s183 = sphi 0, %s169
      %s189 = sphi 0, %s191
      %s192 = sphi 0, %s189
      %s193 = sphi 0, %s192
      %s209 = sphi 0, %s193
    $region4: #{tpu_custom_call.1} parent=1 // loop_header_branch
      %25 = sbr.rel (%p23) target = $region8
    $region5: #{tpu_custom_call.1} parent=1 // loop_body
      %s27 = ssub.s32 %s22, 1
      %s28 = ssub.s32 %s22, 2
      %s29 = sadd.s32 %s22, 1
      %s30 = ssub.s32 %s22, %s29
      %p31 = scmp.eq.s32.totalorder %s30, 0
      %s33 = sadd.s32 %s32, 1
      %s34 = scalar_select %p31, %s32, %s33
      %p37 = pneg %p31
      %p38 = scmp.eq.s32.totalorder %s22, 1
      %p39 = por %p37, %p38
      %p40 = scmp.ne.s32.totalorder %s32, %s35
      %p41 = scmp.eq.s32.totalorder %s22, 0
      %p42 = por %p40, %p41
      %p43 = scmp.ne.s32.totalorder %s32, %s35
      %p44 = scmp.eq.s32.totalorder %s27, 1
      %p45 = por %p43, %p44
      %p46 = scmp.ne.s32.totalorder %s35, %s36
      %p47 = scmp.eq.s32.totalorder %s27, 0
      %p48 = por %p46, %p47
      %p49 = scmp.ne.s32.totalorder %s35, %s36
      %p50 = scmp.eq.s32.totalorder %s28, 1
      %p51 = por %p49, %p50
      %p53 = scmp.ne.s32.totalorder %s36, %s52
      %p54 = scmp.eq.s32.totalorder %s28, 0
      %p55 = por %p53, %p54
      %s56 = ssub.s32 %s22, %s29
      %p57 = scmp.eq.s32.totalorder %s56, 0
      %s59 = sadd.s32 %s58, 1
      %s60 = scalar_select %p57, %s58, %s59
      %p63 = pneg %p57
      %p64 = scmp.eq.s32.totalorder %s22, 1
      %p65 = por %p63, %p64
      %p66 = scmp.ne.s32.totalorder %s58, %s61
      %p67 = scmp.eq.s32.totalorder %s22, 0
      %p68 = por %p66, %p67
      %p69 = scmp.ne.s32.totalorder %s58, %s61
      %p70 = scmp.eq.s32.totalorder %s27, 1
      %p71 = por %p69, %p70
      %p72 = scmp.ne.s32.totalorder %s61, %s62
      %p73 = scmp.eq.s32.totalorder %s27, 0
      %p74 = por %p72, %p73
      %p75 = scmp.ne.s32.totalorder %s61, %s62
      %p76 = scmp.eq.s32.totalorder %s28, 1
      %p77 = por %p75, %p76
      %p79 = scmp.ne.s32.totalorder %s62, %s78
      %p80 = scmp.eq.s32.totalorder %s28, 0
      %p81 = por %p79, %p80
      %s83 = sadd.s32 %s82, 1
      %p86 = scmp.eq.s32.totalorder %s22, 1
      %p87 = scmp.ne.s32.totalorder %s82, %s84
      %p88 = scmp.eq.s32.totalorder %s22, 0
      %p89 = por %p87, %p88
      %p90 = scmp.ne.s32.totalorder %s82, %s84
      %p91 = scmp.eq.s32.totalorder %s27, 1
      %p92 = por %p90, %p91
      %p93 = scmp.ne.s32.totalorder %s84, %s85
      %p94 = scmp.eq.s32.totalorder %s27, 0
      %p95 = por %p93, %p94
      %p96 = scmp.ne.s32.totalorder %s84, %s85
      %p97 = scmp.eq.s32.totalorder %s28, 1
      %p98 = por %p96, %p97
      %p100 = scmp.ne.s32.totalorder %s85, %s99
      %p101 = scmp.eq.s32.totalorder %s28, 0
      %p102 = por %p100, %p101
      %s104 = sadd.s32 %s103, 1
      %p107 = scmp.eq.s32.totalorder %s22, 1
      %p108 = scmp.ne.s32.totalorder %s103, %s105
      %p109 = scmp.eq.s32.totalorder %s22, 0
      %p110 = por %p108, %p109
      %p111 = scmp.ne.s32.totalorder %s103, %s105
      %p112 = scmp.eq.s32.totalorder %s27, 1
      %p113 = por %p111, %p112
      %p114 = scmp.ne.s32.totalorder %s105, %s106
      %p115 = scmp.eq.s32.totalorder %s27, 0
      %p116 = por %p114, %p115
      %p117 = scmp.ne.s32.totalorder %s105, %s106
      %p118 = scmp.eq.s32.totalorder %s28, 1
      %p119 = por %p117, %p118
      %p121 = scmp.ne.s32.totalorder %s106, %s120
      %p122 = scmp.eq.s32.totalorder %s28, 0
      %p123 = por %p121, %p122
      %s125 = sadd.s32 %s124, 1
      %p128 = scmp.eq.s32.totalorder %s22, 1
      %p129 = scmp.ne.s32.totalorder %s124, %s126
      %p130 = scmp.eq.s32.totalorder %s22, 0
      %p131 = por %p129, %p130
      %p132 = scmp.ne.s32.totalorder %s124, %s126
      %p133 = scmp.eq.s32.totalorder %s27, 1
      %p134 = por %p132, %p133
      %p135 = scmp.ne.s32.totalorder %s126, %s127
      %p136 = scmp.eq.s32.totalorder %s27, 0
      %p137 = por %p135, %p136
      %p138 = scmp.ne.s32.totalorder %s126, %s127
      %p139 = scmp.eq.s32.totalorder %s28, 1
      %p140 = por %p138, %p139
      %p142 = scmp.ne.s32.totalorder %s127, %s141
      %p143 = scmp.eq.s32.totalorder %s28, 0
      %p144 = por %p142, %p143
      %s146 = sadd.s32 %s145, 1
      %p149 = scmp.eq.s32.totalorder %s22, 1
      %p150 = scmp.ne.s32.totalorder %s145, %s147
      %p151 = scmp.eq.s32.totalorder %s22, 0
      %p152 = por %p150, %p151
      %p153 = scmp.ne.s32.totalorder %s145, %s147
      %p154 = scmp.eq.s32.totalorder %s27, 1
      %p155 = por %p153, %p154
      %p156 = scmp.ne.s32.totalorder %s147, %s148
      %p157 = scmp.eq.s32.totalorder %s27, 0
      %p158 = por %p156, %p157
      %p159 = scmp.ne.s32.totalorder %s147, %s148
      %p160 = scmp.eq.s32.totalorder %s28, 1
      %p161 = por %p159, %p160
      %p163 = scmp.ne.s32.totalorder %s148, %s162
      %p164 = scmp.eq.s32.totalorder %s28, 0
      %p165 = por %p163, %p164
      %s167 = sadd.s32 %s166, 1
      %p170 = scmp.eq.s32.totalorder %s22, 1
      %p171 = scmp.ne.s32.totalorder %s166, %s168
      %p172 = scmp.eq.s32.totalorder %s22, 0
      %p173 = por %p171, %p172
      %p174 = scmp.ne.s32.totalorder %s166, %s168
      %p175 = scmp.eq.s32.totalorder %s27, 1
      %p176 = por %p174, %p175
      %p177 = scmp.ne.s32.totalorder %s168, %s169
      %p178 = scmp.eq.s32.totalorder %s27, 0
      %p179 = por %p177, %p178
      %p180 = scmp.ne.s32.totalorder %s168, %s169
      %p181 = scmp.eq.s32.totalorder %s28, 1
      %p182 = por %p180, %p181
      %p184 = scmp.ne.s32.totalorder %s169, %s183
      %p185 = scmp.eq.s32.totalorder %s28, 0
      %p186 = por %p184, %p185
      %s187 = ssub.s32 %s22, %s29
      %p188 = scmp.eq.s32.totalorder %s187, 0
      %s190 = sadd.s32 %s189, 1
      %s191 = scalar_select %p188, %s189, %s190
      %p194 = pneg %p188
      %p195 = scmp.eq.s32.totalorder %s22, 1
      %p196 = por %p194, %p195
      %p197 = scmp.ne.s32.totalorder %s189, %s192
      %p198 = scmp.eq.s32.totalorder %s22, 0
      %p199 = por %p197, %p198
      %p200 = scmp.ne.s32.totalorder %s189, %s192
      %p201 = scmp.eq.s32.totalorder %s27, 1
      %p202 = por %p200, %p201
      %p203 = scmp.ne.s32.totalorder %s192, %s193
      %p204 = scmp.eq.s32.totalorder %s27, 0
      %p205 = por %p203, %p204
      %p206 = scmp.ne.s32.totalorder %s192, %s193
      %p207 = scmp.eq.s32.totalorder %s28, 1
      %p208 = por %p206, %p207
      %p210 = scmp.ne.s32.totalorder %s193, %s209
      %p211 = scmp.eq.s32.totalorder %s28, 0
      %p212 = por %p210, %p211
      %p213 = scmp.le.s32.totalorder 1, %s22
      %p214 = scmp.lt.s32.totalorder %s22, 3
      %p215 = pnand %p213, %p214
      %p216 = pneg %p215
      // Predicated region
      $region9: #{tpu_custom_call.1} parent=5 // pred_check
        _
      $region10: #{tpu_custom_call.1} parent=5 // pred_check_branch
        %218 = sbr.rel (%p215) target = $region12
      $region11: #{tpu_custom_call.1} parent=5 // pred_region
        %s219 = ssub.s32 %s22, 1
        // Predicated region
        $region13: #{tpu_custom_call.1} parent=11 // pred_check
          %p220 = pneg %p95
        $region14: #{tpu_custom_call.1} parent=11 // pred_check_branch
          %222 = sbr.rel (%p220) target = $region16
        $region15: #{tpu_custom_call.1} parent=11 // pred_region
          _
        $region16: #{tpu_custom_call.1} parent=11 // pred_fallthru
          _
        // Predicated region
        $region17: #{tpu_custom_call.1} parent=11 // pred_check
          %p223 = pneg %p116
        $region18: #{tpu_custom_call.1} parent=11 // pred_check_branch
          %225 = sbr.rel (%p223) target = $region20
        $region19: #{tpu_custom_call.1} parent=11 // pred_region
          %s227 = ssub.s32 1280, 1280
          %228 = vsyncadd [#allocation7], %s227
          %s229 = sshll.u32 [#allocation8], 4
          %s230 = int_to_ptr.vmem [resolvable:$true] %s229
          %235 = dma.hbm_to_vmem [thread:$0]  %s3, 1280, %s230, [#allocation7], 640, 640, 40
        $region20: #{tpu_custom_call.1} parent=11 // pred_fallthru
          _
        // Predicated region
        $region21: #{tpu_custom_call.1} parent=11 // pred_check
          %p236 = pneg %p137
        $region22: #{tpu_custom_call.1} parent=11 // pred_check_branch
          %238 = sbr.rel (%p236) target = $region24
        $region23: #{tpu_custom_call.1} parent=11 // pred_region
          _
        $region24: #{tpu_custom_call.1} parent=11 // pred_fallthru
          _
        // Predicated region
        $region25: #{tpu_custom_call.1} parent=11 // pred_check
          %p239 = pneg %p158
        $region26: #{tpu_custom_call.1} parent=11 // pred_check_branch
          %241 = sbr.rel (%p239) target = $region28
        $region27: #{tpu_custom_call.1} parent=11 // pred_region
          _
        $region28: #{tpu_custom_call.1} parent=11 // pred_fallthru
          _
        // Predicated region
        $region29: #{tpu_custom_call.1} parent=11 // pred_check
          %p242 = pneg %p179
        $region30: #{tpu_custom_call.1} parent=11 // pred_check_branch
          %244 = sbr.rel (%p242) target = $region32
        $region31: #{tpu_custom_call.1} parent=11 // pred_region
          _
        $region32: #{tpu_custom_call.1} parent=11 // pred_fallthru
          _
      $region12: #{tpu_custom_call.1} parent=5 // pred_fallthru
        _
      %p245 = scmp.lt.s32.totalorder %s22, 2
      // Predicated region
      $region33: #{tpu_custom_call.1} parent=5 // pred_check
        %p246 = pneg %p245
      $region34: #{tpu_custom_call.1} parent=5 // pred_check_branch
        %248 = sbr.rel (%p246) target = $region36
      $region35: #{tpu_custom_call.1} parent=5 // pred_region
        // Predicated region
        $region37: #{tpu_custom_call.1} parent=35 // pred_check
          %p249 = pneg %p42
        $region38: #{tpu_custom_call.1} parent=35 // pred_check_branch
          %251 = sbr.rel (%p249) target = $region40
        $region39: #{tpu_custom_call.1} parent=35 // pred_region
          %s252 = sand.u32 %s32, 1
          %s253 = scalar_lea.sflag [#allocation4], %s252
          %s254 = sand.u32 %s32, 1
          %s255 = smul.addr %s254, 64
          %s256 = scalar_lea.vmem [#allocation3], %s255
          %s258 = ssub.s32 1024, 1024
          %259 = vsyncadd %s253, %s258
          %s260 = smul.addr %s22, 8
          %s261 = smul.addr %s260, 128
          %s262 = scalar_lea.hbm %s0, %s261
          %s263 = sshll.u32 %s256, 4
          %s264 = int_to_ptr.vmem [resolvable:$true] %s263
          %269 = dma.hbm_to_vmem [thread:$0]  %s262, 1024, %s264, %s253, 512, 512, 32
        $region40: #{tpu_custom_call.1} parent=35 // pred_fallthru
          _
        // Predicated region
        $region41: #{tpu_custom_call.1} parent=35 // pred_check
          %p270 = pneg %p68
        $region42: #{tpu_custom_call.1} parent=35 // pred_check_branch
          %272 = sbr.rel (%p270) target = $region44
        $region43: #{tpu_custom_call.1} parent=35 // pred_region
          %s273 = sand.u32 %s22, 1
          %s274 = scalar_lea.sflag [#allocation7], %s273
          %s275 = sand.u32 %s58, 1
          %s276 = smul.addr %s275, 2
          %s277 = scalar_lea.vmem [#allocation6], %s276
          %s279 = ssub.s32 32, 32
          %280 = vsyncadd %s274, %s279
          %s281 = smul.addr %s22, 2
          %s282 = smul.addr %s281, 16
          %s283 = scalar_lea.hbm %s1, %s282
          %s285 = sshll.u32 %s277, 4
          %s286 = int_to_ptr.vmem [resolvable:$true] %s285
          %288 = dma.hbm_to_vmem [thread:$0]  %s283, 32, %s286, %s274
        $region44: #{tpu_custom_call.1} parent=35 // pred_fallthru
          _
      $region36: #{tpu_custom_call.1} parent=5 // pred_fallthru
        _
      %p289 = scmp.le.s32.totalorder 1, %s22
      %p290 = scmp.lt.s32.totalorder %s22, 3
      %p291 = pnand %p289, %p290
      %p292 = pneg %p291
      // Predicated region
      $region45: #{tpu_custom_call.1} parent=5 // pred_check
        _
      $region46: #{tpu_custom_call.1} parent=5 // pred_check_branch
        %294 = sbr.rel (%p291) target = $region48
      $region47: #{tpu_custom_call.1} parent=5 // pred_region
        %s295 = ssub.s32 %s22, 1
        %s296 = sand.u32 %s35, 1
        %s297 = scalar_lea.sflag [#allocation4], %s296
        %s298 = sand.u32 %s35, 1
        %s299 = smul.addr %s298, 64
        %s300 = scalar_lea.vmem [#allocation3], %s299
        // Predicated region
        $region49: #{tpu_custom_call.1} parent=47 // pred_check
          %p301 = pneg %p48
        $region50: #{tpu_custom_call.1} parent=47 // pred_check_branch
          %303 = sbr.rel (%p301) target = $region52
        $region51: #{tpu_custom_call.1} parent=47 // pred_region
          %304 = dma.done %s297, 1024
        $region52: #{tpu_custom_call.1} parent=47 // pred_fallthru
          _
        %s305 = sand.u32 %s27, 1
        %s306 = scalar_lea.sflag [#allocation7], %s305
        %s307 = sand.u32 %s61, 1
        %s308 = smul.addr %s307, 2
        %s309 = scalar_lea.vmem [#allocation6], %s308
        // Predicated region
        $region53: #{tpu_custom_call.1} parent=47 // pred_check
          %p310 = pneg %p74
        $region54: #{tpu_custom_call.1} parent=47 // pred_check_branch
          %312 = sbr.rel (%p310) target = $region56
        $region55: #{tpu_custom_call.1} parent=47 // pred_region
          %313 = dma.done %s306, 32
        $region56: #{tpu_custom_call.1} parent=47 // pred_fallthru
          _
        // Predicated region
        $region57: #{tpu_custom_call.1} parent=47 // pred_check
          %p314 = pneg %p116
        $region58: #{tpu_custom_call.1} parent=47 // pred_check_branch
          %316 = sbr.rel (%p314) target = $region60
        $region59: #{tpu_custom_call.1} parent=47 // pred_region
          %317 = dma.done [#allocation7], 1280
        $region60: #{tpu_custom_call.1} parent=47 // pred_fallthru
          _
        %s318 = sand.u32 %s35, 1
        %s319 = scalar_lea.sflag [#allocation4], %s318
        %s320 = sand.u32 %s35, 1
        %s321 = smul.addr %s320, 64
        %s322 = scalar_lea.vmem [#allocation3], %s321
        %p323 = pneg %p48
        %p324 = pneg %p45
        %s325 = sand.u32 %s27, 1
        %s326 = scalar_lea.sflag [#allocation7], %s325
        %s327 = sand.u32 %s61, 1
        %s328 = smul.addr %s327, 2
        %s329 = scalar_lea.vmem [#allocation6], %s328
        %p330 = pneg %p74
        %p331 = pneg %p71
        %p332 = pneg %p95
        %p333 = pneg %p92
        %p334 = pneg %p116
        %p335 = pneg %p113
        %p336 = pneg %p137
        %p337 = pneg %p134
        %p338 = pneg %p158
        %p339 = pneg %p155
        %p340 = pneg %p179
        %p341 = pneg %p176
        %p342 = pneg %p205
        %p343 = pneg %p202
        %s344 = sand.u32 %s192, 1
        %s345 = scalar_lea.sflag [#allocation5], %s344
        %s346 = sand.u32 %s192, 1
        %s347 = smul.addr %s346, 32
        %s348 = scalar_lea.vmem [#allocation9], %s347
        %v350 = vld [vmem:[%s2] ss:$8 sm:$0x3]
        %s351 = scalar_lea.vmem %s2, 1
        %v352 = vld [vmem:[%s351] ss:$8 sm:$0x3]
        %s353 = scalar_lea.vmem %s2, 2
        %v354 = vld [vmem:[%s353] ss:$8 sm:$0x3]
        %s355 = scalar_lea.vmem %s2, 3
        %v356 = vld [vmem:[%s355] ss:$8 sm:$0x3]
        %s357 = scalar_lea.vmem %s2, 4
        %v358 = vld [vmem:[%s357] ss:$8 sm:$0x3]
        %s359 = scalar_lea.vmem %s2, 5
        %v360 = vld [vmem:[%s359] ss:$8 sm:$0x3]
        %s361 = scalar_lea.vmem %s2, 6
        %v362 = vld [vmem:[%s361] ss:$8 sm:$0x3]
        %s363 = scalar_lea.vmem %s2, 7
        %v364 = vld [vmem:[%s363] ss:$8 sm:$0x3]
        %v365 = vld [vmem:[%s300] sm:$0xff]
        %v366 = vld [vmem:[%s300 + $0x8] sm:$0xff]
        %v367 = vld [vmem:[%s300 + $0x10] sm:$0xff]
        %v368 = vld [vmem:[%s300 + $0x20] sm:$0xff]
        %v369 = vld [vmem:[%s300 + $0x28] sm:$0xff]
        %v370 = vld [vmem:[%s300 + $0x30] sm:$0xff]
        %v372 = vlaneseq
        %v373 = vshrl.u32 %v372, 7
        %v374 = vsub.s32 0, %v373
        %v375 = vrot.slane %v352, %v374
        %v376 = vlaneseq
        %v377 = vshrl.u32 %v376, 7
        %v378 = vsub.s32 1, %v377
        %v379 = vrot.slane %v352, %v378
        %380 = vrot.lane.b32.xlu0 %v375, 61
        %v381 = vpop.permute.xlu0 %380
        %382 = vrot.lane.b32.xlu0 %v379, 61
        %v383 = vpop.permute.xlu0 %382
        %vm384 = vcmask 498688
        %v385 = vsel %vm384, %v381, %v383
        %v389 = vmul.f32 %v365, %v381
        %v390 = vmul.f32 %v366, %v385
        %v391 = vmul.f32 %v367, %v383
        %v392 = vmul.f32 %v368, %v381
        %v393 = vmul.f32 %v369, %v385
        %v394 = vmul.f32 %v370, %v383
        %v395 = vpack.c.bf16 %v392, %v389
        %v396 = vpack.c.bf16 %v393, %v390
        %v397 = vpack.c.bf16 %v394, %v391
        %401 = vrot.lane.b32.xlu0 %v395, 67
        %v402 = vpop.permute.xlu0 %401
        %403 = vrot.lane.b32.xlu0 %v396, 67
        %v404 = vpop.permute.xlu0 %403
        %405 = vrot.lane.b32.xlu0 %v397, 67
        %v406 = vpop.permute.xlu0 %405
        %vm407 = vcmask 547840
        %v408 = vsel %vm407, %v402, %v404
        %v409 = vsel %vm407, %v404, %v406
        %412 = vst [vmem:[#allocation2] sm:$0xff] %v408
        %413 = vst [vmem:[#allocation2 + $0x8] sm:$0xff] %v409
        %v414 = vld [vmem:[%s300] sm:$0xff]
        %v415 = vld [vmem:[%s300 + $0x8] sm:$0xff]
        %v416 = vld [vmem:[%s300 + $0x10] sm:$0xff]
        %v417 = vld [vmem:[%s300 + $0x20] sm:$0xff]
        %v418 = vld [vmem:[%s300 + $0x28] sm:$0xff]
        %v419 = vld [vmem:[%s300 + $0x30] sm:$0xff]
        %v421 = vlaneseq
        %v422 = vshrl.u32 %v421, 7
        %v423 = vsub.s32 0, %v422
        %v424 = vrot.slane %v354, %v423
        %v425 = vlaneseq
        %v426 = vshrl.u32 %v425, 7
        %v427 = vsub.s32 1, %v426
        %v428 = vrot.slane %v354, %v427
        %429 = vrot.lane.b32.xlu0 %v424, 62
        %v430 = vpop.permute.xlu0 %429
        %431 = vrot.lane.b32.xlu0 %v428, 62
        %v432 = vpop.permute.xlu0 %431
        %vm433 = vcmask 506880
        %v434 = vsel %vm433, %v430, %v432
        %v438 = vmul.f32 %v414, %v430
        %v439 = vmul.f32 %v415, %v434
        %v440 = vmul.f32 %v416, %v432
        %v441 = vmul.f32 %v417, %v430
        %v442 = vmul.f32 %v418, %v434
        %v443 = vmul.f32 %v419, %v432
        %v444 = vpack.c.bf16 %v441, %v438
        %v445 = vpack.c.bf16 %v442, %v439
        %v446 = vpack.c.bf16 %v443, %v440
        %450 = vrot.lane.b32.xlu0 %v444, 66
        %v451 = vpop.permute.xlu0 %450
        %452 = vrot.lane.b32.xlu0 %v445, 66
        %v453 = vpop.permute.xlu0 %452
        %454 = vrot.lane.b32.xlu0 %v446, 66
        %v455 = vpop.permute.xlu0 %454
        %vm456 = vcmask 539648
        %v457 = vsel %vm456, %v451, %v453
        %v458 = vsel %vm456, %v453, %v455
        %461 = vst [vmem:[#allocation2 + $0x10] sm:$0xff] %v457
        %462 = vst [vmem:[#allocation2 + $0x18] sm:$0xff] %v458
        %v463 = vld [vmem:[%s300] sm:$0xff]
        %v464 = vld [vmem:[%s300 + $0x8] sm:$0xff]
        %v465 = vld [vmem:[%s300 + $0x10] sm:$0xff]
        %v466 = vld [vmem:[%s300 + $0x20] sm:$0xff]
        %v467 = vld [vmem:[%s300 + $0x28] sm:$0xff]
        %v468 = vld [vmem:[%s300 + $0x30] sm:$0xff]
        %v470 = vlaneseq
        %v471 = vshrl.u32 %v470, 7
        %v472 = vsub.s32 0, %v471
        %v473 = vrot.slane %v356, %v472
        %v474 = vlaneseq
        %v475 = vshrl.u32 %v474, 7
        %v476 = vsub.s32 1, %v475
        %v477 = vrot.slane %v356, %v476
        %478 = vrot.lane.b32.xlu0 %v473, 63
        %v479 = vpop.permute.xlu0 %478
        %480 = vrot.lane.b32.xlu0 %v477, 63
        %v481 = vpop.permute.xlu0 %480
        %vm482 = vcmask 515072
        %v483 = vsel %vm482, %v479, %v481
        %v487 = vmul.f32 %v463, %v479
        %v488 = vmul.f32 %v464, %v483
        %v489 = vmul.f32 %v465, %v481
        %v490 = vmul.f32 %v466, %v479
        %v491 = vmul.f32 %v467, %v483
        %v492 = vmul.f32 %v468, %v481
        %v493 = vpack.c.bf16 %v490, %v487
        %v494 = vpack.c.bf16 %v491, %v488
        %v495 = vpack.c.bf16 %v492, %v489
        %499 = vrot.lane.b32.xlu0 %v493, 65
        %v500 = vpop.permute.xlu0 %499
        %501 = vrot.lane.b32.xlu0 %v494, 65
        %v502 = vpop.permute.xlu0 %501
        %503 = vrot.lane.b32.xlu0 %v495, 65
        %v504 = vpop.permute.xlu0 %503
        %vm505 = vcmask 531456
        %v506 = vsel %vm505, %v500, %v502
        %v507 = vsel %vm505, %v502, %v504
        %510 = vst [vmem:[#allocation2 + $0x20] sm:$0xff] %v506
        %511 = vst [vmem:[#allocation2 + $0x28] sm:$0xff] %v507
        %v512 = vld [vmem:[%s300] sm:$0xff]
        %v513 = vld [vmem:[%s300 + $0x8] sm:$0xff]
        %v514 = vld [vmem:[%s300 + $0x10] sm:$0xff]
        %v515 = vld [vmem:[%s300 + $0x20] sm:$0xff]
        %v516 = vld [vmem:[%s300 + $0x28] sm:$0xff]
        %v517 = vld [vmem:[%s300 + $0x30] sm:$0xff]
        %v518 = vpack.c.bf16 %v515, %v512
        %v519 = vpack.c.bf16 %v516, %v513
        %v520 = vpack.c.bf16 %v517, %v514
        %524 = vrot.lane.b32.xlu0 %v518, 64
        %v525 = vpop.permute.xlu0 %524
        %526 = vrot.lane.b32.xlu0 %v519, 64
        %v527 = vpop.permute.xlu0 %526
        %528 = vrot.lane.b32.xlu0 %v520, 64
        %v529 = vpop.permute.xlu0 %528
        %vm530 = vcmask 523264
        %v531 = vsel %vm530, %v525, %v527
        %v532 = vsel %vm530, %v527, %v529
        %535 = vst [vmem:[#allocation2 + $0x30] sm:$0xff] %v531
        %536 = vst [vmem:[#allocation2 + $0x38] sm:$0xff] %v532
        %v537 = vld [vmem:[%s300] sm:$0xff]
        %v538 = vld [vmem:[%s300 + $0x8] sm:$0xff]
        %v539 = vld [vmem:[%s300 + $0x10] sm:$0xff]
        %v540 = vld [vmem:[%s300 + $0x20] sm:$0xff]
        %v541 = vld [vmem:[%s300 + $0x28] sm:$0xff]
        %v542 = vld [vmem:[%s300 + $0x30] sm:$0xff]
        %v544 = vlaneseq
        %v545 = vshrl.u32 %v544, 7
        %v546 = vsub.s32 0, %v545
        %v547 = vrot.slane %v358, %v546
        %v548 = vlaneseq
        %v549 = vshrl.u32 %v548, 7
        %v550 = vsub.s32 1, %v549
        %v551 = vrot.slane %v358, %v550
        %552 = vrot.lane.b32.xlu0 %v547, 65
        %v553 = vpop.permute.xlu0 %552
        %554 = vrot.lane.b32.xlu0 %v551, 65
        %v555 = vpop.permute.xlu0 %554
        %vm556 = vcmask 531456
        %v557 = vsel %vm556, %v553, %v555
        %v561 = vmul.f32 %v537, %v553
        %v562 = vmul.f32 %v538, %v557
        %v563 = vmul.f32 %v539, %v555
        %v564 = vmul.f32 %v540, %v553
        %v565 = vmul.f32 %v541, %v557
        %v566 = vmul.f32 %v542, %v555
        %v567 = vpack.c.bf16 %v564, %v561
        %v568 = vpack.c.bf16 %v565, %v562
        %v569 = vpack.c.bf16 %v566, %v563
        %573 = vrot.lane.b32.xlu0 %v567, 63
        %v574 = vpop.permute.xlu0 %573
        %575 = vrot.lane.b32.xlu0 %v568, 63
        %v576 = vpop.permute.xlu0 %575
        %577 = vrot.lane.b32.xlu0 %v569, 63
        %v578 = vpop.permute.xlu0 %577
        %vm579 = vcmask 515072
        %v580 = vsel %vm579, %v574, %v576
        %v581 = vsel %vm579, %v576, %v578
        %584 = vst [vmem:[#allocation2 + $0x40] sm:$0xff] %v580
        %585 = vst [vmem:[#allocation2 + $0x48] sm:$0xff] %v581
        %v586 = vld [vmem:[%s300] sm:$0xff]
        %v587 = vld [vmem:[%s300 + $0x8] sm:$0xff]
        %v588 = vld [vmem:[%s300 + $0x10] sm:$0xff]
        %v589 = vld [vmem:[%s300 + $0x20] sm:$0xff]
        %v590 = vld [vmem:[%s300 + $0x28] sm:$0xff]
        %v591 = vld [vmem:[%s300 + $0x30] sm:$0xff]
        %v593 = vlaneseq
        %v594 = vshrl.u32 %v593, 7
        %v595 = vsub.s32 0, %v594
        %v596 = vrot.slane %v360, %v595
        %v597 = vlaneseq
        %v598 = vshrl.u32 %v597, 7
        %v599 = vsub.s32 1, %v598
        %v600 = vrot.slane %v360, %v599
        %601 = vrot.lane.b32.xlu0 %v596, 66
        %v602 = vpop.permute.xlu0 %601
        %603 = vrot.lane.b32.xlu0 %v600, 66
        %v604 = vpop.permute.xlu0 %603
        %vm605 = vcmask 539648
        %v606 = vsel %vm605, %v602, %v604
        %v610 = vmul.f32 %v586, %v602
        %v611 = vmul.f32 %v587, %v606
        %v612 = vmul.f32 %v588, %v604
        %v613 = vmul.f32 %v589, %v602
        %v614 = vmul.f32 %v590, %v606
        %v615 = vmul.f32 %v591, %v604
        %v616 = vpack.c.bf16 %v613, %v610
        %v617 = vpack.c.bf16 %v614, %v611
        %v618 = vpack.c.bf16 %v615, %v612
        %622 = vrot.lane.b32.xlu0 %v616, 62
        %v623 = vpop.permute.xlu0 %622
        %624 = vrot.lane.b32.xlu0 %v617, 62
        %v625 = vpop.permute.xlu0 %624
        %626 = vrot.lane.b32.xlu0 %v618, 62
        %v627 = vpop.permute.xlu0 %626
        %vm628 = vcmask 506880
        %v629 = vsel %vm628, %v623, %v625
        %v630 = vsel %vm628, %v625, %v627
        %633 = vst [vmem:[#allocation2 + $0x50] sm:$0xff] %v629
        %634 = vst [vmem:[#allocation2 + $0x58] sm:$0xff] %v630
        %v635 = vld [vmem:[%s300] sm:$0xff]
        %v636 = vld [vmem:[%s300 + $0x8] sm:$0xff]
        %v637 = vld [vmem:[%s300 + $0x10] sm:$0xff]
        %v638 = vld [vmem:[%s300 + $0x20] sm:$0xff]
        %v639 = vld [vmem:[%s300 + $0x28] sm:$0xff]
        %v640 = vld [vmem:[%s300 + $0x30] sm:$0xff]
        %v642 = vlaneseq
        %v643 = vshrl.u32 %v642, 7
        %v644 = vsub.s32 0, %v643
        %v645 = vrot.slane %v362, %v644
        %v646 = vlaneseq
        %v647 = vshrl.u32 %v646, 7
        %v648 = vsub.s32 1, %v647
        %v649 = vrot.slane %v362, %v648
        %650 = vrot.lane.b32.xlu0 %v645, 67
        %v651 = vpop.permute.xlu0 %650
        %652 = vrot.lane.b32.xlu0 %v649, 67
        %v653 = vpop.permute.xlu0 %652
        %vm654 = vcmask 547840
        %v655 = vsel %vm654, %v651, %v653
        %v659 = vmul.f32 %v635, %v651
        %v660 = vmul.f32 %v636, %v655
        %v661 = vmul.f32 %v637, %v653
        %v662 = vmul.f32 %v638, %v651
        %v663 = vmul.f32 %v639, %v655
        %v664 = vmul.f32 %v640, %v653
        %v665 = vpack.c.bf16 %v662, %v659
        %v666 = vpack.c.bf16 %v663, %v660
        %v667 = vpack.c.bf16 %v664, %v661
        %671 = vrot.lane.b32.xlu0 %v665, 61
        %v672 = vpop.permute.xlu0 %671
        %673 = vrot.lane.b32.xlu0 %v666, 61
        %v674 = vpop.permute.xlu0 %673
        %675 = vrot.lane.b32.xlu0 %v667, 61
        %v676 = vpop.permute.xlu0 %675
        %vm677 = vcmask 498688
        %v678 = vsel %vm677, %v672, %v674
        %v679 = vsel %vm677, %v674, %v676
        %682 = vst [vmem:[#allocation2 + $0x60] sm:$0xff] %v678
        %683 = vst [vmem:[#allocation2 + $0x68] sm:$0xff] %v679
        %v684 = vld [vmem:[%s300] sm:$0xff]
        %v685 = vld [vmem:[%s300 + $0x8] sm:$0xff]
        %v686 = vld [vmem:[%s300 + $0x10] sm:$0xff]
        %v687 = vld [vmem:[%s300 + $0x20] sm:$0xff]
        %v688 = vld [vmem:[%s300 + $0x28] sm:$0xff]
        %v689 = vld [vmem:[%s300 + $0x30] sm:$0xff]
        %690 = vrot.lane.b32.xlu0 %v375, 77
        %v691 = vpop.permute.xlu0 %690
        %692 = vrot.lane.b32.xlu0 %v379, 77
        %v693 = vpop.permute.xlu0 %692
        %vm694 = vcmask 629760
        %v695 = vsel %vm694, %v691, %v693
        %v699 = vmul.f32 %v684, %v691
        %v700 = vmul.f32 %v685, %v695
        %v701 = vmul.f32 %v686, %v693
        %v702 = vmul.f32 %v687, %v691
        %v703 = vmul.f32 %v688, %v695
        %v704 = vmul.f32 %v689, %v693
        %v705 = vpack.c.bf16 %v702, %v699
        %v706 = vpack.c.bf16 %v703, %v700
        %v707 = vpack.c.bf16 %v704, %v701
        %711 = vrot.lane.b32.xlu0 %v705, 51
        %v712 = vpop.permute.xlu0 %711
        %713 = vrot.lane.b32.xlu0 %v706, 51
        %v714 = vpop.permute.xlu0 %713
        %715 = vrot.lane.b32.xlu0 %v707, 51
        %v716 = vpop.permute.xlu0 %715
        %vm717 = vcmask 416768
        %v718 = vsel %vm717, %v712, %v714
        %v719 = vsel %vm717, %v714, %v716
        %722 = vst [vmem:[#allocation2 + $0x70] sm:$0xff] %v718
        %723 = vst [vmem:[#allocation2 + $0x78] sm:$0xff] %v719
        %v724 = vld [vmem:[%s300] sm:$0xff]
        %v725 = vld [vmem:[%s300 + $0x8] sm:$0xff]
        %v726 = vld [vmem:[%s300 + $0x10] sm:$0xff]
        %v727 = vld [vmem:[%s300 + $0x20] sm:$0xff]
        %v728 = vld [vmem:[%s300 + $0x28] sm:$0xff]
        %v729 = vld [vmem:[%s300 + $0x30] sm:$0xff]
        %730 = vrot.lane.b32.xlu0 %v424, 78
        %v731 = vpop.permute.xlu0 %730
        %732 = vrot.lane.b32.xlu0 %v428, 78
        %v733 = vpop.permute.xlu0 %732
        %vm734 = vcmask 637952
        %v735 = vsel %vm734, %v731, %v733
        %v739 = vmul.f32 %v724, %v731
        %v740 = vmul.f32 %v725, %v735
        %v741 = vmul.f32 %v726, %v733
        %v742 = vmul.f32 %v727, %v731
        %v743 = vmul.f32 %v728, %v735
        %v744 = vmul.f32 %v729, %v733
        %v745 = vpack.c.bf16 %v742, %v739
        %v746 = vpack.c.bf16 %v743, %v740
        %v747 = vpack.c.bf16 %v744, %v741
        %751 = vrot.lane.b32.xlu0 %v745, 50
        %v752 = vpop.permute.xlu0 %751
        %753 = vrot.lane.b32.xlu0 %v746, 50
        %v754 = vpop.permute.xlu0 %753
        %755 = vrot.lane.b32.xlu0 %v747, 50
        %v756 = vpop.permute.xlu0 %755
        %vm757 = vcmask 408576
        %v758 = vsel %vm757, %v752, %v754
        %v759 = vsel %vm757, %v754, %v756
        %762 = vst [vmem:[#allocation2 + $0x80] sm:$0xff] %v758
        %763 = vst [vmem:[#allocation2 + $0x88] sm:$0xff] %v759
        %v764 = vld [vmem:[%s300] sm:$0xff]
        %v765 = vld [vmem:[%s300 + $0x8] sm:$0xff]
        %v766 = vld [vmem:[%s300 + $0x10] sm:$0xff]
        %v767 = vld [vmem:[%s300 + $0x20] sm:$0xff]
        %v768 = vld [vmem:[%s300 + $0x28] sm:$0xff]
        %v769 = vld [vmem:[%s300 + $0x30] sm:$0xff]
        %770 = vrot.lane.b32.xlu0 %v473, 79
        %v771 = vpop.permute.xlu0 %770
        %772 = vrot.lane.b32.xlu0 %v477, 79
        %v773 = vpop.permute.xlu0 %772
        %vm774 = vcmask 646144
        %v775 = vsel %vm774, %v771, %v773
        %v779 = vmul.f32 %v764, %v771
        %v780 = vmul.f32 %v765, %v775
        %v781 = vmul.f32 %v766, %v773
        %v782 = vmul.f32 %v767, %v771
        %v783 = vmul.f32 %v768, %v775
        %v784 = vmul.f32 %v769, %v773
        %v785 = vpack.c.bf16 %v782, %v779
        %v786 = vpack.c.bf16 %v783, %v780
        %v787 = vpack.c.bf16 %v784, %v781
        %791 = vrot.lane.b32.xlu0 %v785, 49
        %v792 = vpop.permute.xlu0 %791
        %793 = vrot.lane.b32.xlu0 %v786, 49
        %v794 = vpop.permute.xlu0 %793
        %795 = vrot.lane.b32.xlu0 %v787, 49
        %v796 = vpop.permute.xlu0 %795
        %vm797 = vcmask 400384
        %v798 = vsel %vm797, %v792, %v794
        %v799 = vsel %vm797, %v794, %v796
        %802 = vst [vmem:[#allocation2 + $0x90] sm:$0xff] %v798
        %803 = vst [vmem:[#allocation2 + $0x98] sm:$0xff] %v799
        %v804 = vld [vmem:[%s300] sm:$0xff]
        %v805 = vld [vmem:[%s300 + $0x8] sm:$0xff]
        %v806 = vld [vmem:[%s300 + $0x10] sm:$0xff]
        %v807 = vld [vmem:[%s300 + $0x20] sm:$0xff]
        %v808 = vld [vmem:[%s300 + $0x28] sm:$0xff]
        %v809 = vld [vmem:[%s300 + $0x30] sm:$0xff]
        %v810 = vpack.c.bf16 %v807, %v804
        %v811 = vpack.c.bf16 %v808, %v805
        %v812 = vpack.c.bf16 %v809, %v806
        %816 = vrot.lane.b32.xlu0 %v810, 48
        %v817 = vpop.permute.xlu0 %816
        %818 = vrot.lane.b32.xlu0 %v811, 48
        %v819 = vpop.permute.xlu0 %818
        %820 = vrot.lane.b32.xlu0 %v812, 48
        %v821 = vpop.permute.xlu0 %820
        %vm822 = vcmask 392192
        %v823 = vsel %vm822, %v817, %v819
        %v824 = vsel %vm822, %v819, %v821
        %827 = vst [vmem:[#allocation2 + $0xa0] sm:$0xff] %v823
        %828 = vst [vmem:[#allocation2 + $0xa8] sm:$0xff] %v824
        %v829 = vld [vmem:[%s300] sm:$0xff]
        %v830 = vld [vmem:[%s300 + $0x8] sm:$0xff]
        %v831 = vld [vmem:[%s300 + $0x10] sm:$0xff]
        %v832 = vld [vmem:[%s300 + $0x20] sm:$0xff]
        %v833 = vld [vmem:[%s300 + $0x28] sm:$0xff]
        %v834 = vld [vmem:[%s300 + $0x30] sm:$0xff]
        %835 = vrot.lane.b32.xlu0 %v547, 81
        %v836 = vpop.permute.xlu0 %835
        %837 = vrot.lane.b32.xlu0 %v551, 81
        %v838 = vpop.permute.xlu0 %837
        %vm839 = vcmask 662528
        %v840 = vsel %vm839, %v836, %v838
        %v844 = vmul.f32 %v829, %v836
        %v845 = vmul.f32 %v830, %v840
        %v846 = vmul.f32 %v831, %v838
        %v847 = vmul.f32 %v832, %v836
        %v848 = vmul.f32 %v833, %v840
        %v849 = vmul.f32 %v834, %v838
        %v850 = vpack.c.bf16 %v847, %v844
        %v851 = vpack.c.bf16 %v848, %v845
        %v852 = vpack.c.bf16 %v849, %v846
        %856 = vrot.lane.b32.xlu0 %v850, 47
        %v857 = vpop.permute.xlu0 %856
        %858 = vrot.lane.b32.xlu0 %v851, 47
        %v859 = vpop.permute.xlu0 %858
        %860 = vrot.lane.b32.xlu0 %v852, 47
        %v861 = vpop.permute.xlu0 %860
        %vm862 = vcmask 384000
        %v863 = vsel %vm862, %v857, %v859
        %v864 = vsel %vm862, %v859, %v861
        %867 = vst [vmem:[#allocation2 + $0xb0] sm:$0xff] %v863
        %868 = vst [vmem:[#allocation2 + $0xb8] sm:$0xff] %v864
        %v869 = vld [vmem:[%s300] sm:$0xff]
        %v870 = vld [vmem:[%s300 + $0x8] sm:$0xff]
        %v871 = vld [vmem:[%s300 + $0x10] sm:$0xff]
        %v872 = vld [vmem:[%s300 + $0x20] sm:$0xff]
        %v873 = vld [vmem:[%s300 + $0x28] sm:$0xff]
        %v874 = vld [vmem:[%s300 + $0x30] sm:$0xff]
        %875 = vrot.lane.b32.xlu0 %v596, 82
        %v876 = vpop.permute.xlu0 %875
        %877 = vrot.lane.b32.xlu0 %v600, 82
        %v878 = vpop.permute.xlu0 %877
        %vm879 = vcmask 670720
        %v880 = vsel %vm879, %v876, %v878
        %v884 = vmul.f32 %v869, %v876
        %v885 = vmul.f32 %v870, %v880
        %v886 = vmul.f32 %v871, %v878
        %v887 = vmul.f32 %v872, %v876
        %v888 = vmul.f32 %v873, %v880
        %v889 = vmul.f32 %v874, %v878
        %v890 = vpack.c.bf16 %v887, %v884
        %v891 = vpack.c.bf16 %v888, %v885
        %v892 = vpack.c.bf16 %v889, %v886
        %896 = vrot.lane.b32.xlu0 %v890, 46
        %v897 = vpop.permute.xlu0 %896
        %898 = vrot.lane.b32.xlu0 %v891, 46
        %v899 = vpop.permute.xlu0 %898
        %900 = vrot.lane.b32.xlu0 %v892, 46
        %v901 = vpop.permute.xlu0 %900
        %vm902 = vcmask 375808
        %v903 = vsel %vm902, %v897, %v899
        %v904 = vsel %vm902, %v899, %v901
        %907 = vst [vmem:[#allocation2 + $0xc0] sm:$0xff] %v903
        %908 = vst [vmem:[#allocation2 + $0xc8] sm:$0xff] %v904
        %v909 = vld [vmem:[%s300] sm:$0xff]
        %v910 = vld [vmem:[%s300 + $0x8] sm:$0xff]
        %v911 = vld [vmem:[%s300 + $0x10] sm:$0xff]
        %v912 = vld [vmem:[%s300 + $0x20] sm:$0xff]
        %v913 = vld [vmem:[%s300 + $0x28] sm:$0xff]
        %v914 = vld [vmem:[%s300 + $0x30] sm:$0xff]
        %915 = vrot.lane.b32.xlu0 %v645, 83
        %v916 = vpop.permute.xlu0 %915
        %917 = vrot.lane.b32.xlu0 %v649, 83
        %v918 = vpop.permute.xlu0 %917
        %vm919 = vcmask 678912
        %v920 = vsel %vm919, %v916, %v918
        %v924 = vmul.f32 %v909, %v916
        %v925 = vmul.f32 %v910, %v920
        %v926 = vmul.f32 %v911, %v918
        %v927 = vmul.f32 %v912, %v916
        %v928 = vmul.f32 %v913, %v920
        %v929 = vmul.f32 %v914, %v918
        %v930 = vpack.c.bf16 %v927, %v924
        %v931 = vpack.c.bf16 %v928, %v925
        %v932 = vpack.c.bf16 %v929, %v926
        %936 = vrot.lane.b32.xlu0 %v930, 45
        %v937 = vpop.permute.xlu0 %936
        %938 = vrot.lane.b32.xlu0 %v931, 45
        %v939 = vpop.permute.xlu0 %938
        %940 = vrot.lane.b32.xlu0 %v932, 45
        %v941 = vpop.permute.xlu0 %940
        %vm942 = vcmask 367616
        %v943 = vsel %vm942, %v937, %v939
        %v944 = vsel %vm942, %v939, %v941
        %947 = vst [vmem:[#allocation2 + $0xd0] sm:$0xff] %v943
        %948 = vst [vmem:[#allocation2 + $0xd8] sm:$0xff] %v944
        %v949 = vld [vmem:[%s300] sm:$0xff]
        %v950 = vld [vmem:[%s300 + $0x8] sm:$0xff]
        %v951 = vld [vmem:[%s300 + $0x10] sm:$0xff]
        %v952 = vld [vmem:[%s300 + $0x20] sm:$0xff]
        %v953 = vld [vmem:[%s300 + $0x28] sm:$0xff]
        %v954 = vld [vmem:[%s300 + $0x30] sm:$0xff]
        %955 = vrot.lane.b32.xlu0 %v375, 93
        %v956 = vpop.permute.xlu0 %955
        %957 = vrot.lane.b32.xlu0 %v379, 93
        %v958 = vpop.permute.xlu0 %957
        %vm959 = vcmask 760832
        %v960 = vsel %vm959, %v956, %v958
        %v964 = vmul.f32 %v949, %v956
        %v965 = vmul.f32 %v950, %v960
        %v966 = vmul.f32 %v951, %v958
        %v967 = vmul.f32 %v952, %v956
        %v968 = vmul.f32 %v953, %v960
        %v969 = vmul.f32 %v954, %v958
        %v970 = vpack.c.bf16 %v967, %v964
        %v971 = vpack.c.bf16 %v968, %v965
        %v972 = vpack.c.bf16 %v969, %v966
        %976 = vrot.lane.b32.xlu0 %v970, 35
        %v977 = vpop.permute.xlu0 %976
        %978 = vrot.lane.b32.xlu0 %v971, 35
        %v979 = vpop.permute.xlu0 %978
        %980 = vrot.lane.b32.xlu0 %v972, 35
        %v981 = vpop.permute.xlu0 %980
        %vm982 = vcmask 285696
        %v983 = vsel %vm982, %v977, %v979
        %v984 = vsel %vm982, %v979, %v981
        %987 = vst [vmem:[#allocation2 + $0xe0] sm:$0xff] %v983
        %988 = vst [vmem:[#allocation2 + $0xe8] sm:$0xff] %v984
        %v989 = vld [vmem:[%s300] sm:$0xff]
        %v990 = vld [vmem:[%s300 + $0x8] sm:$0xff]
        %v991 = vld [vmem:[%s300 + $0x10] sm:$0xff]
        %v992 = vld [vmem:[%s300 + $0x20] sm:$0xff]
        %v993 = vld [vmem:[%s300 + $0x28] sm:$0xff]
        %v994 = vld [vmem:[%s300 + $0x30] sm:$0xff]
        %995 = vrot.lane.b32.xlu0 %v424, 94
        %v996 = vpop.permute.xlu0 %995
        %997 = vrot.lane.b32.xlu0 %v428, 94
        %v998 = vpop.permute.xlu0 %997
        %vm999 = vcmask 769024
        %v1000 = vsel %vm999, %v996, %v998
        %v1004 = vmul.f32 %v989, %v996
        %v1005 = vmul.f32 %v990, %v1000
        %v1006 = vmul.f32 %v991, %v998
        %v1007 = vmul.f32 %v992, %v996
        %v1008 = vmul.f32 %v993, %v1000
        %v1009 = vmul.f32 %v994, %v998
        %v1010 = vpack.c.bf16 %v1007, %v1004
        %v1011 = vpack.c.bf16 %v1008, %v1005
        %v1012 = vpack.c.bf16 %v1009, %v1006
        %1016 = vrot.lane.b32.xlu0 %v1010, 34
        %v1017 = vpop.permute.xlu0 %1016
        %1018 = vrot.lane.b32.xlu0 %v1011, 34
        %v1019 = vpop.permute.xlu0 %1018
        %1020 = vrot.lane.b32.xlu0 %v1012, 34
        %v1021 = vpop.permute.xlu0 %1020
        %vm1022 = vcmask 277504
        %v1023 = vsel %vm1022, %v1017, %v1019
        %v1024 = vsel %vm1022, %v1019, %v1021
        %1027 = vst [vmem:[#allocation2 + $0xf0] sm:$0xff] %v1023
        %1028 = vst [vmem:[#allocation2 + $0xf8] sm:$0xff] %v1024
        %v1029 = vld [vmem:[%s300] sm:$0xff]
        %v1030 = vld [vmem:[%s300 + $0x8] sm:$0xff]
        %v1031 = vld [vmem:[%s300 + $0x10] sm:$0xff]
        %v1032 = vld [vmem:[%s300 + $0x20] sm:$0xff]
        %v1033 = vld [vmem:[%s300 + $0x28] sm:$0xff]
        %v1034 = vld [vmem:[%s300 + $0x30] sm:$0xff]
        %1035 = vrot.lane.b32.xlu0 %v473, 95
        %v1036 = vpop.permute.xlu0 %1035
        %1037 = vrot.lane.b32.xlu0 %v477, 95
        %v1038 = vpop.permute.xlu0 %1037
        %vm1039 = vcmask 777216
        %v1040 = vsel %vm1039, %v1036, %v1038
        %v1044 = vmul.f32 %v1029, %v1036
        %v1045 = vmul.f32 %v1030, %v1040
        %v1046 = vmul.f32 %v1031, %v1038
        %v1047 = vmul.f32 %v1032, %v1036
        %v1048 = vmul.f32 %v1033, %v1040
        %v1049 = vmul.f32 %v1034, %v1038
        %v1050 = vpack.c.bf16 %v1047, %v1044
        %v1051 = vpack.c.bf16 %v1048, %v1045
        %v1052 = vpack.c.bf16 %v1049, %v1046
        %1056 = vrot.lane.b32.xlu0 %v1050, 33
        %v1057 = vpop.permute.xlu0 %1056
        %1058 = vrot.lane.b32.xlu0 %v1051, 33
        %v1059 = vpop.permute.xlu0 %1058
        %1060 = vrot.lane.b32.xlu0 %v1052, 33
        %v1061 = vpop.permute.xlu0 %1060
        %vm1062 = vcmask 269312
        %v1063 = vsel %vm1062, %v1057, %v1059
        %v1064 = vsel %vm1062, %v1059, %v1061
        %1067 = vst [vmem:[#allocation2 + $0x100] sm:$0xff] %v1063
        %1068 = vst [vmem:[#allocation2 + $0x108] sm:$0xff] %v1064
        %v1069 = vld [vmem:[%s300] sm:$0xff]
        %v1070 = vld [vmem:[%s300 + $0x8] sm:$0xff]
        %v1071 = vld [vmem:[%s300 + $0x10] sm:$0xff]
        %v1072 = vld [vmem:[%s300 + $0x20] sm:$0xff]
        %v1073 = vld [vmem:[%s300 + $0x28] sm:$0xff]
        %v1074 = vld [vmem:[%s300 + $0x30] sm:$0xff]
        %v1075 = vpack.c.bf16 %v1072, %v1069
        %v1076 = vpack.c.bf16 %v1073, %v1070
        %v1077 = vpack.c.bf16 %v1074, %v1071
        %1081 = vrot.lane.b32.xlu0 %v1075, 32
        %v1082 = vpop.permute.xlu0 %1081
        %1083 = vrot.lane.b32.xlu0 %v1076, 32
        %v1084 = vpop.permute.xlu0 %1083
        %1085 = vrot.lane.b32.xlu0 %v1077, 32
        %v1086 = vpop.permute.xlu0 %1085
        %vm1087 = vcmask 261120
        %v1088 = vsel %vm1087, %v1082, %v1084
        %v1089 = vsel %vm1087, %v1084, %v1086
        %1092 = vst [vmem:[#allocation2 + $0x110] sm:$0xff] %v1088
        %1093 = vst [vmem:[#allocation2 + $0x118] sm:$0xff] %v1089
        %v1094 = vld [vmem:[%s300] sm:$0xff]
        %v1095 = vld [vmem:[%s300 + $0x8] sm:$0xff]
        %v1096 = vld [vmem:[%s300 + $0x10] sm:$0xff]
        %v1097 = vld [vmem:[%s300 + $0x20] sm:$0xff]
        %v1098 = vld [vmem:[%s300 + $0x28] sm:$0xff]
        %v1099 = vld [vmem:[%s300 + $0x30] sm:$0xff]
        %1100 = vrot.lane.b32.xlu0 %v547, 97
        %v1101 = vpop.permute.xlu0 %1100
        %1102 = vrot.lane.b32.xlu0 %v551, 97
        %v1103 = vpop.permute.xlu0 %1102
        %vm1104 = vcmask 793600
        %v1105 = vsel %vm1104, %v1101, %v1103
        %v1109 = vmul.f32 %v1094, %v1101
        %v1110 = vmul.f32 %v1095, %v1105
        %v1111 = vmul.f32 %v1096, %v1103
        %v1112 = vmul.f32 %v1097, %v1101
        %v1113 = vmul.f32 %v1098, %v1105
        %v1114 = vmul.f32 %v1099, %v1103
        %v1115 = vpack.c.bf16 %v1112, %v1109
        %v1116 = vpack.c.bf16 %v1113, %v1110
        %v1117 = vpack.c.bf16 %v1114, %v1111
        %1121 = vrot.lane.b32.xlu0 %v1115, 31
        %v1122 = vpop.permute.xlu0 %1121
        %1123 = vrot.lane.b32.xlu0 %v1116, 31
        %v1124 = vpop.permute.xlu0 %1123
        %1125 = vrot.lane.b32.xlu0 %v1117, 31
        %v1126 = vpop.permute.xlu0 %1125
        %vm1127 = vcmask 252928
        %v1128 = vsel %vm1127, %v1122, %v1124
        %v1129 = vsel %vm1127, %v1124, %v1126
        %1132 = vst [vmem:[#allocation2 + $0x120] sm:$0xff] %v1128
        %1133 = vst [vmem:[#allocation2 + $0x128] sm:$0xff] %v1129
        %v1134 = vld [vmem:[%s300] sm:$0xff]
        %v1135 = vld [vmem:[%s300 + $0x8] sm:$0xff]
        %v1136 = vld [vmem:[%s300 + $0x10] sm:$0xff]
        %v1137 = vld [vmem:[%s300 + $0x20] sm:$0xff]
        %v1138 = vld [vmem:[%s300 + $0x28] sm:$0xff]
        %v1139 = vld [vmem:[%s300 + $0x30] sm:$0xff]
        %1140 = vrot.lane.b32.xlu0 %v596, 98
        %v1141 = vpop.permute.xlu0 %1140
        %1142 = vrot.lane.b32.xlu0 %v600, 98
        %v1143 = vpop.permute.xlu0 %1142
        %vm1144 = vcmask 801792
        %v1145 = vsel %vm1144, %v1141, %v1143
        %v1149 = vmul.f32 %v1134, %v1141
        %v1150 = vmul.f32 %v1135, %v1145
        %v1151 = vmul.f32 %v1136, %v1143
        %v1152 = vmul.f32 %v1137, %v1141
        %v1153 = vmul.f32 %v1138, %v1145
        %v1154 = vmul.f32 %v1139, %v1143
        %v1155 = vpack.c.bf16 %v1152, %v1149
        %v1156 = vpack.c.bf16 %v1153, %v1150
        %v1157 = vpack.c.bf16 %v1154, %v1151
        %1161 = vrot.lane.b32.xlu0 %v1155, 30
        %v1162 = vpop.permute.xlu0 %1161
        %1163 = vrot.lane.b32.xlu0 %v1156, 30
        %v1164 = vpop.permute.xlu0 %1163
        %1165 = vrot.lane.b32.xlu0 %v1157, 30
        %v1166 = vpop.permute.xlu0 %1165
        %vm1167 = vcmask 244736
        %v1168 = vsel %vm1167, %v1162, %v1164
        %v1169 = vsel %vm1167, %v1164, %v1166
        %1172 = vst [vmem:[#allocation2 + $0x130] sm:$0xff] %v1168
        %1173 = vst [vmem:[#allocation2 + $0x138] sm:$0xff] %v1169
        %v1174 = vld [vmem:[%s300] sm:$0xff]
        %v1175 = vld [vmem:[%s300 + $0x8] sm:$0xff]
        %v1176 = vld [vmem:[%s300 + $0x10] sm:$0xff]
        %v1177 = vld [vmem:[%s300 + $0x20] sm:$0xff]
        %v1178 = vld [vmem:[%s300 + $0x28] sm:$0xff]
        %v1179 = vld [vmem:[%s300 + $0x30] sm:$0xff]
        %1180 = vrot.lane.b32.xlu0 %v645, 99
        %v1181 = vpop.permute.xlu0 %1180
        %1182 = vrot.lane.b32.xlu0 %v649, 99
        %v1183 = vpop.permute.xlu0 %1182
        %vm1184 = vcmask 809984
        %v1185 = vsel %vm1184, %v1181, %v1183
        %v1189 = vmul.f32 %v1174, %v1181
        %v1190 = vmul.f32 %v1175, %v1185
        %v1191 = vmul.f32 %v1176, %v1183
        %v1192 = vmul.f32 %v1177, %v1181
        %v1193 = vmul.f32 %v1178, %v1185
        %v1194 = vmul.f32 %v1179, %v1183
        %v1195 = vpack.c.bf16 %v1192, %v1189
        %v1196 = vpack.c.bf16 %v1193, %v1190
        %v1197 = vpack.c.bf16 %v1194, %v1191
        %1201 = vrot.lane.b32.xlu0 %v1195, 29
        %v1202 = vpop.permute.xlu0 %1201
        %1203 = vrot.lane.b32.xlu0 %v1196, 29
        %v1204 = vpop.permute.xlu0 %1203
        %1205 = vrot.lane.b32.xlu0 %v1197, 29
        %v1206 = vpop.permute.xlu0 %1205
        %vm1207 = vcmask 236544
        %v1208 = vsel %vm1207, %v1202, %v1204
        %v1209 = vsel %vm1207, %v1204, %v1206
        %1212 = vst [vmem:[#allocation2 + $0x140] sm:$0xff] %v1208
        %1213 = vst [vmem:[#allocation2 + $0x148] sm:$0xff] %v1209
        %v1214 = vld [vmem:[%s300] sm:$0xff]
        %v1215 = vld [vmem:[%s300 + $0x8] sm:$0xff]
        %v1216 = vld [vmem:[%s300 + $0x10] sm:$0xff]
        %v1217 = vld [vmem:[%s300 + $0x20] sm:$0xff]
        %v1218 = vld [vmem:[%s300 + $0x28] sm:$0xff]
        %v1219 = vld [vmem:[%s300 + $0x30] sm:$0xff]
        %1220 = vrot.lane.b32.xlu0 %v375, 109
        %v1221 = vpop.permute.xlu0 %1220
        %1222 = vrot.lane.b32.xlu0 %v379, 109
        %v1223 = vpop.permute.xlu0 %1222
        %vm1224 = vcmask 891904
        %v1225 = vsel %vm1224, %v1221, %v1223
        %v1229 = vmul.f32 %v1214, %v1221
        %v1230 = vmul.f32 %v1215, %v1225
        %v1231 = vmul.f32 %v1216, %v1223
        %v1232 = vmul.f32 %v1217, %v1221
        %v1233 = vmul.f32 %v1218, %v1225
        %v1234 = vmul.f32 %v1219, %v1223
        %v1235 = vpack.c.bf16 %v1232, %v1229
        %v1236 = vpack.c.bf16 %v1233, %v1230
        %v1237 = vpack.c.bf16 %v1234, %v1231
        %1241 = vrot.lane.b32.xlu0 %v1235, 19
        %v1242 = vpop.permute.xlu0 %1241
        %1243 = vrot.lane.b32.xlu0 %v1236, 19
        %v1244 = vpop.permute.xlu0 %1243
        %1245 = vrot.lane.b32.xlu0 %v1237, 19
        %v1246 = vpop.permute.xlu0 %1245
        %vm1247 = vcmask 154624
        %v1248 = vsel %vm1247, %v1242, %v1244
        %v1249 = vsel %vm1247, %v1244, %v1246
        %1252 = vst [vmem:[#allocation2 + $0x150] sm:$0xff] %v1248
        %1253 = vst [vmem:[#allocation2 + $0x158] sm:$0xff] %v1249
        %v1254 = vld [vmem:[%s300] sm:$0xff]
        %v1255 = vld [vmem:[%s300 + $0x8] sm:$0xff]
        %v1256 = vld [vmem:[%s300 + $0x10] sm:$0xff]
        %v1257 = vld [vmem:[%s300 + $0x20] sm:$0xff]
        %v1258 = vld [vmem:[%s300 + $0x28] sm:$0xff]
        %v1259 = vld [vmem:[%s300 + $0x30] sm:$0xff]
        %1260 = vrot.lane.b32.xlu0 %v424, 110
        %v1261 = vpop.permute.xlu0 %1260
        %1262 = vrot.lane.b32.xlu0 %v428, 110
        %v1263 = vpop.permute.xlu0 %1262
        %vm1264 = vcmask 900096
        %v1265 = vsel %vm1264, %v1261, %v1263
        %v1269 = vmul.f32 %v1254, %v1261
        %v1270 = vmul.f32 %v1255, %v1265
        %v1271 = vmul.f32 %v1256, %v1263
        %v1272 = vmul.f32 %v1257, %v1261
        %v1273 = vmul.f32 %v1258, %v1265
        %v1274 = vmul.f32 %v1259, %v1263
        %v1275 = vpack.c.bf16 %v1272, %v1269
        %v1276 = vpack.c.bf16 %v1273, %v1270
        %v1277 = vpack.c.bf16 %v1274, %v1271
        %1281 = vrot.lane.b32.xlu0 %v1275, 18
        %v1282 = vpop.permute.xlu0 %1281
        %1283 = vrot.lane.b32.xlu0 %v1276, 18
        %v1284 = vpop.permute.xlu0 %1283
        %1285 = vrot.lane.b32.xlu0 %v1277, 18
        %v1286 = vpop.permute.xlu0 %1285
        %vm1287 = vcmask 146432
        %v1288 = vsel %vm1287, %v1282, %v1284
        %v1289 = vsel %vm1287, %v1284, %v1286
        %1292 = vst [vmem:[#allocation2 + $0x160] sm:$0xff] %v1288
        %1293 = vst [vmem:[#allocation2 + $0x168] sm:$0xff] %v1289
        %v1294 = vld [vmem:[%s300] sm:$0xff]
        %v1295 = vld [vmem:[%s300 + $0x8] sm:$0xff]
        %v1296 = vld [vmem:[%s300 + $0x10] sm:$0xff]
        %v1297 = vld [vmem:[%s300 + $0x20] sm:$0xff]
        %v1298 = vld [vmem:[%s300 + $0x28] sm:$0xff]
        %v1299 = vld [vmem:[%s300 + $0x30] sm:$0xff]
        %1300 = vrot.lane.b32.xlu0 %v473, 111
        %v1301 = vpop.permute.xlu0 %1300
        %1302 = vrot.lane.b32.xlu0 %v477, 111
        %v1303 = vpop.permute.xlu0 %1302
        %vm1304 = vcmask 908288
        %v1305 = vsel %vm1304, %v1301, %v1303
        %v1309 = vmul.f32 %v1294, %v1301
        %v1310 = vmul.f32 %v1295, %v1305
        %v1311 = vmul.f32 %v1296, %v1303
        %v1312 = vmul.f32 %v1297, %v1301
        %v1313 = vmul.f32 %v1298, %v1305
        %v1314 = vmul.f32 %v1299, %v1303
        %v1315 = vpack.c.bf16 %v1312, %v1309
        %v1316 = vpack.c.bf16 %v1313, %v1310
        %v1317 = vpack.c.bf16 %v1314, %v1311
        %1321 = vrot.lane.b32.xlu0 %v1315, 17
        %v1322 = vpop.permute.xlu0 %1321
        %1323 = vrot.lane.b32.xlu0 %v1316, 17
        %v1324 = vpop.permute.xlu0 %1323
        %1325 = vrot.lane.b32.xlu0 %v1317, 17
        %v1326 = vpop.permute.xlu0 %1325
        %vm1327 = vcmask 138240
        %v1328 = vsel %vm1327, %v1322, %v1324
        %v1329 = vsel %vm1327, %v1324, %v1326
        %1332 = vst [vmem:[#allocation2 + $0x170] sm:$0xff] %v1328
        %1333 = vst [vmem:[#allocation2 + $0x178] sm:$0xff] %v1329
        %v1334 = vld [vmem:[%s300] sm:$0xff]
        %v1335 = vld [vmem:[%s300 + $0x8] sm:$0xff]
        %v1336 = vld [vmem:[%s300 + $0x10] sm:$0xff]
        %v1337 = vld [vmem:[%s300 + $0x20] sm:$0xff]
        %v1338 = vld [vmem:[%s300 + $0x28] sm:$0xff]
        %v1339 = vld [vmem:[%s300 + $0x30] sm:$0xff]
        %v1340 = vpack.c.bf16 %v1337, %v1334
        %v1341 = vpack.c.bf16 %v1338, %v1335
        %v1342 = vpack.c.bf16 %v1339, %v1336
        %1346 = vrot.lane.b32.xlu0 %v1340, 16
        %v1347 = vpop.permute.xlu0 %1346
        %1348 = vrot.lane.b32.xlu0 %v1341, 16
        %v1349 = vpop.permute.xlu0 %1348
        %1350 = vrot.lane.b32.xlu0 %v1342, 16
        %v1351 = vpop.permute.xlu0 %1350
        %vm1352 = vcmask 130048
        %v1353 = vsel %vm1352, %v1347, %v1349
        %v1354 = vsel %vm1352, %v1349, %v1351
        %1357 = vst [vmem:[#allocation2 + $0x180] sm:$0xff] %v1353
        %1358 = vst [vmem:[#allocation2 + $0x188] sm:$0xff] %v1354
        %v1359 = vld [vmem:[%s300] sm:$0xff]
        %v1360 = vld [vmem:[%s300 + $0x8] sm:$0xff]
        %v1361 = vld [vmem:[%s300 + $0x10] sm:$0xff]
        %v1362 = vld [vmem:[%s300 + $0x20] sm:$0xff]
        %v1363 = vld [vmem:[%s300 + $0x28] sm:$0xff]
        %v1364 = vld [vmem:[%s300 + $0x30] sm:$0xff]
        %1365 = vrot.lane.b32.xlu0 %v547, 113
        %v1366 = vpop.permute.xlu0 %1365
        %1367 = vrot.lane.b32.xlu0 %v551, 113
        %v1368 = vpop.permute.xlu0 %1367
        %vm1369 = vcmask 924672
        %v1370 = vsel %vm1369, %v1366, %v1368
        %v1374 = vmul.f32 %v1359, %v1366
        %v1375 = vmul.f32 %v1360, %v1370
        %v1376 = vmul.f32 %v1361, %v1368
        %v1377 = vmul.f32 %v1362, %v1366
        %v1378 = vmul.f32 %v1363, %v1370
        %v1379 = vmul.f32 %v1364, %v1368
        %v1380 = vpack.c.bf16 %v1377, %v1374
        %v1381 = vpack.c.bf16 %v1378, %v1375
        %v1382 = vpack.c.bf16 %v1379, %v1376
        %1386 = vrot.lane.b32.xlu0 %v1380, 15
        %v1387 = vpop.permute.xlu0 %1386
        %1388 = vrot.lane.b32.xlu0 %v1381, 15
        %v1389 = vpop.permute.xlu0 %1388
        %1390 = vrot.lane.b32.xlu0 %v1382, 15
        %v1391 = vpop.permute.xlu0 %1390
        %vm1392 = vcmask 121856
        %v1393 = vsel %vm1392, %v1387, %v1389
        %v1394 = vsel %vm1392, %v1389, %v1391
        %1397 = vst [vmem:[#allocation2 + $0x190] sm:$0xff] %v1393
        %1398 = vst [vmem:[#allocation2 + $0x198] sm:$0xff] %v1394
        %v1399 = vld [vmem:[%s300] sm:$0xff]
        %v1400 = vld [vmem:[%s300 + $0x8] sm:$0xff]
        %v1401 = vld [vmem:[%s300 + $0x10] sm:$0xff]
        %v1402 = vld [vmem:[%s300 + $0x20] sm:$0xff]
        %v1403 = vld [vmem:[%s300 + $0x28] sm:$0xff]
        %v1404 = vld [vmem:[%s300 + $0x30] sm:$0xff]
        %1405 = vrot.lane.b32.xlu0 %v596, 114
        %v1406 = vpop.permute.xlu0 %1405
        %1407 = vrot.lane.b32.xlu0 %v600, 114
        %v1408 = vpop.permute.xlu0 %1407
        %vm1409 = vcmask 932864
        %v1410 = vsel %vm1409, %v1406, %v1408
        %v1414 = vmul.f32 %v1399, %v1406
        %v1415 = vmul.f32 %v1400, %v1410
        %v1416 = vmul.f32 %v1401, %v1408
        %v1417 = vmul.f32 %v1402, %v1406
        %v1418 = vmul.f32 %v1403, %v1410
        %v1419 = vmul.f32 %v1404, %v1408
        %v1420 = vpack.c.bf16 %v1417, %v1414
        %v1421 = vpack.c.bf16 %v1418, %v1415
        %v1422 = vpack.c.bf16 %v1419, %v1416
        %1426 = vrot.lane.b32.xlu0 %v1420, 14
        %v1427 = vpop.permute.xlu0 %1426
        %1428 = vrot.lane.b32.xlu0 %v1421, 14
        %v1429 = vpop.permute.xlu0 %1428
        %1430 = vrot.lane.b32.xlu0 %v1422, 14
        %v1431 = vpop.permute.xlu0 %1430
        %vm1432 = vcmask 113664
        %v1433 = vsel %vm1432, %v1427, %v1429
        %v1434 = vsel %vm1432, %v1429, %v1431
        %1437 = vst [vmem:[#allocation2 + $0x1a0] sm:$0xff] %v1433
        %1438 = vst [vmem:[#allocation2 + $0x1a8] sm:$0xff] %v1434
        %v1439 = vld [vmem:[%s300] sm:$0xff]
        %v1440 = vld [vmem:[%s300 + $0x8] sm:$0xff]
        %v1441 = vld [vmem:[%s300 + $0x10] sm:$0xff]
        %v1442 = vld [vmem:[%s300 + $0x20] sm:$0xff]
        %v1443 = vld [vmem:[%s300 + $0x28] sm:$0xff]
        %v1444 = vld [vmem:[%s300 + $0x30] sm:$0xff]
        %1445 = vrot.lane.b32.xlu0 %v645, 115
        %v1446 = vpop.permute.xlu0 %1445
        %1447 = vrot.lane.b32.xlu0 %v649, 115
        %v1448 = vpop.permute.xlu0 %1447
        %vm1449 = vcmask 941056
        %v1450 = vsel %vm1449, %v1446, %v1448
        %v1454 = vmul.f32 %v1439, %v1446
        %v1455 = vmul.f32 %v1440, %v1450
        %v1456 = vmul.f32 %v1441, %v1448
        %v1457 = vmul.f32 %v1442, %v1446
        %v1458 = vmul.f32 %v1443, %v1450
        %v1459 = vmul.f32 %v1444, %v1448
        %v1460 = vpack.c.bf16 %v1457, %v1454
        %v1461 = vpack.c.bf16 %v1458, %v1455
        %v1462 = vpack.c.bf16 %v1459, %v1456
        %1466 = vrot.lane.b32.xlu0 %v1460, 13
        %v1467 = vpop.permute.xlu0 %1466
        %1468 = vrot.lane.b32.xlu0 %v1461, 13
        %v1469 = vpop.permute.xlu0 %1468
        %1470 = vrot.lane.b32.xlu0 %v1462, 13
        %v1471 = vpop.permute.xlu0 %1470
        %vm1472 = vcmask 105472
        %v1473 = vsel %vm1472, %v1467, %v1469
        %v1474 = vsel %vm1472, %v1469, %v1471
        %1477 = vst [vmem:[#allocation2 + $0x1b0] sm:$0xff] %v1473
        %1478 = vst [vmem:[#allocation2 + $0x1b8] sm:$0xff] %v1474
        %v1479 = vld [vmem:[%s300] sm:$0xff]
        %v1480 = vld [vmem:[%s300 + $0x8] sm:$0xff]
        %v1481 = vld [vmem:[%s300 + $0x10] sm:$0xff]
        %v1482 = vld [vmem:[%s300 + $0x20] sm:$0xff]
        %v1483 = vld [vmem:[%s300 + $0x28] sm:$0xff]
        %v1484 = vld [vmem:[%s300 + $0x30] sm:$0xff]
        %1485 = vrot.lane.b32.xlu0 %v375, 125
        %v1486 = vpop.permute.xlu0 %1485
        %1487 = vrot.lane.b32.xlu0 %v379, 125
        %v1488 = vpop.permute.xlu0 %1487
        %vm1489 = vcmask 1022976
        %v1490 = vsel %vm1489, %v1486, %v1488
        %v1494 = vmul.f32 %v1479, %v1486
        %v1495 = vmul.f32 %v1480, %v1490
        %v1496 = vmul.f32 %v1481, %v1488
        %v1497 = vmul.f32 %v1482, %v1486
        %v1498 = vmul.f32 %v1483, %v1490
        %v1499 = vmul.f32 %v1484, %v1488
        %v1500 = vpack.c.bf16 %v1497, %v1494
        %v1501 = vpack.c.bf16 %v1498, %v1495
        %v1502 = vpack.c.bf16 %v1499, %v1496
        %1506 = vrot.lane.b32.xlu0 %v1500, 3
        %v1507 = vpop.permute.xlu0 %1506
        %1508 = vrot.lane.b32.xlu0 %v1501, 3
        %v1509 = vpop.permute.xlu0 %1508
        %1510 = vrot.lane.b32.xlu0 %v1502, 3
        %v1511 = vpop.permute.xlu0 %1510
        %vm1512 = vcmask 23552
        %v1513 = vsel %vm1512, %v1507, %v1509
        %v1514 = vsel %vm1512, %v1509, %v1511
        %1517 = vst [vmem:[#allocation2 + $0x1c0] sm:$0xff] %v1513
        %1518 = vst [vmem:[#allocation2 + $0x1c8] sm:$0xff] %v1514
        %v1519 = vld [vmem:[%s300] sm:$0xff]
        %v1520 = vld [vmem:[%s300 + $0x8] sm:$0xff]
        %v1521 = vld [vmem:[%s300 + $0x10] sm:$0xff]
        %v1522 = vld [vmem:[%s300 + $0x20] sm:$0xff]
        %v1523 = vld [vmem:[%s300 + $0x28] sm:$0xff]
        %v1524 = vld [vmem:[%s300 + $0x30] sm:$0xff]
        %1525 = vrot.lane.b32.xlu0 %v424, 126
        %v1526 = vpop.permute.xlu0 %1525
        %1527 = vrot.lane.b32.xlu0 %v428, 126
        %v1528 = vpop.permute.xlu0 %1527
        %vm1529 = vcmask 1031168
        %v1530 = vsel %vm1529, %v1526, %v1528
        %v1534 = vmul.f32 %v1519, %v1526
        %v1535 = vmul.f32 %v1520, %v1530
        %v1536 = vmul.f32 %v1521, %v1528
        %v1537 = vmul.f32 %v1522, %v1526
        %v1538 = vmul.f32 %v1523, %v1530
        %v1539 = vmul.f32 %v1524, %v1528
        %v1540 = vpack.c.bf16 %v1537, %v1534
        %v1541 = vpack.c.bf16 %v1538, %v1535
        %v1542 = vpack.c.bf16 %v1539, %v1536
        %1546 = vrot.lane.b32.xlu0 %v1540, 2
        %v1547 = vpop.permute.xlu0 %1546
        %1548 = vrot.lane.b32.xlu0 %v1541, 2
        %v1549 = vpop.permute.xlu0 %1548
        %1550 = vrot.lane.b32.xlu0 %v1542, 2
        %v1551 = vpop.permute.xlu0 %1550
        %vm1552 = vcmask 15360
        %v1553 = vsel %vm1552, %v1547, %v1549
        %v1554 = vsel %vm1552, %v1549, %v1551
        %1557 = vst [vmem:[#allocation2 + $0x1d0] sm:$0xff] %v1553
        %1558 = vst [vmem:[#allocation2 + $0x1d8] sm:$0xff] %v1554
        %v1559 = vld [vmem:[%s300] sm:$0xff]
        %v1560 = vld [vmem:[%s300 + $0x8] sm:$0xff]
        %v1561 = vld [vmem:[%s300 + $0x10] sm:$0xff]
        %v1562 = vld [vmem:[%s300 + $0x20] sm:$0xff]
        %v1563 = vld [vmem:[%s300 + $0x28] sm:$0xff]
        %v1564 = vld [vmem:[%s300 + $0x30] sm:$0xff]
        %1565 = vrot.lane.b32.xlu0 %v473, 127
        %v1566 = vpop.permute.xlu0 %1565
        %1567 = vrot.lane.b32.xlu0 %v477, 127
        %v1568 = vpop.permute.xlu0 %1567
        %vm1569 = vcmask 1039360
        %v1570 = vsel %vm1569, %v1566, %v1568
        %v1574 = vmul.f32 %v1559, %v1566
        %v1575 = vmul.f32 %v1560, %v1570
        %v1576 = vmul.f32 %v1561, %v1568
        %v1577 = vmul.f32 %v1562, %v1566
        %v1578 = vmul.f32 %v1563, %v1570
        %v1579 = vmul.f32 %v1564, %v1568
        %v1580 = vpack.c.bf16 %v1577, %v1574
        %v1581 = vpack.c.bf16 %v1578, %v1575
        %v1582 = vpack.c.bf16 %v1579, %v1576
        %1586 = vrot.lane.b32.xlu0 %v1580, 1
        %v1587 = vpop.permute.xlu0 %1586
        %1588 = vrot.lane.b32.xlu0 %v1581, 1
        %v1589 = vpop.permute.xlu0 %1588
        %1590 = vrot.lane.b32.xlu0 %v1582, 1
        %v1591 = vpop.permute.xlu0 %1590
        %vm1592 = vcmask 7168
        %v1593 = vsel %vm1592, %v1587, %v1589
        %v1594 = vsel %vm1592, %v1589, %v1591
        %1597 = vst [vmem:[#allocation2 + $0x1e0] sm:$0xff] %v1593
        %1598 = vst [vmem:[#allocation2 + $0x1e8] sm:$0xff] %v1594
        %v1599 = vld [vmem:[%s300 + $0x8] sm:$0xff]
        %v1600 = vld [vmem:[%s300 + $0x10] sm:$0xff]
        %v1601 = vld [vmem:[%s300 + $0x28] sm:$0xff]
        %v1602 = vld [vmem:[%s300 + $0x30] sm:$0xff]
        %v1603 = vpack.c.bf16 %v1601, %v1599
        %v1604 = vpack.c.bf16 %v1602, %v1600
        %1605 = vst [vmem:[#allocation2 + $0x1f0] sm:$0xff] %v1603
        %1606 = vst [vmem:[#allocation2 + $0x1f8] sm:$0xff] %v1604
        %v1607 = vld [vmem:[%s300 + $0x8] sm:$0xff]
        %v1608 = vld [vmem:[%s300 + $0x10] sm:$0xff]
        %v1609 = vld [vmem:[%s300 + $0x18] sm:$0xff]
        %v1610 = vld [vmem:[%s300 + $0x28] sm:$0xff]
        %v1611 = vld [vmem:[%s300 + $0x30] sm:$0xff]
        %v1612 = vld [vmem:[%s300 + $0x38] sm:$0xff]
        %1613 = vrot.lane.b32.xlu0 %v547, 1
        %v1614 = vpop.permute.xlu0 %1613
        %1615 = vrot.lane.b32.xlu0 %v551, 1
        %v1616 = vpop.permute.xlu0 %1615
        %vm1617 = vcmask 7168
        %v1618 = vsel %vm1617, %v1614, %v1616
        %v1622 = vmul.f32 %v1607, %v1614
        %v1623 = vmul.f32 %v1608, %v1618
        %v1624 = vmul.f32 %v1609, %v1616
        %v1625 = vmul.f32 %v1610, %v1614
        %v1626 = vmul.f32 %v1611, %v1618
        %v1627 = vmul.f32 %v1612, %v1616
        %v1628 = vpack.c.bf16 %v1625, %v1622
        %v1629 = vpack.c.bf16 %v1626, %v1623
        %v1630 = vpack.c.bf16 %v1627, %v1624
        %1634 = vrot.lane.b32.xlu0 %v1628, 127
        %v1635 = vpop.permute.xlu0 %1634
        %1636 = vrot.lane.b32.xlu0 %v1629, 127
        %v1637 = vpop.permute.xlu0 %1636
        %1638 = vrot.lane.b32.xlu0 %v1630, 127
        %v1639 = vpop.permute.xlu0 %1638
        %vm1640 = vcmask 1039360
        %v1641 = vsel %vm1640, %v1635, %v1637
        %v1642 = vsel %vm1640, %v1637, %v1639
        %1645 = vst [vmem:[#allocation2 + $0x200] sm:$0xff] %v1641
        %1646 = vst [vmem:[#allocation2 + $0x208] sm:$0xff] %v1642
        %v1647 = vld [vmem:[%s300 + $0x8] sm:$0xff]
        %v1648 = vld [vmem:[%s300 + $0x10] sm:$0xff]
        %v1649 = vld [vmem:[%s300 + $0x18] sm:$0xff]
        %v1650 = vld [vmem:[%s300 + $0x28] sm:$0xff]
        %v1651 = vld [vmem:[%s300 + $0x30] sm:$0xff]
        %v1652 = vld [vmem:[%s300 + $0x38] sm:$0xff]
        %1653 = vrot.lane.b32.xlu0 %v596, 2
        %v1654 = vpop.permute.xlu0 %1653
        %1655 = vrot.lane.b32.xlu0 %v600, 2
        %v1656 = vpop.permute.xlu0 %1655
        %vm1657 = vcmask 15360
        %v1658 = vsel %vm1657, %v1654, %v1656
        %v1662 = vmul.f32 %v1647, %v1654
        %v1663 = vmul.f32 %v1648, %v1658
        %v1664 = vmul.f32 %v1649, %v1656
        %v1665 = vmul.f32 %v1650, %v1654
        %v1666 = vmul.f32 %v1651, %v1658
        %v1667 = vmul.f32 %v1652, %v1656
        %v1668 = vpack.c.bf16 %v1665, %v1662
        %v1669 = vpack.c.bf16 %v1666, %v1663
        %v1670 = vpack.c.bf16 %v1667, %v1664
        %1674 = vrot.lane.b32.xlu0 %v1668, 126
        %v1675 = vpop.permute.xlu0 %1674
        %1676 = vrot.lane.b32.xlu0 %v1669, 126
        %v1677 = vpop.permute.xlu0 %1676
        %1678 = vrot.lane.b32.xlu0 %v1670, 126
        %v1679 = vpop.permute.xlu0 %1678
        %vm1680 = vcmask 1031168
        %v1681 = vsel %vm1680, %v1675, %v1677
        %v1682 = vsel %vm1680, %v1677, %v1679
        %1685 = vst [vmem:[#allocation2 + $0x210] sm:$0xff] %v1681
        %1686 = vst [vmem:[#allocation2 + $0x218] sm:$0xff] %v1682
        %v1687 = vld [vmem:[%s300 + $0x8] sm:$0xff]
        %v1688 = vld [vmem:[%s300 + $0x10] sm:$0xff]
        %v1689 = vld [vmem:[%s300 + $0x18] sm:$0xff]
        %v1690 = vld [vmem:[%s300 + $0x28] sm:$0xff]
        %v1691 = vld [vmem:[%s300 + $0x30] sm:$0xff]
        %v1692 = vld [vmem:[%s300 + $0x38] sm:$0xff]
        %1693 = vrot.lane.b32.xlu0 %v645, 3
        %v1694 = vpop.permute.xlu0 %1693
        %1695 = vrot.lane.b32.xlu0 %v649, 3
        %v1696 = vpop.permute.xlu0 %1695
        %vm1697 = vcmask 23552
        %v1698 = vsel %vm1697, %v1694, %v1696
        %v1702 = vmul.f32 %v1687, %v1694
        %v1703 = vmul.f32 %v1688, %v1698
        %v1704 = vmul.f32 %v1689, %v1696
        %v1705 = vmul.f32 %v1690, %v1694
        %v1706 = vmul.f32 %v1691, %v1698
        %v1707 = vmul.f32 %v1692, %v1696
        %v1708 = vpack.c.bf16 %v1705, %v1702
        %v1709 = vpack.c.bf16 %v1706, %v1703
        %v1710 = vpack.c.bf16 %v1707, %v1704
        %1714 = vrot.lane.b32.xlu0 %v1708, 125
        %v1715 = vpop.permute.xlu0 %1714
        %1716 = vrot.lane.b32.xlu0 %v1709, 125
        %v1717 = vpop.permute.xlu0 %1716
        %1718 = vrot.lane.b32.xlu0 %v1710, 125
        %v1719 = vpop.permute.xlu0 %1718
        %vm1720 = vcmask 1022976
        %v1721 = vsel %vm1720, %v1715, %v1717
        %v1722 = vsel %vm1720, %v1717, %v1719
        %1725 = vst [vmem:[#allocation2 + $0x220] sm:$0xff] %v1721
        %1726 = vst [vmem:[#allocation2 + $0x228] sm:$0xff] %v1722
        %v1727 = vld [vmem:[%s300 + $0x8] sm:$0xff]
        %v1728 = vld [vmem:[%s300 + $0x10] sm:$0xff]
        %v1729 = vld [vmem:[%s300 + $0x18] sm:$0xff]
        %v1730 = vld [vmem:[%s300 + $0x28] sm:$0xff]
        %v1731 = vld [vmem:[%s300 + $0x30] sm:$0xff]
        %v1732 = vld [vmem:[%s300 + $0x38] sm:$0xff]
        %1733 = vrot.lane.b32.xlu0 %v375, 13
        %v1734 = vpop.permute.xlu0 %1733
        %1735 = vrot.lane.b32.xlu0 %v379, 13
        %v1736 = vpop.permute.xlu0 %1735
        %vm1737 = vcmask 105472
        %v1738 = vsel %vm1737, %v1734, %v1736
        %v1742 = vmul.f32 %v1727, %v1734
        %v1743 = vmul.f32 %v1728, %v1738
        %v1744 = vmul.f32 %v1729, %v1736
        %v1745 = vmul.f32 %v1730, %v1734
        %v1746 = vmul.f32 %v1731, %v1738
        %v1747 = vmul.f32 %v1732, %v1736
        %v1748 = vpack.c.bf16 %v1745, %v1742
        %v1749 = vpack.c.bf16 %v1746, %v1743
        %v1750 = vpack.c.bf16 %v1747, %v1744
        %1754 = vrot.lane.b32.xlu0 %v1748, 115
        %v1755 = vpop.permute.xlu0 %1754
        %1756 = vrot.lane.b32.xlu0 %v1749, 115
        %v1757 = vpop.permute.xlu0 %1756
        %1758 = vrot.lane.b32.xlu0 %v1750, 115
        %v1759 = vpop.permute.xlu0 %1758
        %vm1760 = vcmask 941056
        %v1761 = vsel %vm1760, %v1755, %v1757
        %v1762 = vsel %vm1760, %v1757, %v1759
        %1765 = vst [vmem:[#allocation2 + $0x230] sm:$0xff] %v1761
        %1766 = vst [vmem:[#allocation2 + $0x238] sm:$0xff] %v1762
        %v1767 = vld [vmem:[%s300 + $0x8] sm:$0xff]
        %v1768 = vld [vmem:[%s300 + $0x10] sm:$0xff]
        %v1769 = vld [vmem:[%s300 + $0x18] sm:$0xff]
        %v1770 = vld [vmem:[%s300 + $0x28] sm:$0xff]
        %v1771 = vld [vmem:[%s300 + $0x30] sm:$0xff]
        %v1772 = vld [vmem:[%s300 + $0x38] sm:$0xff]
        %1773 = vrot.lane.b32.xlu0 %v424, 14
        %v1774 = vpop.permute.xlu0 %1773
        %1775 = vrot.lane.b32.xlu0 %v428, 14
        %v1776 = vpop.permute.xlu0 %1775
        %vm1777 = vcmask 113664
        %v1778 = vsel %vm1777, %v1774, %v1776
        %v1782 = vmul.f32 %v1767, %v1774
        %v1783 = vmul.f32 %v1768, %v1778
        %v1784 = vmul.f32 %v1769, %v1776
        %v1785 = vmul.f32 %v1770, %v1774
        %v1786 = vmul.f32 %v1771, %v1778
        %v1787 = vmul.f32 %v1772, %v1776
        %v1788 = vpack.c.bf16 %v1785, %v1782
        %v1789 = vpack.c.bf16 %v1786, %v1783
        %v1790 = vpack.c.bf16 %v1787, %v1784
        %1794 = vrot.lane.b32.xlu0 %v1788, 114
        %v1795 = vpop.permute.xlu0 %1794
        %1796 = vrot.lane.b32.xlu0 %v1789, 114
        %v1797 = vpop.permute.xlu0 %1796
        %1798 = vrot.lane.b32.xlu0 %v1790, 114
        %v1799 = vpop.permute.xlu0 %1798
        %vm1800 = vcmask 932864
        %v1801 = vsel %vm1800, %v1795, %v1797
        %v1802 = vsel %vm1800, %v1797, %v1799
        %1805 = vst [vmem:[#allocation2 + $0x240] sm:$0xff] %v1801
        %1806 = vst [vmem:[#allocation2 + $0x248] sm:$0xff] %v1802
        %v1807 = vld [vmem:[%s300 + $0x8] sm:$0xff]
        %v1808 = vld [vmem:[%s300 + $0x10] sm:$0xff]
        %v1809 = vld [vmem:[%s300 + $0x18] sm:$0xff]
        %v1810 = vld [vmem:[%s300 + $0x28] sm:$0xff]
        %v1811 = vld [vmem:[%s300 + $0x30] sm:$0xff]
        %v1812 = vld [vmem:[%s300 + $0x38] sm:$0xff]
        %1813 = vrot.lane.b32.xlu0 %v473, 15
        %v1814 = vpop.permute.xlu0 %1813
        %1815 = vrot.lane.b32.xlu0 %v477, 15
        %v1816 = vpop.permute.xlu0 %1815
        %vm1817 = vcmask 121856
        %v1818 = vsel %vm1817, %v1814, %v1816
        %v1822 = vmul.f32 %v1807, %v1814
        %v1823 = vmul.f32 %v1808, %v1818
        %v1824 = vmul.f32 %v1809, %v1816
        %v1825 = vmul.f32 %v1810, %v1814
        %v1826 = vmul.f32 %v1811, %v1818
        %v1827 = vmul.f32 %v1812, %v1816
        %v1828 = vpack.c.bf16 %v1825, %v1822
        %v1829 = vpack.c.bf16 %v1826, %v1823
        %v1830 = vpack.c.bf16 %v1827, %v1824
        %1834 = vrot.lane.b32.xlu0 %v1828, 113
        %v1835 = vpop.permute.xlu0 %1834
        %1836 = vrot.lane.b32.xlu0 %v1829, 113
        %v1837 = vpop.permute.xlu0 %1836
        %1838 = vrot.lane.b32.xlu0 %v1830, 113
        %v1839 = vpop.permute.xlu0 %1838
        %vm1840 = vcmask 924672
        %v1841 = vsel %vm1840, %v1835, %v1837
        %v1842 = vsel %vm1840, %v1837, %v1839
        %1845 = vst [vmem:[#allocation2 + $0x250] sm:$0xff] %v1841
        %1846 = vst [vmem:[#allocation2 + $0x258] sm:$0xff] %v1842
        %v1847 = vld [vmem:[%s300 + $0x8] sm:$0xff]
        %v1848 = vld [vmem:[%s300 + $0x10] sm:$0xff]
        %v1849 = vld [vmem:[%s300 + $0x18] sm:$0xff]
        %v1850 = vld [vmem:[%s300 + $0x28] sm:$0xff]
        %v1851 = vld [vmem:[%s300 + $0x30] sm:$0xff]
        %v1852 = vld [vmem:[%s300 + $0x38] sm:$0xff]
        %v1853 = vpack.c.bf16 %v1850, %v1847
        %v1854 = vpack.c.bf16 %v1851, %v1848
        %v1855 = vpack.c.bf16 %v1852, %v1849
        %1859 = vrot.lane.b32.xlu0 %v1853, 112
        %v1860 = vpop.permute.xlu0 %1859
        %1861 = vrot.lane.b32.xlu0 %v1854, 112
        %v1862 = vpop.permute.xlu0 %1861
        %1863 = vrot.lane.b32.xlu0 %v1855, 112
        %v1864 = vpop.permute.xlu0 %1863
        %vm1865 = vcmask 916480
        %v1866 = vsel %vm1865, %v1860, %v1862
        %v1867 = vsel %vm1865, %v1862, %v1864
        %1870 = vst [vmem:[#allocation2 + $0x260] sm:$0xff] %v1866
        %1871 = vst [vmem:[#allocation2 + $0x268] sm:$0xff] %v1867
        %v1872 = vld [vmem:[%s300 + $0x8] sm:$0xff]
        %v1873 = vld [vmem:[%s300 + $0x10] sm:$0xff]
        %v1874 = vld [vmem:[%s300 + $0x18] sm:$0xff]
        %v1875 = vld [vmem:[%s300 + $0x28] sm:$0xff]
        %v1876 = vld [vmem:[%s300 + $0x30] sm:$0xff]
        %v1877 = vld [vmem:[%s300 + $0x38] sm:$0xff]
        %1878 = vrot.lane.b32.xlu0 %v547, 17
        %v1879 = vpop.permute.xlu0 %1878
        %1880 = vrot.lane.b32.xlu0 %v551, 17
        %v1881 = vpop.permute.xlu0 %1880
        %vm1882 = vcmask 138240
        %v1883 = vsel %vm1882, %v1879, %v1881
        %v1887 = vmul.f32 %v1872, %v1879
        %v1888 = vmul.f32 %v1873, %v1883
        %v1889 = vmul.f32 %v1874, %v1881
        %v1890 = vmul.f32 %v1875, %v1879
        %v1891 = vmul.f32 %v1876, %v1883
        %v1892 = vmul.f32 %v1877, %v1881
        %v1893 = vpack.c.bf16 %v1890, %v1887
        %v1894 = vpack.c.bf16 %v1891, %v1888
        %v1895 = vpack.c.bf16 %v1892, %v1889
        %1899 = vrot.lane.b32.xlu0 %v1893, 111
        %v1900 = vpop.permute.xlu0 %1899
        %1901 = vrot.lane.b32.xlu0 %v1894, 111
        %v1902 = vpop.permute.xlu0 %1901
        %1903 = vrot.lane.b32.xlu0 %v1895, 111
        %v1904 = vpop.permute.xlu0 %1903
        %vm1905 = vcmask 908288
        %v1906 = vsel %vm1905, %v1900, %v1902
        %v1907 = vsel %vm1905, %v1902, %v1904
        %1910 = vst [vmem:[#allocation2 + $0x270] sm:$0xff] %v1906
        %1911 = vst [vmem:[#allocation2 + $0x278] sm:$0xff] %v1907
        %v1912 = vld [vmem:[%s300 + $0x8] sm:$0xff]
        %v1913 = vld [vmem:[%s300 + $0x10] sm:$0xff]
        %v1914 = vld [vmem:[%s300 + $0x18] sm:$0xff]
        %v1915 = vld [vmem:[%s300 + $0x28] sm:$0xff]
        %v1916 = vld [vmem:[%s300 + $0x30] sm:$0xff]
        %v1917 = vld [vmem:[%s300 + $0x38] sm:$0xff]
        %1918 = vrot.lane.b32.xlu0 %v596, 18
        %v1919 = vpop.permute.xlu0 %1918
        %1920 = vrot.lane.b32.xlu0 %v600, 18
        %v1921 = vpop.permute.xlu0 %1920
        %vm1922 = vcmask 146432
        %v1923 = vsel %vm1922, %v1919, %v1921
        %v1927 = vmul.f32 %v1912, %v1919
        %v1928 = vmul.f32 %v1913, %v1923
        %v1929 = vmul.f32 %v1914, %v1921
        %v1930 = vmul.f32 %v1915, %v1919
        %v1931 = vmul.f32 %v1916, %v1923
        %v1932 = vmul.f32 %v1917, %v1921
        %v1933 = vpack.c.bf16 %v1930, %v1927
        %v1934 = vpack.c.bf16 %v1931, %v1928
        %v1935 = vpack.c.bf16 %v1932, %v1929
        %1939 = vrot.lane.b32.xlu0 %v1933, 110
        %v1940 = vpop.permute.xlu0 %1939
        %1941 = vrot.lane.b32.xlu0 %v1934, 110
        %v1942 = vpop.permute.xlu0 %1941
        %1943 = vrot.lane.b32.xlu0 %v1935, 110
        %v1944 = vpop.permute.xlu0 %1943
        %vm1945 = vcmask 900096
        %v1946 = vsel %vm1945, %v1940, %v1942
        %v1947 = vsel %vm1945, %v1942, %v1944
        %1950 = vst [vmem:[#allocation2 + $0x280] sm:$0xff] %v1946
        %1951 = vst [vmem:[#allocation2 + $0x288] sm:$0xff] %v1947
        %v1952 = vld [vmem:[%s300 + $0x8] sm:$0xff]
        %v1953 = vld [vmem:[%s300 + $0x10] sm:$0xff]
        %v1954 = vld [vmem:[%s300 + $0x18] sm:$0xff]
        %v1955 = vld [vmem:[%s300 + $0x28] sm:$0xff]
        %v1956 = vld [vmem:[%s300 + $0x30] sm:$0xff]
        %v1957 = vld [vmem:[%s300 + $0x38] sm:$0xff]
        %1958 = vrot.lane.b32.xlu0 %v645, 19
        %v1959 = vpop.permute.xlu0 %1958
        %1960 = vrot.lane.b32.xlu0 %v649, 19
        %v1961 = vpop.permute.xlu0 %1960
        %vm1962 = vcmask 154624
        %v1963 = vsel %vm1962, %v1959, %v1961
        %v1967 = vmul.f32 %v1952, %v1959
        %v1968 = vmul.f32 %v1953, %v1963
        %v1969 = vmul.f32 %v1954, %v1961
        %v1970 = vmul.f32 %v1955, %v1959
        %v1971 = vmul.f32 %v1956, %v1963
        %v1972 = vmul.f32 %v1957, %v1961
        %v1973 = vpack.c.bf16 %v1970, %v1967
        %v1974 = vpack.c.bf16 %v1971, %v1968
        %v1975 = vpack.c.bf16 %v1972, %v1969
        %1979 = vrot.lane.b32.xlu0 %v1973, 109
        %v1980 = vpop.permute.xlu0 %1979
        %1981 = vrot.lane.b32.xlu0 %v1974, 109
        %v1982 = vpop.permute.xlu0 %1981
        %1983 = vrot.lane.b32.xlu0 %v1975, 109
        %v1984 = vpop.permute.xlu0 %1983
        %vm1985 = vcmask 891904
        %v1986 = vsel %vm1985, %v1980, %v1982
        %v1987 = vsel %vm1985, %v1982, %v1984
        %1990 = vst [vmem:[#allocation2 + $0x290] sm:$0xff] %v1986
        %1991 = vst [vmem:[#allocation2 + $0x298] sm:$0xff] %v1987
        %v1992 = vld [vmem:[%s300 + $0x8] sm:$0xff]
        %v1993 = vld [vmem:[%s300 + $0x10] sm:$0xff]
        %v1994 = vld [vmem:[%s300 + $0x18] sm:$0xff]
        %v1995 = vld [vmem:[%s300 + $0x28] sm:$0xff]
        %v1996 = vld [vmem:[%s300 + $0x30] sm:$0xff]
        %v1997 = vld [vmem:[%s300 + $0x38] sm:$0xff]
        %1998 = vrot.lane.b32.xlu0 %v375, 29
        %v1999 = vpop.permute.xlu0 %1998
        %2000 = vrot.lane.b32.xlu0 %v379, 29
        %v2001 = vpop.permute.xlu0 %2000
        %vm2002 = vcmask 236544
        %v2003 = vsel %vm2002, %v1999, %v2001
        %v2007 = vmul.f32 %v1992, %v1999
        %v2008 = vmul.f32 %v1993, %v2003
        %v2009 = vmul.f32 %v1994, %v2001
        %v2010 = vmul.f32 %v1995, %v1999
        %v2011 = vmul.f32 %v1996, %v2003
        %v2012 = vmul.f32 %v1997, %v2001
        %v2013 = vpack.c.bf16 %v2010, %v2007
        %v2014 = vpack.c.bf16 %v2011, %v2008
        %v2015 = vpack.c.bf16 %v2012, %v2009
        %2019 = vrot.lane.b32.xlu0 %v2013, 99
        %v2020 = vpop.permute.xlu0 %2019
        %2021 = vrot.lane.b32.xlu0 %v2014, 99
        %v2022 = vpop.permute.xlu0 %2021
        %2023 = vrot.lane.b32.xlu0 %v2015, 99
        %v2024 = vpop.permute.xlu0 %2023
        %vm2025 = vcmask 809984
        %v2026 = vsel %vm2025, %v2020, %v2022
        %v2027 = vsel %vm2025, %v2022, %v2024
        %2030 = vst [vmem:[#allocation2 + $0x2a0] sm:$0xff] %v2026
        %2031 = vst [vmem:[#allocation2 + $0x2a8] sm:$0xff] %v2027
        %v2032 = vld [vmem:[%s300 + $0x8] sm:$0xff]
        %v2033 = vld [vmem:[%s300 + $0x10] sm:$0xff]
        %v2034 = vld [vmem:[%s300 + $0x18] sm:$0xff]
        %v2035 = vld [vmem:[%s300 + $0x28] sm:$0xff]
        %v2036 = vld [vmem:[%s300 + $0x30] sm:$0xff]
        %v2037 = vld [vmem:[%s300 + $0x38] sm:$0xff]
        %2038 = vrot.lane.b32.xlu0 %v424, 30
        %v2039 = vpop.permute.xlu0 %2038
        %2040 = vrot.lane.b32.xlu0 %v428, 30
        %v2041 = vpop.permute.xlu0 %2040
        %vm2042 = vcmask 244736
        %v2043 = vsel %vm2042, %v2039, %v2041
        %v2047 = vmul.f32 %v2032, %v2039
        %v2048 = vmul.f32 %v2033, %v2043
        %v2049 = vmul.f32 %v2034, %v2041
        %v2050 = vmul.f32 %v2035, %v2039
        %v2051 = vmul.f32 %v2036, %v2043
        %v2052 = vmul.f32 %v2037, %v2041
        %v2053 = vpack.c.bf16 %v2050, %v2047
        %v2054 = vpack.c.bf16 %v2051, %v2048
        %v2055 = vpack.c.bf16 %v2052, %v2049
        %2059 = vrot.lane.b32.xlu0 %v2053, 98
        %v2060 = vpop.permute.xlu0 %2059
        %2061 = vrot.lane.b32.xlu0 %v2054, 98
        %v2062 = vpop.permute.xlu0 %2061
        %2063 = vrot.lane.b32.xlu0 %v2055, 98
        %v2064 = vpop.permute.xlu0 %2063
        %vm2065 = vcmask 801792
        %v2066 = vsel %vm2065, %v2060, %v2062
        %v2067 = vsel %vm2065, %v2062, %v2064
        %2070 = vst [vmem:[#allocation2 + $0x2b0] sm:$0xff] %v2066
        %2071 = vst [vmem:[#allocation2 + $0x2b8] sm:$0xff] %v2067
        %v2072 = vld [vmem:[%s300 + $0x8] sm:$0xff]
        %v2073 = vld [vmem:[%s300 + $0x10] sm:$0xff]
        %v2074 = vld [vmem:[%s300 + $0x18] sm:$0xff]
        %v2075 = vld [vmem:[%s300 + $0x28] sm:$0xff]
        %v2076 = vld [vmem:[%s300 + $0x30] sm:$0xff]
        %v2077 = vld [vmem:[%s300 + $0x38] sm:$0xff]
        %2078 = vrot.lane.b32.xlu0 %v473, 31
        %v2079 = vpop.permute.xlu0 %2078
        %2080 = vrot.lane.b32.xlu0 %v477, 31
        %v2081 = vpop.permute.xlu0 %2080
        %vm2082 = vcmask 252928
        %v2083 = vsel %vm2082, %v2079, %v2081
        %v2087 = vmul.f32 %v2072, %v2079
        %v2088 = vmul.f32 %v2073, %v2083
        %v2089 = vmul.f32 %v2074, %v2081
        %v2090 = vmul.f32 %v2075, %v2079
        %v2091 = vmul.f32 %v2076, %v2083
        %v2092 = vmul.f32 %v2077, %v2081
        %v2093 = vpack.c.bf16 %v2090, %v2087
        %v2094 = vpack.c.bf16 %v2091, %v2088
        %v2095 = vpack.c.bf16 %v2092, %v2089
        %2099 = vrot.lane.b32.xlu0 %v2093, 97
        %v2100 = vpop.permute.xlu0 %2099
        %2101 = vrot.lane.b32.xlu0 %v2094, 97
        %v2102 = vpop.permute.xlu0 %2101
        %2103 = vrot.lane.b32.xlu0 %v2095, 97
        %v2104 = vpop.permute.xlu0 %2103
        %vm2105 = vcmask 793600
        %v2106 = vsel %vm2105, %v2100, %v2102
        %v2107 = vsel %vm2105, %v2102, %v2104
        %2110 = vst [vmem:[#allocation2 + $0x2c0] sm:$0xff] %v2106
        %2111 = vst [vmem:[#allocation2 + $0x2c8] sm:$0xff] %v2107
        %v2112 = vld [vmem:[%s300 + $0x8] sm:$0xff]
        %v2113 = vld [vmem:[%s300 + $0x10] sm:$0xff]
        %v2114 = vld [vmem:[%s300 + $0x18] sm:$0xff]
        %v2115 = vld [vmem:[%s300 + $0x28] sm:$0xff]
        %v2116 = vld [vmem:[%s300 + $0x30] sm:$0xff]
        %v2117 = vld [vmem:[%s300 + $0x38] sm:$0xff]
        %v2118 = vpack.c.bf16 %v2115, %v2112
        %v2119 = vpack.c.bf16 %v2116, %v2113
        %v2120 = vpack.c.bf16 %v2117, %v2114
        %2124 = vrot.lane.b32.xlu0 %v2118, 96
        %v2125 = vpop.permute.xlu0 %2124
        %2126 = vrot.lane.b32.xlu0 %v2119, 96
        %v2127 = vpop.permute.xlu0 %2126
        %2128 = vrot.lane.b32.xlu0 %v2120, 96
        %v2129 = vpop.permute.xlu0 %2128
        %vm2130 = vcmask 785408
        %v2131 = vsel %vm2130, %v2125, %v2127
        %v2132 = vsel %vm2130, %v2127, %v2129
        %2135 = vst [vmem:[#allocation2 + $0x2d0] sm:$0xff] %v2131
        %2136 = vst [vmem:[#allocation2 + $0x2d8] sm:$0xff] %v2132
        %v2137 = vld [vmem:[%s300 + $0x8] sm:$0xff]
        %v2138 = vld [vmem:[%s300 + $0x10] sm:$0xff]
        %v2139 = vld [vmem:[%s300 + $0x18] sm:$0xff]
        %v2140 = vld [vmem:[%s300 + $0x28] sm:$0xff]
        %v2141 = vld [vmem:[%s300 + $0x30] sm:$0xff]
        %v2142 = vld [vmem:[%s300 + $0x38] sm:$0xff]
        %2143 = vrot.lane.b32.xlu0 %v547, 33
        %v2144 = vpop.permute.xlu0 %2143
        %2145 = vrot.lane.b32.xlu0 %v551, 33
        %v2146 = vpop.permute.xlu0 %2145
        %vm2147 = vcmask 269312
        %v2148 = vsel %vm2147, %v2144, %v2146
        %v2152 = vmul.f32 %v2137, %v2144
        %v2153 = vmul.f32 %v2138, %v2148
        %v2154 = vmul.f32 %v2139, %v2146
        %v2155 = vmul.f32 %v2140, %v2144
        %v2156 = vmul.f32 %v2141, %v2148
        %v2157 = vmul.f32 %v2142, %v2146
        %v2158 = vpack.c.bf16 %v2155, %v2152
        %v2159 = vpack.c.bf16 %v2156, %v2153
        %v2160 = vpack.c.bf16 %v2157, %v2154
        %2164 = vrot.lane.b32.xlu0 %v2158, 95
        %v2165 = vpop.permute.xlu0 %2164
        %2166 = vrot.lane.b32.xlu0 %v2159, 95
        %v2167 = vpop.permute.xlu0 %2166
        %2168 = vrot.lane.b32.xlu0 %v2160, 95
        %v2169 = vpop.permute.xlu0 %2168
        %vm2170 = vcmask 777216
        %v2171 = vsel %vm2170, %v2165, %v2167
        %v2172 = vsel %vm2170, %v2167, %v2169
        %2175 = vst [vmem:[#allocation2 + $0x2e0] sm:$0xff] %v2171
        %2176 = vst [vmem:[#allocation2 + $0x2e8] sm:$0xff] %v2172
        %v2177 = vld [vmem:[%s300 + $0x8] sm:$0xff]
        %v2178 = vld [vmem:[%s300 + $0x10] sm:$0xff]
        %v2179 = vld [vmem:[%s300 + $0x18] sm:$0xff]
        %v2180 = vld [vmem:[%s300 + $0x28] sm:$0xff]
        %v2181 = vld [vmem:[%s300 + $0x30] sm:$0xff]
        %v2182 = vld [vmem:[%s300 + $0x38] sm:$0xff]
        %2183 = vrot.lane.b32.xlu0 %v596, 34
        %v2184 = vpop.permute.xlu0 %2183
        %2185 = vrot.lane.b32.xlu0 %v600, 34
        %v2186 = vpop.permute.xlu0 %2185
        %vm2187 = vcmask 277504
        %v2188 = vsel %vm2187, %v2184, %v2186
        %v2192 = vmul.f32 %v2177, %v2184
        %v2193 = vmul.f32 %v2178, %v2188
        %v2194 = vmul.f32 %v2179, %v2186
        %v2195 = vmul.f32 %v2180, %v2184
        %v2196 = vmul.f32 %v2181, %v2188
        %v2197 = vmul.f32 %v2182, %v2186
        %v2198 = vpack.c.bf16 %v2195, %v2192
        %v2199 = vpack.c.bf16 %v2196, %v2193
        %v2200 = vpack.c.bf16 %v2197, %v2194
        %2204 = vrot.lane.b32.xlu0 %v2198, 94
        %v2205 = vpop.permute.xlu0 %2204
        %2206 = vrot.lane.b32.xlu0 %v2199, 94
        %v2207 = vpop.permute.xlu0 %2206
        %2208 = vrot.lane.b32.xlu0 %v2200, 94
        %v2209 = vpop.permute.xlu0 %2208
        %vm2210 = vcmask 769024
        %v2211 = vsel %vm2210, %v2205, %v2207
        %v2212 = vsel %vm2210, %v2207, %v2209
        %2215 = vst [vmem:[#allocation2 + $0x2f0] sm:$0xff] %v2211
        %2216 = vst [vmem:[#allocation2 + $0x2f8] sm:$0xff] %v2212
        %v2217 = vld [vmem:[%s300 + $0x8] sm:$0xff]
        %v2218 = vld [vmem:[%s300 + $0x10] sm:$0xff]
        %v2219 = vld [vmem:[%s300 + $0x18] sm:$0xff]
        %v2220 = vld [vmem:[%s300 + $0x28] sm:$0xff]
        %v2221 = vld [vmem:[%s300 + $0x30] sm:$0xff]
        %v2222 = vld [vmem:[%s300 + $0x38] sm:$0xff]
        %2223 = vrot.lane.b32.xlu0 %v645, 35
        %v2224 = vpop.permute.xlu0 %2223
        %2225 = vrot.lane.b32.xlu0 %v649, 35
        %v2226 = vpop.permute.xlu0 %2225
        %vm2227 = vcmask 285696
        %v2228 = vsel %vm2227, %v2224, %v2226
        %v2232 = vmul.f32 %v2217, %v2224
        %v2233 = vmul.f32 %v2218, %v2228
        %v2234 = vmul.f32 %v2219, %v2226
        %v2235 = vmul.f32 %v2220, %v2224
        %v2236 = vmul.f32 %v2221, %v2228
        %v2237 = vmul.f32 %v2222, %v2226
        %v2238 = vpack.c.bf16 %v2235, %v2232
        %v2239 = vpack.c.bf16 %v2236, %v2233
        %v2240 = vpack.c.bf16 %v2237, %v2234
        %2244 = vrot.lane.b32.xlu0 %v2238, 93
        %v2245 = vpop.permute.xlu0 %2244
        %2246 = vrot.lane.b32.xlu0 %v2239, 93
        %v2247 = vpop.permute.xlu0 %2246
        %2248 = vrot.lane.b32.xlu0 %v2240, 93
        %v2249 = vpop.permute.xlu0 %2248
        %vm2250 = vcmask 760832
        %v2251 = vsel %vm2250, %v2245, %v2247
        %v2252 = vsel %vm2250, %v2247, %v2249
        %2255 = vst [vmem:[#allocation2 + $0x300] sm:$0xff] %v2251
        %2256 = vst [vmem:[#allocation2 + $0x308] sm:$0xff] %v2252
        %v2257 = vld [vmem:[%s300] sm:$0xff]
        %v2258 = vld [vmem:[%s300 + $0x8] sm:$0xff]
        %v2259 = vld [vmem:[%s300 + $0x10] sm:$0xff]
        %v2260 = vld [vmem:[%s300 + $0x20] sm:$0xff]
        %v2261 = vld [vmem:[%s300 + $0x28] sm:$0xff]
        %v2262 = vld [vmem:[%s300 + $0x30] sm:$0xff]
        %v2264 = vlaneseq
        %v2265 = vshrl.u32 %v2264, 7
        %v2266 = vsub.s32 0, %v2265
        %v2267 = vrot.slane %v350, %v2266
        %v2268 = vlaneseq
        %v2269 = vshrl.u32 %v2268, 7
        %v2270 = vsub.s32 1, %v2269
        %v2271 = vrot.slane %v350, %v2270
        %2272 = vrot.lane.b32.xlu0 %v2267, 10
        %v2273 = vpop.permute.xlu0 %2272
        %2274 = vrot.lane.b32.xlu0 %v2271, 10
        %v2275 = vpop.permute.xlu0 %2274
        %vm2276 = vcmask 80896
        %v2277 = vsel %vm2276, %v2273, %v2275
        %v2281 = vmul.f32 %v2257, %v2273
        %v2282 = vmul.f32 %v2258, %v2277
        %v2283 = vmul.f32 %v2259, %v2275
        %v2284 = vmul.f32 %v2260, %v2273
        %v2285 = vmul.f32 %v2261, %v2277
        %v2286 = vmul.f32 %v2262, %v2275
        %v2287 = vpack.c.bf16 %v2284, %v2281
        %v2288 = vpack.c.bf16 %v2285, %v2282
        %v2289 = vpack.c.bf16 %v2286, %v2283
        %2293 = vrot.lane.b32.xlu0 %v2287, 118
        %v2294 = vpop.permute.xlu0 %2293
        %2295 = vrot.lane.b32.xlu0 %v2288, 118
        %v2296 = vpop.permute.xlu0 %2295
        %2297 = vrot.lane.b32.xlu0 %v2289, 118
        %v2298 = vpop.permute.xlu0 %2297
        %vm2299 = vcmask 965632
        %v2300 = vsel %vm2299, %v2294, %v2296
        %v2301 = vsel %vm2299, %v2296, %v2298
        %2304 = vst [vmem:[#allocation2 + $0x310] sm:$0xff] %v2300
        %2305 = vst [vmem:[#allocation2 + $0x318] sm:$0xff] %v2301
        %v2306 = vld [vmem:[%s300] sm:$0xff]
        %v2307 = vld [vmem:[%s300 + $0x8] sm:$0xff]
        %v2308 = vld [vmem:[%s300 + $0x10] sm:$0xff]
        %v2309 = vld [vmem:[%s300 + $0x20] sm:$0xff]
        %v2310 = vld [vmem:[%s300 + $0x28] sm:$0xff]
        %v2311 = vld [vmem:[%s300 + $0x30] sm:$0xff]
        %v2312 = vmul.f32 %v2306, %v1734
        %v2313 = vmul.f32 %v2307, %v1738
        %v2314 = vmul.f32 %v2308, %v1736
        %v2315 = vmul.f32 %v2309, %v1734
        %v2316 = vmul.f32 %v2310, %v1738
        %v2317 = vmul.f32 %v2311, %v1736
        %v2318 = vpack.c.bf16 %v2315, %v2312
        %v2319 = vpack.c.bf16 %v2316, %v2313
        %v2320 = vpack.c.bf16 %v2317, %v2314
        %2324 = vrot.lane.b32.xlu0 %v2318, 115
        %v2325 = vpop.permute.xlu0 %2324
        %2326 = vrot.lane.b32.xlu0 %v2319, 115
        %v2327 = vpop.permute.xlu0 %2326
        %2328 = vrot.lane.b32.xlu0 %v2320, 115
        %v2329 = vpop.permute.xlu0 %2328
        %v2330 = vsel %vm1760, %v2325, %v2327
        %v2331 = vsel %vm1760, %v2327, %v2329
        %2334 = vst [vmem:[#allocation2 + $0x320] sm:$0xff] %v2330
        %2335 = vst [vmem:[#allocation2 + $0x328] sm:$0xff] %v2331
        %v2336 = vld [vmem:[%s300] sm:$0xff]
        %v2337 = vld [vmem:[%s300 + $0x8] sm:$0xff]
        %v2338 = vld [vmem:[%s300 + $0x10] sm:$0xff]
        %v2339 = vld [vmem:[%s300 + $0x20] sm:$0xff]
        %v2340 = vld [vmem:[%s300 + $0x28] sm:$0xff]
        %v2341 = vld [vmem:[%s300 + $0x30] sm:$0xff]
        %v2342 = vpack.c.bf16 %v2339, %v2336
        %v2343 = vpack.c.bf16 %v2340, %v2337
        %v2344 = vpack.c.bf16 %v2341, %v2338
        %2348 = vrot.lane.b32.xlu0 %v2342, 112
        %v2349 = vpop.permute.xlu0 %2348
        %2350 = vrot.lane.b32.xlu0 %v2343, 112
        %v2351 = vpop.permute.xlu0 %2350
        %2352 = vrot.lane.b32.xlu0 %v2344, 112
        %v2353 = vpop.permute.xlu0 %2352
        %v2354 = vsel %vm1865, %v2349, %v2351
        %v2355 = vsel %vm1865, %v2351, %v2353
        %2358 = vst [vmem:[#allocation2 + $0x330] sm:$0xff] %v2354
        %2359 = vst [vmem:[#allocation2 + $0x338] sm:$0xff] %v2355
        %v2360 = vld [vmem:[%s300] sm:$0xff]
        %v2361 = vld [vmem:[%s300 + $0x8] sm:$0xff]
        %v2362 = vld [vmem:[%s300 + $0x10] sm:$0xff]
        %v2363 = vld [vmem:[%s300 + $0x20] sm:$0xff]
        %v2364 = vld [vmem:[%s300 + $0x28] sm:$0xff]
        %v2365 = vld [vmem:[%s300 + $0x30] sm:$0xff]
        %v2366 = vmul.f32 %v2360, %v1959
        %v2367 = vmul.f32 %v2361, %v1963
        %v2368 = vmul.f32 %v2362, %v1961
        %v2369 = vmul.f32 %v2363, %v1959
        %v2370 = vmul.f32 %v2364, %v1963
        %v2371 = vmul.f32 %v2365, %v1961
        %v2372 = vpack.c.bf16 %v2369, %v2366
        %v2373 = vpack.c.bf16 %v2370, %v2367
        %v2374 = vpack.c.bf16 %v2371, %v2368
        %2378 = vrot.lane.b32.xlu0 %v2372, 109
        %v2379 = vpop.permute.xlu0 %2378
        %2380 = vrot.lane.b32.xlu0 %v2373, 109
        %v2381 = vpop.permute.xlu0 %2380
        %2382 = vrot.lane.b32.xlu0 %v2374, 109
        %v2383 = vpop.permute.xlu0 %2382
        %v2384 = vsel %vm1985, %v2379, %v2381
        %v2385 = vsel %vm1985, %v2381, %v2383
        %2388 = vst [vmem:[#allocation2 + $0x340] sm:$0xff] %v2384
        %2389 = vst [vmem:[#allocation2 + $0x348] sm:$0xff] %v2385
        %v2390 = vld [vmem:[%s300] sm:$0xff]
        %v2391 = vld [vmem:[%s300 + $0x8] sm:$0xff]
        %v2392 = vld [vmem:[%s300 + $0x10] sm:$0xff]
        %v2393 = vld [vmem:[%s300 + $0x20] sm:$0xff]
        %v2394 = vld [vmem:[%s300 + $0x28] sm:$0xff]
        %v2395 = vld [vmem:[%s300 + $0x30] sm:$0xff]
        %v2397 = vlaneseq
        %v2398 = vshrl.u32 %v2397, 7
        %v2399 = vsub.s32 0, %v2398
        %v2400 = vrot.slane %v364, %v2399
        %v2401 = vlaneseq
        %v2402 = vshrl.u32 %v2401, 7
        %v2403 = vsub.s32 1, %v2402
        %v2404 = vrot.slane %v364, %v2403
        %2405 = vrot.lane.b32.xlu0 %v2400, 22
        %v2406 = vpop.permute.xlu0 %2405
        %2407 = vrot.lane.b32.xlu0 %v2404, 22
        %v2408 = vpop.permute.xlu0 %2407
        %vm2409 = vcmask 179200
        %v2410 = vsel %vm2409, %v2406, %v2408
        %v2414 = vmul.f32 %v2390, %v2406
        %v2415 = vmul.f32 %v2391, %v2410
        %v2416 = vmul.f32 %v2392, %v2408
        %v2417 = vmul.f32 %v2393, %v2406
        %v2418 = vmul.f32 %v2394, %v2410
        %v2419 = vmul.f32 %v2395, %v2408
        %v2420 = vpack.c.bf16 %v2417, %v2414
        %v2421 = vpack.c.bf16 %v2418, %v2415
        %v2422 = vpack.c.bf16 %v2419, %v2416
        %2426 = vrot.lane.b32.xlu0 %v2420, 106
        %v2427 = vpop.permute.xlu0 %2426
        %2428 = vrot.lane.b32.xlu0 %v2421, 106
        %v2429 = vpop.permute.xlu0 %2428
        %2430 = vrot.lane.b32.xlu0 %v2422, 106
        %v2431 = vpop.permute.xlu0 %2430
        %vm2432 = vcmask 867328
        %v2433 = vsel %vm2432, %v2427, %v2429
        %v2434 = vsel %vm2432, %v2429, %v2431
        %2437 = vst [vmem:[#allocation2 + $0x350] sm:$0xff] %v2433
        %2438 = vst [vmem:[#allocation2 + $0x358] sm:$0xff] %v2434
        %v2439 = vld [vmem:[%s300] sm:$0xff]
        %v2440 = vld [vmem:[%s300 + $0x8] sm:$0xff]
        %v2441 = vld [vmem:[%s300 + $0x10] sm:$0xff]
        %v2442 = vld [vmem:[%s300 + $0x20] sm:$0xff]
        %v2443 = vld [vmem:[%s300 + $0x28] sm:$0xff]
        %v2444 = vld [vmem:[%s300 + $0x30] sm:$0xff]
        %2445 = vrot.lane.b32.xlu0 %v2267, 58
        %v2446 = vpop.permute.xlu0 %2445
        %2447 = vrot.lane.b32.xlu0 %v2271, 58
        %v2448 = vpop.permute.xlu0 %2447
        %vm2449 = vcmask 474112
        %v2450 = vsel %vm2449, %v2446, %v2448
        %v2454 = vmul.f32 %v2439, %v2446
        %v2455 = vmul.f32 %v2440, %v2450
        %v2456 = vmul.f32 %v2441, %v2448
        %v2457 = vmul.f32 %v2442, %v2446
        %v2458 = vmul.f32 %v2443, %v2450
        %v2459 = vmul.f32 %v2444, %v2448
        %v2460 = vpack.c.bf16 %v2457, %v2454
        %v2461 = vpack.c.bf16 %v2458, %v2455
        %v2462 = vpack.c.bf16 %v2459, %v2456
        %2466 = vrot.lane.b32.xlu0 %v2460, 70
        %v2467 = vpop.permute.xlu0 %2466
        %2468 = vrot.lane.b32.xlu0 %v2461, 70
        %v2469 = vpop.permute.xlu0 %2468
        %2470 = vrot.lane.b32.xlu0 %v2462, 70
        %v2471 = vpop.permute.xlu0 %2470
        %vm2472 = vcmask 572416
        %v2473 = vsel %vm2472, %v2467, %v2469
        %v2474 = vsel %vm2472, %v2469, %v2471
        %2477 = vst [vmem:[#allocation2 + $0x360] sm:$0xff] %v2473
        %2478 = vst [vmem:[#allocation2 + $0x368] sm:$0xff] %v2474
        %v2479 = vld [vmem:[%s300] sm:$0xff]
        %v2480 = vld [vmem:[%s300 + $0x8] sm:$0xff]
        %v2481 = vld [vmem:[%s300 + $0x10] sm:$0xff]
        %v2482 = vld [vmem:[%s300 + $0x20] sm:$0xff]
        %v2483 = vld [vmem:[%s300 + $0x28] sm:$0xff]
        %v2484 = vld [vmem:[%s300 + $0x30] sm:$0xff]
        %v2485 = vmul.f32 %v2479, %v381
        %v2486 = vmul.f32 %v2480, %v385
        %v2487 = vmul.f32 %v2481, %v383
        %v2488 = vmul.f32 %v2482, %v381
        %v2489 = vmul.f32 %v2483, %v385
        %v2490 = vmul.f32 %v2484, %v383
        %v2491 = vpack.c.bf16 %v2488, %v2485
        %v2492 = vpack.c.bf16 %v2489, %v2486
        %v2493 = vpack.c.bf16 %v2490, %v2487
        %2497 = vrot.lane.b32.xlu0 %v2491, 67
        %v2498 = vpop.permute.xlu0 %2497
        %2499 = vrot.lane.b32.xlu0 %v2492, 67
        %v2500 = vpop.permute.xlu0 %2499
        %2501 = vrot.lane.b32.xlu0 %v2493, 67
        %v2502 = vpop.permute.xlu0 %2501
        %v2503 = vsel %vm407, %v2498, %v2500
        %v2504 = vsel %vm407, %v2500, %v2502
        %2507 = vst [vmem:[#allocation2 + $0x370] sm:$0xff] %v2503
        %2508 = vst [vmem:[#allocation2 + $0x378] sm:$0xff] %v2504
        %v2509 = vld [vmem:[%s300] sm:$0xff]
        %v2510 = vld [vmem:[%s300 + $0x8] sm:$0xff]
        %v2511 = vld [vmem:[%s300 + $0x10] sm:$0xff]
        %v2512 = vld [vmem:[%s300 + $0x20] sm:$0xff]
        %v2513 = vld [vmem:[%s300 + $0x28] sm:$0xff]
        %v2514 = vld [vmem:[%s300 + $0x30] sm:$0xff]
        %v2515 = vpack.c.bf16 %v2512, %v2509
        %v2516 = vpack.c.bf16 %v2513, %v2510
        %v2517 = vpack.c.bf16 %v2514, %v2511
        %2521 = vrot.lane.b32.xlu0 %v2515, 64
        %v2522 = vpop.permute.xlu0 %2521
        %2523 = vrot.lane.b32.xlu0 %v2516, 64
        %v2524 = vpop.permute.xlu0 %2523
        %2525 = vrot.lane.b32.xlu0 %v2517, 64
        %v2526 = vpop.permute.xlu0 %2525
        %v2527 = vsel %vm530, %v2522, %v2524
        %v2528 = vsel %vm530, %v2524, %v2526
        %2531 = vst [vmem:[#allocation2 + $0x380] sm:$0xff] %v2527
        %2532 = vst [vmem:[#allocation2 + $0x388] sm:$0xff] %v2528
        %v2533 = vld [vmem:[%s300] sm:$0xff]
        %v2534 = vld [vmem:[%s300 + $0x8] sm:$0xff]
        %v2535 = vld [vmem:[%s300 + $0x10] sm:$0xff]
        %v2536 = vld [vmem:[%s300 + $0x20] sm:$0xff]
        %v2537 = vld [vmem:[%s300 + $0x28] sm:$0xff]
        %v2538 = vld [vmem:[%s300 + $0x30] sm:$0xff]
        %v2539 = vmul.f32 %v2533, %v651
        %v2540 = vmul.f32 %v2534, %v655
        %v2541 = vmul.f32 %v2535, %v653
        %v2542 = vmul.f32 %v2536, %v651
        %v2543 = vmul.f32 %v2537, %v655
        %v2544 = vmul.f32 %v2538, %v653
        %v2545 = vpack.c.bf16 %v2542, %v2539
        %v2546 = vpack.c.bf16 %v2543, %v2540
        %v2547 = vpack.c.bf16 %v2544, %v2541
        %2551 = vrot.lane.b32.xlu0 %v2545, 61
        %v2552 = vpop.permute.xlu0 %2551
        %2553 = vrot.lane.b32.xlu0 %v2546, 61
        %v2554 = vpop.permute.xlu0 %2553
        %2555 = vrot.lane.b32.xlu0 %v2547, 61
        %v2556 = vpop.permute.xlu0 %2555
        %v2557 = vsel %vm677, %v2552, %v2554
        %v2558 = vsel %vm677, %v2554, %v2556
        %2561 = vst [vmem:[#allocation2 + $0x390] sm:$0xff] %v2557
        %2562 = vst [vmem:[#allocation2 + $0x398] sm:$0xff] %v2558
        %v2563 = vld [vmem:[%s300] sm:$0xff]
        %v2564 = vld [vmem:[%s300 + $0x8] sm:$0xff]
        %v2565 = vld [vmem:[%s300 + $0x10] sm:$0xff]
        %v2566 = vld [vmem:[%s300 + $0x20] sm:$0xff]
        %v2567 = vld [vmem:[%s300 + $0x28] sm:$0xff]
        %v2568 = vld [vmem:[%s300 + $0x30] sm:$0xff]
        %2569 = vrot.lane.b32.xlu0 %v2400, 70
        %v2570 = vpop.permute.xlu0 %2569
        %2571 = vrot.lane.b32.xlu0 %v2404, 70
        %v2572 = vpop.permute.xlu0 %2571
        %vm2573 = vcmask 572416
        %v2574 = vsel %vm2573, %v2570, %v2572
        %v2578 = vmul.f32 %v2563, %v2570
        %v2579 = vmul.f32 %v2564, %v2574
        %v2580 = vmul.f32 %v2565, %v2572
        %v2581 = vmul.f32 %v2566, %v2570
        %v2582 = vmul.f32 %v2567, %v2574
        %v2583 = vmul.f32 %v2568, %v2572
        %v2584 = vpack.c.bf16 %v2581, %v2578
        %v2585 = vpack.c.bf16 %v2582, %v2579
        %v2586 = vpack.c.bf16 %v2583, %v2580
        %2590 = vrot.lane.b32.xlu0 %v2584, 58
        %v2591 = vpop.permute.xlu0 %2590
        %2592 = vrot.lane.b32.xlu0 %v2585, 58
        %v2593 = vpop.permute.xlu0 %2592
        %2594 = vrot.lane.b32.xlu0 %v2586, 58
        %v2595 = vpop.permute.xlu0 %2594
        %vm2596 = vcmask 474112
        %v2597 = vsel %vm2596, %v2591, %v2593
        %v2598 = vsel %vm2596, %v2593, %v2595
        %2601 = vst [vmem:[#allocation2 + $0x3a0] sm:$0xff] %v2597
        %2602 = vst [vmem:[#allocation2 + $0x3a8] sm:$0xff] %v2598
        %v2603 = vld [vmem:[%s300] sm:$0xff]
        %v2604 = vld [vmem:[%s300 + $0x8] sm:$0xff]
        %v2605 = vld [vmem:[%s300 + $0x10] sm:$0xff]
        %v2606 = vld [vmem:[%s300 + $0x20] sm:$0xff]
        %v2607 = vld [vmem:[%s300 + $0x28] sm:$0xff]
        %v2608 = vld [vmem:[%s300 + $0x30] sm:$0xff]
        %2609 = vrot.lane.b32.xlu0 %v2267, 106
        %v2610 = vpop.permute.xlu0 %2609
        %2611 = vrot.lane.b32.xlu0 %v2271, 106
        %v2612 = vpop.permute.xlu0 %2611
        %vm2613 = vcmask 867328
        %v2614 = vsel %vm2613, %v2610, %v2612
        %v2618 = vmul.f32 %v2603, %v2610
        %v2619 = vmul.f32 %v2604, %v2614
        %v2620 = vmul.f32 %v2605, %v2612
        %v2621 = vmul.f32 %v2606, %v2610
        %v2622 = vmul.f32 %v2607, %v2614
        %v2623 = vmul.f32 %v2608, %v2612
        %v2624 = vpack.c.bf16 %v2621, %v2618
        %v2625 = vpack.c.bf16 %v2622, %v2619
        %v2626 = vpack.c.bf16 %v2623, %v2620
        %2630 = vrot.lane.b32.xlu0 %v2624, 22
        %v2631 = vpop.permute.xlu0 %2630
        %2632 = vrot.lane.b32.xlu0 %v2625, 22
        %v2633 = vpop.permute.xlu0 %2632
        %2634 = vrot.lane.b32.xlu0 %v2626, 22
        %v2635 = vpop.permute.xlu0 %2634
        %vm2636 = vcmask 179200
        %v2637 = vsel %vm2636, %v2631, %v2633
        %v2638 = vsel %vm2636, %v2633, %v2635
        %2641 = vst [vmem:[#allocation2 + $0x3b0] sm:$0xff] %v2637
        %2642 = vst [vmem:[#allocation2 + $0x3b8] sm:$0xff] %v2638
        %v2643 = vld [vmem:[%s300] sm:$0xff]
        %v2644 = vld [vmem:[%s300 + $0x8] sm:$0xff]
        %v2645 = vld [vmem:[%s300 + $0x10] sm:$0xff]
        %v2646 = vld [vmem:[%s300 + $0x20] sm:$0xff]
        %v2647 = vld [vmem:[%s300 + $0x28] sm:$0xff]
        %v2648 = vld [vmem:[%s300 + $0x30] sm:$0xff]
        %v2649 = vmul.f32 %v2643, %v1221
        %v2650 = vmul.f32 %v2644, %v1225
        %v2651 = vmul.f32 %v2645, %v1223
        %v2652 = vmul.f32 %v2646, %v1221
        %v2653 = vmul.f32 %v2647, %v1225
        %v2654 = vmul.f32 %v2648, %v1223
        %v2655 = vpack.c.bf16 %v2652, %v2649
        %v2656 = vpack.c.bf16 %v2653, %v2650
        %v2657 = vpack.c.bf16 %v2654, %v2651
        %2661 = vrot.lane.b32.xlu0 %v2655, 19
        %v2662 = vpop.permute.xlu0 %2661
        %2663 = vrot.lane.b32.xlu0 %v2656, 19
        %v2664 = vpop.permute.xlu0 %2663
        %2665 = vrot.lane.b32.xlu0 %v2657, 19
        %v2666 = vpop.permute.xlu0 %2665
        %v2667 = vsel %vm1247, %v2662, %v2664
        %v2668 = vsel %vm1247, %v2664, %v2666
        %2671 = vst [vmem:[#allocation2 + $0x3c0] sm:$0xff] %v2667
        %2672 = vst [vmem:[#allocation2 + $0x3c8] sm:$0xff] %v2668
        %v2673 = vld [vmem:[%s300] sm:$0xff]
        %v2674 = vld [vmem:[%s300 + $0x8] sm:$0xff]
        %v2675 = vld [vmem:[%s300 + $0x10] sm:$0xff]
        %v2676 = vld [vmem:[%s300 + $0x20] sm:$0xff]
        %v2677 = vld [vmem:[%s300 + $0x28] sm:$0xff]
        %v2678 = vld [vmem:[%s300 + $0x30] sm:$0xff]
        %v2679 = vpack.c.bf16 %v2676, %v2673
        %v2680 = vpack.c.bf16 %v2677, %v2674
        %v2681 = vpack.c.bf16 %v2678, %v2675
        %2685 = vrot.lane.b32.xlu0 %v2679, 16
        %v2686 = vpop.permute.xlu0 %2685
        %2687 = vrot.lane.b32.xlu0 %v2680, 16
        %v2688 = vpop.permute.xlu0 %2687
        %2689 = vrot.lane.b32.xlu0 %v2681, 16
        %v2690 = vpop.permute.xlu0 %2689
        %v2691 = vsel %vm1352, %v2686, %v2688
        %v2692 = vsel %vm1352, %v2688, %v2690
        %2695 = vst [vmem:[#allocation2 + $0x3d0] sm:$0xff] %v2691
        %2696 = vst [vmem:[#allocation2 + $0x3d8] sm:$0xff] %v2692
        %v2697 = vld [vmem:[%s300] sm:$0xff]
        %v2698 = vld [vmem:[%s300 + $0x8] sm:$0xff]
        %v2699 = vld [vmem:[%s300 + $0x10] sm:$0xff]
        %v2700 = vld [vmem:[%s300 + $0x20] sm:$0xff]
        %v2701 = vld [vmem:[%s300 + $0x28] sm:$0xff]
        %v2702 = vld [vmem:[%s300 + $0x30] sm:$0xff]
        %v2703 = vmul.f32 %v2697, %v1446
        %v2704 = vmul.f32 %v2698, %v1450
        %v2705 = vmul.f32 %v2699, %v1448
        %v2706 = vmul.f32 %v2700, %v1446
        %v2707 = vmul.f32 %v2701, %v1450
        %v2708 = vmul.f32 %v2702, %v1448
        %v2709 = vpack.c.bf16 %v2706, %v2703
        %v2710 = vpack.c.bf16 %v2707, %v2704
        %v2711 = vpack.c.bf16 %v2708, %v2705
        %2715 = vrot.lane.b32.xlu0 %v2709, 13
        %v2716 = vpop.permute.xlu0 %2715
        %2717 = vrot.lane.b32.xlu0 %v2710, 13
        %v2718 = vpop.permute.xlu0 %2717
        %2719 = vrot.lane.b32.xlu0 %v2711, 13
        %v2720 = vpop.permute.xlu0 %2719
        %v2721 = vsel %vm1472, %v2716, %v2718
        %v2722 = vsel %vm1472, %v2718, %v2720
        %2725 = vst [vmem:[#allocation2 + $0x3e0] sm:$0xff] %v2721
        %2726 = vst [vmem:[#allocation2 + $0x3e8] sm:$0xff] %v2722
        %v2727 = vld [vmem:[%s300] sm:$0xff]
        %v2728 = vld [vmem:[%s300 + $0x8] sm:$0xff]
        %v2729 = vld [vmem:[%s300 + $0x10] sm:$0xff]
        %v2730 = vld [vmem:[%s300 + $0x20] sm:$0xff]
        %v2731 = vld [vmem:[%s300 + $0x28] sm:$0xff]
        %v2732 = vld [vmem:[%s300 + $0x30] sm:$0xff]
        %2733 = vrot.lane.b32.xlu0 %v2400, 118
        %v2734 = vpop.permute.xlu0 %2733
        %2735 = vrot.lane.b32.xlu0 %v2404, 118
        %v2736 = vpop.permute.xlu0 %2735
        %vm2737 = vcmask 965632
        %v2738 = vsel %vm2737, %v2734, %v2736
        %v2742 = vmul.f32 %v2727, %v2734
        %v2743 = vmul.f32 %v2728, %v2738
        %v2744 = vmul.f32 %v2729, %v2736
        %v2745 = vmul.f32 %v2730, %v2734
        %v2746 = vmul.f32 %v2731, %v2738
        %v2747 = vmul.f32 %v2732, %v2736
        %v2748 = vpack.c.bf16 %v2745, %v2742
        %v2749 = vpack.c.bf16 %v2746, %v2743
        %v2750 = vpack.c.bf16 %v2747, %v2744
        %2754 = vrot.lane.b32.xlu0 %v2748, 10
        %v2755 = vpop.permute.xlu0 %2754
        %2756 = vrot.lane.b32.xlu0 %v2749, 10
        %v2757 = vpop.permute.xlu0 %2756
        %2758 = vrot.lane.b32.xlu0 %v2750, 10
        %v2759 = vpop.permute.xlu0 %2758
        %vm2760 = vcmask 80896
        %v2761 = vsel %vm2760, %v2755, %v2757
        %v2762 = vsel %vm2760, %v2757, %v2759
        %2765 = vst [vmem:[#allocation2 + $0x3f0] sm:$0xff] %v2761
        %2766 = vst [vmem:[#allocation2 + $0x3f8] sm:$0xff] %v2762
        %v2767 = vld [vmem:[%s300 + $0x8] sm:$0xff]
        %v2768 = vld [vmem:[%s300 + $0x10] sm:$0xff]
        %v2769 = vld [vmem:[%s300 + $0x18] sm:$0xff]
        %v2770 = vld [vmem:[%s300 + $0x28] sm:$0xff]
        %v2771 = vld [vmem:[%s300 + $0x30] sm:$0xff]
        %v2772 = vld [vmem:[%s300 + $0x38] sm:$0xff]
        %2773 = vrot.lane.b32.xlu0 %v2267, 26
        %v2774 = vpop.permute.xlu0 %2773
        %2775 = vrot.lane.b32.xlu0 %v2271, 26
        %v2776 = vpop.permute.xlu0 %2775
        %vm2777 = vcmask 211968
        %v2778 = vsel %vm2777, %v2774, %v2776
        %v2782 = vmul.f32 %v2767, %v2774
        %v2783 = vmul.f32 %v2768, %v2778
        %v2784 = vmul.f32 %v2769, %v2776
        %v2785 = vmul.f32 %v2770, %v2774
        %v2786 = vmul.f32 %v2771, %v2778
        %v2787 = vmul.f32 %v2772, %v2776
        %v2788 = vpack.c.bf16 %v2785, %v2782
        %v2789 = vpack.c.bf16 %v2786, %v2783
        %v2790 = vpack.c.bf16 %v2787, %v2784
        %2794 = vrot.lane.b32.xlu0 %v2788, 102
        %v2795 = vpop.permute.xlu0 %2794
        %2796 = vrot.lane.b32.xlu0 %v2789, 102
        %v2797 = vpop.permute.xlu0 %2796
        %2798 = vrot.lane.b32.xlu0 %v2790, 102
        %v2799 = vpop.permute.xlu0 %2798
        %vm2800 = vcmask 834560
        %v2801 = vsel %vm2800, %v2795, %v2797
        %v2802 = vsel %vm2800, %v2797, %v2799
        %2805 = vst [vmem:[#allocation2 + $0x400] sm:$0xff] %v2801
        %2806 = vst [vmem:[#allocation2 + $0x408] sm:$0xff] %v2802
        %v2807 = vld [vmem:[%s300 + $0x8] sm:$0xff]
        %v2808 = vld [vmem:[%s300 + $0x10] sm:$0xff]
        %v2809 = vld [vmem:[%s300 + $0x18] sm:$0xff]
        %v2810 = vld [vmem:[%s300 + $0x28] sm:$0xff]
        %v2811 = vld [vmem:[%s300 + $0x30] sm:$0xff]
        %v2812 = vld [vmem:[%s300 + $0x38] sm:$0xff]
        %v2813 = vmul.f32 %v2807, %v1999
        %v2814 = vmul.f32 %v2808, %v2003
        %v2815 = vmul.f32 %v2809, %v2001
        %v2816 = vmul.f32 %v2810, %v1999
        %v2817 = vmul.f32 %v2811, %v2003
        %v2818 = vmul.f32 %v2812, %v2001
        %v2819 = vpack.c.bf16 %v2816, %v2813
        %v2820 = vpack.c.bf16 %v2817, %v2814
        %v2821 = vpack.c.bf16 %v2818, %v2815
        %2825 = vrot.lane.b32.xlu0 %v2819, 99
        %v2826 = vpop.permute.xlu0 %2825
        %2827 = vrot.lane.b32.xlu0 %v2820, 99
        %v2828 = vpop.permute.xlu0 %2827
        %2829 = vrot.lane.b32.xlu0 %v2821, 99
        %v2830 = vpop.permute.xlu0 %2829
        %v2831 = vsel %vm2025, %v2826, %v2828
        %v2832 = vsel %vm2025, %v2828, %v2830
        %2835 = vst [vmem:[#allocation2 + $0x410] sm:$0xff] %v2831
        %2836 = vst [vmem:[#allocation2 + $0x418] sm:$0xff] %v2832
        %v2837 = vld [vmem:[%s300 + $0x8] sm:$0xff]
        %v2838 = vld [vmem:[%s300 + $0x10] sm:$0xff]
        %v2839 = vld [vmem:[%s300 + $0x18] sm:$0xff]
        %v2840 = vld [vmem:[%s300 + $0x28] sm:$0xff]
        %v2841 = vld [vmem:[%s300 + $0x30] sm:$0xff]
        %v2842 = vld [vmem:[%s300 + $0x38] sm:$0xff]
        %v2843 = vpack.c.bf16 %v2840, %v2837
        %v2844 = vpack.c.bf16 %v2841, %v2838
        %v2845 = vpack.c.bf16 %v2842, %v2839
        %2849 = vrot.lane.b32.xlu0 %v2843, 96
        %v2850 = vpop.permute.xlu0 %2849
        %2851 = vrot.lane.b32.xlu0 %v2844, 96
        %v2852 = vpop.permute.xlu0 %2851
        %2853 = vrot.lane.b32.xlu0 %v2845, 96
        %v2854 = vpop.permute.xlu0 %2853
        %v2855 = vsel %vm2130, %v2850, %v2852
        %v2856 = vsel %vm2130, %v2852, %v2854
        %2859 = vst [vmem:[#allocation2 + $0x420] sm:$0xff] %v2855
        %2860 = vst [vmem:[#allocation2 + $0x428] sm:$0xff] %v2856
        %v2861 = vld [vmem:[%s300 + $0x8] sm:$0xff]
        %v2862 = vld [vmem:[%s300 + $0x10] sm:$0xff]
        %v2863 = vld [vmem:[%s300 + $0x18] sm:$0xff]
        %v2864 = vld [vmem:[%s300 + $0x28] sm:$0xff]
        %v2865 = vld [vmem:[%s300 + $0x30] sm:$0xff]
        %v2866 = vld [vmem:[%s300 + $0x38] sm:$0xff]
        %v2867 = vmul.f32 %v2861, %v2224
        %v2868 = vmul.f32 %v2862, %v2228
        %v2869 = vmul.f32 %v2863, %v2226
        %v2870 = vmul.f32 %v2864, %v2224
        %v2871 = vmul.f32 %v2865, %v2228
        %v2872 = vmul.f32 %v2866, %v2226
        %v2873 = vpack.c.bf16 %v2870, %v2867
        %v2874 = vpack.c.bf16 %v2871, %v2868
        %v2875 = vpack.c.bf16 %v2872, %v2869
        %2879 = vrot.lane.b32.xlu0 %v2873, 93
        %v2880 = vpop.permute.xlu0 %2879
        %2881 = vrot.lane.b32.xlu0 %v2874, 93
        %v2882 = vpop.permute.xlu0 %2881
        %2883 = vrot.lane.b32.xlu0 %v2875, 93
        %v2884 = vpop.permute.xlu0 %2883
        %v2885 = vsel %vm2250, %v2880, %v2882
        %v2886 = vsel %vm2250, %v2882, %v2884
        %2889 = vst [vmem:[#allocation2 + $0x430] sm:$0xff] %v2885
        %2890 = vst [vmem:[#allocation2 + $0x438] sm:$0xff] %v2886
        %v2891 = vld [vmem:[%s300 + $0x8] sm:$0xff]
        %v2892 = vld [vmem:[%s300 + $0x10] sm:$0xff]
        %v2893 = vld [vmem:[%s300 + $0x18] sm:$0xff]
        %v2894 = vld [vmem:[%s300 + $0x28] sm:$0xff]
        %v2895 = vld [vmem:[%s300 + $0x30] sm:$0xff]
        %v2896 = vld [vmem:[%s300 + $0x38] sm:$0xff]
        %2897 = vrot.lane.b32.xlu0 %v2400, 38
        %v2898 = vpop.permute.xlu0 %2897
        %2899 = vrot.lane.b32.xlu0 %v2404, 38
        %v2900 = vpop.permute.xlu0 %2899
        %vm2901 = vcmask 310272
        %v2902 = vsel %vm2901, %v2898, %v2900
        %v2906 = vmul.f32 %v2891, %v2898
        %v2907 = vmul.f32 %v2892, %v2902
        %v2908 = vmul.f32 %v2893, %v2900
        %v2909 = vmul.f32 %v2894, %v2898
        %v2910 = vmul.f32 %v2895, %v2902
        %v2911 = vmul.f32 %v2896, %v2900
        %v2912 = vpack.c.bf16 %v2909, %v2906
        %v2913 = vpack.c.bf16 %v2910, %v2907
        %v2914 = vpack.c.bf16 %v2911, %v2908
        %2918 = vrot.lane.b32.xlu0 %v2912, 90
        %v2919 = vpop.permute.xlu0 %2918
        %2920 = vrot.lane.b32.xlu0 %v2913, 90
        %v2921 = vpop.permute.xlu0 %2920
        %2922 = vrot.lane.b32.xlu0 %v2914, 90
        %v2923 = vpop.permute.xlu0 %2922
        %vm2924 = vcmask 736256
        %v2925 = vsel %vm2924, %v2919, %v2921
        %v2926 = vsel %vm2924, %v2921, %v2923
        %2929 = vst [vmem:[#allocation2 + $0x440] sm:$0xff] %v2925
        %2930 = vst [vmem:[#allocation2 + $0x448] sm:$0xff] %v2926
        %v2931 = vld [vmem:[%s300 + $0x8] sm:$0xff]
        %v2932 = vld [vmem:[%s300 + $0x10] sm:$0xff]
        %v2933 = vld [vmem:[%s300 + $0x18] sm:$0xff]
        %v2934 = vld [vmem:[%s300 + $0x28] sm:$0xff]
        %v2935 = vld [vmem:[%s300 + $0x30] sm:$0xff]
        %v2936 = vld [vmem:[%s300 + $0x38] sm:$0xff]
        %2937 = vrot.lane.b32.xlu0 %v2267, 74
        %v2938 = vpop.permute.xlu0 %2937
        %2939 = vrot.lane.b32.xlu0 %v2271, 74
        %v2940 = vpop.permute.xlu0 %2939
        %vm2941 = vcmask 605184
        %v2942 = vsel %vm2941, %v2938, %v2940
        %v2946 = vmul.f32 %v2931, %v2938
        %v2947 = vmul.f32 %v2932, %v2942
        %v2948 = vmul.f32 %v2933, %v2940
        %v2949 = vmul.f32 %v2934, %v2938
        %v2950 = vmul.f32 %v2935, %v2942
        %v2951 = vmul.f32 %v2936, %v2940
        %v2952 = vpack.c.bf16 %v2949, %v2946
        %v2953 = vpack.c.bf16 %v2950, %v2947
        %v2954 = vpack.c.bf16 %v2951, %v2948
        %2958 = vrot.lane.b32.xlu0 %v2952, 54
        %v2959 = vpop.permute.xlu0 %2958
        %2960 = vrot.lane.b32.xlu0 %v2953, 54
        %v2961 = vpop.permute.xlu0 %2960
        %2962 = vrot.lane.b32.xlu0 %v2954, 54
        %v2963 = vpop.permute.xlu0 %2962
        %vm2964 = vcmask 441344
        %v2965 = vsel %vm2964, %v2959, %v2961
        %v2966 = vsel %vm2964, %v2961, %v2963
        %2969 = vst [vmem:[#allocation2 + $0x450] sm:$0xff] %v2965
        %2970 = vst [vmem:[#allocation2 + $0x458] sm:$0xff] %v2966
        %v2971 = vld [vmem:[%s300 + $0x8] sm:$0xff]
        %v2972 = vld [vmem:[%s300 + $0x10] sm:$0xff]
        %v2973 = vld [vmem:[%s300 + $0x18] sm:$0xff]
        %v2974 = vld [vmem:[%s300 + $0x28] sm:$0xff]
        %v2975 = vld [vmem:[%s300 + $0x30] sm:$0xff]
        %v2976 = vld [vmem:[%s300 + $0x38] sm:$0xff]
        %v2977 = vmul.f32 %v2971, %v691
        %v2978 = vmul.f32 %v2972, %v695
        %v2979 = vmul.f32 %v2973, %v693
        %v2980 = vmul.f32 %v2974, %v691
        %v2981 = vmul.f32 %v2975, %v695
        %v2982 = vmul.f32 %v2976, %v693
        %v2983 = vpack.c.bf16 %v2980, %v2977
        %v2984 = vpack.c.bf16 %v2981, %v2978
        %v2985 = vpack.c.bf16 %v2982, %v2979
        %2989 = vrot.lane.b32.xlu0 %v2983, 51
        %v2990 = vpop.permute.xlu0 %2989
        %2991 = vrot.lane.b32.xlu0 %v2984, 51
        %v2992 = vpop.permute.xlu0 %2991
        %2993 = vrot.lane.b32.xlu0 %v2985, 51
        %v2994 = vpop.permute.xlu0 %2993
        %v2995 = vsel %vm717, %v2990, %v2992
        %v2996 = vsel %vm717, %v2992, %v2994
        %2999 = vst [vmem:[#allocation2 + $0x460] sm:$0xff] %v2995
        %3000 = vst [vmem:[#allocation2 + $0x468] sm:$0xff] %v2996
        %v3001 = vld [vmem:[%s300 + $0x8] sm:$0xff]
        %v3002 = vld [vmem:[%s300 + $0x10] sm:$0xff]
        %v3003 = vld [vmem:[%s300 + $0x18] sm:$0xff]
        %v3004 = vld [vmem:[%s300 + $0x28] sm:$0xff]
        %v3005 = vld [vmem:[%s300 + $0x30] sm:$0xff]
        %v3006 = vld [vmem:[%s300 + $0x38] sm:$0xff]
        %v3007 = vpack.c.bf16 %v3004, %v3001
        %v3008 = vpack.c.bf16 %v3005, %v3002
        %v3009 = vpack.c.bf16 %v3006, %v3003
        %3013 = vrot.lane.b32.xlu0 %v3007, 48
        %v3014 = vpop.permute.xlu0 %3013
        %3015 = vrot.lane.b32.xlu0 %v3008, 48
        %v3016 = vpop.permute.xlu0 %3015
        %3017 = vrot.lane.b32.xlu0 %v3009, 48
        %v3018 = vpop.permute.xlu0 %3017
        %v3019 = vsel %vm822, %v3014, %v3016
        %v3020 = vsel %vm822, %v3016, %v3018
        %3023 = vst [vmem:[#allocation2 + $0x470] sm:$0xff] %v3019
        %3024 = vst [vmem:[#allocation2 + $0x478] sm:$0xff] %v3020
        %v3025 = vld [vmem:[%s300 + $0x8] sm:$0xff]
        %v3026 = vld [vmem:[%s300 + $0x10] sm:$0xff]
        %v3027 = vld [vmem:[%s300 + $0x18] sm:$0xff]
        %v3028 = vld [vmem:[%s300 + $0x28] sm:$0xff]
        %v3029 = vld [vmem:[%s300 + $0x30] sm:$0xff]
        %v3030 = vld [vmem:[%s300 + $0x38] sm:$0xff]
        %v3031 = vmul.f32 %v3025, %v916
        %v3032 = vmul.f32 %v3026, %v920
        %v3033 = vmul.f32 %v3027, %v918
        %v3034 = vmul.f32 %v3028, %v916
        %v3035 = vmul.f32 %v3029, %v920
        %v3036 = vmul.f32 %v3030, %v918
        %v3037 = vpack.c.bf16 %v3034, %v3031
        %v3038 = vpack.c.bf16 %v3035, %v3032
        %v3039 = vpack.c.bf16 %v3036, %v3033
        %3043 = vrot.lane.b32.xlu0 %v3037, 45
        %v3044 = vpop.permute.xlu0 %3043
        %3045 = vrot.lane.b32.xlu0 %v3038, 45
        %v3046 = vpop.permute.xlu0 %3045
        %3047 = vrot.lane.b32.xlu0 %v3039, 45
        %v3048 = vpop.permute.xlu0 %3047
        %v3049 = vsel %vm942, %v3044, %v3046
        %v3050 = vsel %vm942, %v3046, %v3048
        %3053 = vst [vmem:[#allocation2 + $0x480] sm:$0xff] %v3049
        %3054 = vst [vmem:[#allocation2 + $0x488] sm:$0xff] %v3050
        %v3055 = vld [vmem:[%s300 + $0x8] sm:$0xff]
        %v3056 = vld [vmem:[%s300 + $0x10] sm:$0xff]
        %v3057 = vld [vmem:[%s300 + $0x18] sm:$0xff]
        %v3058 = vld [vmem:[%s300 + $0x28] sm:$0xff]
        %v3059 = vld [vmem:[%s300 + $0x30] sm:$0xff]
        %v3060 = vld [vmem:[%s300 + $0x38] sm:$0xff]
        %3061 = vrot.lane.b32.xlu0 %v2400, 86
        %v3062 = vpop.permute.xlu0 %3061
        %3063 = vrot.lane.b32.xlu0 %v2404, 86
        %v3064 = vpop.permute.xlu0 %3063
        %vm3065 = vcmask 703488
        %v3066 = vsel %vm3065, %v3062, %v3064
        %v3070 = vmul.f32 %v3055, %v3062
        %v3071 = vmul.f32 %v3056, %v3066
        %v3072 = vmul.f32 %v3057, %v3064
        %v3073 = vmul.f32 %v3058, %v3062
        %v3074 = vmul.f32 %v3059, %v3066
        %v3075 = vmul.f32 %v3060, %v3064
        %v3076 = vpack.c.bf16 %v3073, %v3070
        %v3077 = vpack.c.bf16 %v3074, %v3071
        %v3078 = vpack.c.bf16 %v3075, %v3072
        %3082 = vrot.lane.b32.xlu0 %v3076, 42
        %v3083 = vpop.permute.xlu0 %3082
        %3084 = vrot.lane.b32.xlu0 %v3077, 42
        %v3085 = vpop.permute.xlu0 %3084
        %3086 = vrot.lane.b32.xlu0 %v3078, 42
        %v3087 = vpop.permute.xlu0 %3086
        %vm3088 = vcmask 343040
        %v3089 = vsel %vm3088, %v3083, %v3085
        %v3090 = vsel %vm3088, %v3085, %v3087
        %3093 = vst [vmem:[#allocation2 + $0x490] sm:$0xff] %v3089
        %3094 = vst [vmem:[#allocation2 + $0x498] sm:$0xff] %v3090
        %v3095 = vld [vmem:[%s4] sm:$0xff]
        %v3096 = vld [vmem:[%s4 + $0x8] sm:$0xff]
        %v3097 = vld [vmem:[#allocation8] sm:$0xff]
        %v3098 = vld [vmem:[#allocation8 + $0x8] sm:$0xff]
        %v3099 = vld [vmem:[#allocation8 + $0x10] sm:$0xff]
        %v3100 = vld [vmem:[#allocation8 + $0x18] sm:$0xff]
        %v3101 = vld [vmem:[#allocation8 + $0x20] sm:$0xff]
        %v3102 = vld [vmem:[#allocation8 + $0x28] sm:$0xff]
        %v3103 = vld [vmem:[#allocation8 + $0x30] sm:$0xff]
        %v3104 = vld [vmem:[#allocation8 + $0x38] sm:$0xff]
        %v3105 = vld [vmem:[#allocation8 + $0x40] sm:$0xff]
        %v3106 = vld [vmem:[#allocation8 + $0x48] sm:$0xff]
        %v3107 = vld [vmem:[#allocation2] sm:$0xff]
        %v3108 = vld [vmem:[#allocation2 + $0x8] sm:$0xff]
        %v3109 = vld [vmem:[#allocation2 + $0x10] sm:$0xff]
        %v3110 = vld [vmem:[#allocation2 + $0x18] sm:$0xff]
        %v3111 = vld [vmem:[#allocation2 + $0x20] sm:$0xff]
        %v3112 = vld [vmem:[#allocation2 + $0x28] sm:$0xff]
        %v3113 = vld [vmem:[#allocation2 + $0x30] sm:$0xff]
        %v3114 = vld [vmem:[#allocation2 + $0x38] sm:$0xff]
        %v3115 = vld [vmem:[#allocation2 + $0x40] sm:$0xff]
        %v3116 = vld [vmem:[#allocation2 + $0x48] sm:$0xff]
        %v3117 = vld [vmem:[#allocation2 + $0x50] sm:$0xff]
        %v3118 = vld [vmem:[#allocation2 + $0x58] sm:$0xff]
        %v3119 = vld [vmem:[#allocation2 + $0x60] sm:$0xff]
        %v3120 = vld [vmem:[#allocation2 + $0x68] sm:$0xff]
        %v3121 = vld [vmem:[#allocation2 + $0x70] sm:$0xff]
        %v3122 = vld [vmem:[#allocation2 + $0x78] sm:$0xff]
        %v3123 = vld [vmem:[#allocation2 + $0x80] sm:$0xff]
        %v3124 = vld [vmem:[#allocation2 + $0x88] sm:$0xff]
        %v3125 = vld [vmem:[#allocation2 + $0x90] sm:$0xff]
        %v3126 = vld [vmem:[#allocation2 + $0x98] sm:$0xff]
        %v3127 = vld [vmem:[#allocation2 + $0xa0] sm:$0xff]
        %v3128 = vld [vmem:[#allocation2 + $0xa8] sm:$0xff]
        %v3129 = vld [vmem:[#allocation2 + $0xb0] sm:$0xff]
        %v3130 = vld [vmem:[#allocation2 + $0xb8] sm:$0xff]
        %v3131 = vld [vmem:[#allocation2 + $0xc0] sm:$0xff]
        %v3132 = vld [vmem:[#allocation2 + $0xc8] sm:$0xff]
        %v3133 = vld [vmem:[#allocation2 + $0xd0] sm:$0xff]
        %v3134 = vld [vmem:[#allocation2 + $0xd8] sm:$0xff]
        %v3135 = vld [vmem:[#allocation2 + $0xe0] sm:$0xff]
        %v3136 = vld [vmem:[#allocation2 + $0xe8] sm:$0xff]
        %v3137 = vld [vmem:[#allocation2 + $0xf0] sm:$0xff]
        %v3138 = vld [vmem:[#allocation2 + $0xf8] sm:$0xff]
        %v3139 = vld [vmem:[#allocation2 + $0x100] sm:$0xff]
        %v3140 = vld [vmem:[#allocation2 + $0x108] sm:$0xff]
        %v3141 = vld [vmem:[#allocation2 + $0x110] sm:$0xff]
        %v3142 = vld [vmem:[#allocation2 + $0x118] sm:$0xff]
        %v3143 = vld [vmem:[#allocation2 + $0x120] sm:$0xff]
        %v3144 = vld [vmem:[#allocation2 + $0x128] sm:$0xff]
        %v3145 = vld [vmem:[#allocation2 + $0x130] sm:$0xff]
        %v3146 = vld [vmem:[#allocation2 + $0x138] sm:$0xff]
        %v3147 = vld [vmem:[#allocation2 + $0x140] sm:$0xff]
        %v3148 = vld [vmem:[#allocation2 + $0x148] sm:$0xff]
        %v3149 = vld [vmem:[#allocation2 + $0x150] sm:$0xff]
        %v3150 = vld [vmem:[#allocation2 + $0x158] sm:$0xff]
        %v3151 = vld [vmem:[#allocation2 + $0x160] sm:$0xff]
        %v3152 = vld [vmem:[#allocation2 + $0x168] sm:$0xff]
        %v3153 = vld [vmem:[#allocation2 + $0x170] sm:$0xff]
        %v3154 = vld [vmem:[#allocation2 + $0x178] sm:$0xff]
        %v3155 = vld [vmem:[#allocation2 + $0x180] sm:$0xff]
        %v3156 = vld [vmem:[#allocation2 + $0x188] sm:$0xff]
        %v3157 = vld [vmem:[#allocation2 + $0x190] sm:$0xff]
        %v3158 = vld [vmem:[#allocation2 + $0x198] sm:$0xff]
        %v3159 = vld [vmem:[#allocation2 + $0x1a0] sm:$0xff]
        %v3160 = vld [vmem:[#allocation2 + $0x1a8] sm:$0xff]
        %v3161 = vld [vmem:[#allocation2 + $0x1b0] sm:$0xff]
        %v3162 = vld [vmem:[#allocation2 + $0x1b8] sm:$0xff]
        %v3163 = vld [vmem:[#allocation2 + $0x1c0] sm:$0xff]
        %v3164 = vld [vmem:[#allocation2 + $0x1c8] sm:$0xff]
        %v3165 = vld [vmem:[#allocation2 + $0x1d0] sm:$0xff]
        %v3166 = vld [vmem:[#allocation2 + $0x1d8] sm:$0xff]
        %v3167 = vld [vmem:[#allocation2 + $0x1e0] sm:$0xff]
        %v3168 = vld [vmem:[#allocation2 + $0x1e8] sm:$0xff]
        %v3169 = vld [vmem:[#allocation2 + $0x1f0] sm:$0xff]
        %v3170 = vld [vmem:[#allocation2 + $0x1f8] sm:$0xff]
        %v3171 = vld [vmem:[#allocation2 + $0x200] sm:$0xff]
        %v3172 = vld [vmem:[#allocation2 + $0x208] sm:$0xff]
        %v3173 = vld [vmem:[#allocation2 + $0x210] sm:$0xff]
        %v3174 = vld [vmem:[#allocation2 + $0x218] sm:$0xff]
        %v3175 = vld [vmem:[#allocation2 + $0x220] sm:$0xff]
        %v3176 = vld [vmem:[#allocation2 + $0x228] sm:$0xff]
        %v3177 = vld [vmem:[#allocation2 + $0x230] sm:$0xff]
        %v3178 = vld [vmem:[#allocation2 + $0x238] sm:$0xff]
        %v3179 = vld [vmem:[#allocation2 + $0x240] sm:$0xff]
        %v3180 = vld [vmem:[#allocation2 + $0x248] sm:$0xff]
        %v3181 = vld [vmem:[#allocation2 + $0x250] sm:$0xff]
        %v3182 = vld [vmem:[#allocation2 + $0x258] sm:$0xff]
        %v3183 = vld [vmem:[#allocation2 + $0x260] sm:$0xff]
        %v3184 = vld [vmem:[#allocation2 + $0x268] sm:$0xff]
        %v3185 = vld [vmem:[#allocation2 + $0x270] sm:$0xff]
        %v3186 = vld [vmem:[#allocation2 + $0x278] sm:$0xff]
        %v3187 = vld [vmem:[#allocation2 + $0x280] sm:$0xff]
        %v3188 = vld [vmem:[#allocation2 + $0x288] sm:$0xff]
        %v3189 = vld [vmem:[#allocation2 + $0x290] sm:$0xff]
        %v3190 = vld [vmem:[#allocation2 + $0x298] sm:$0xff]
        %v3191 = vld [vmem:[#allocation2 + $0x2a0] sm:$0xff]
        %v3192 = vld [vmem:[#allocation2 + $0x2a8] sm:$0xff]
        %v3193 = vld [vmem:[#allocation2 + $0x2b0] sm:$0xff]
        %v3194 = vld [vmem:[#allocation2 + $0x2b8] sm:$0xff]
        %v3195 = vld [vmem:[#allocation2 + $0x2c0] sm:$0xff]
        %v3196 = vld [vmem:[#allocation2 + $0x2c8] sm:$0xff]
        %v3197 = vld [vmem:[#allocation2 + $0x2d0] sm:$0xff]
        %v3198 = vld [vmem:[#allocation2 + $0x2d8] sm:$0xff]
        %v3199 = vld [vmem:[#allocation2 + $0x2e0] sm:$0xff]
        %v3200 = vld [vmem:[#allocation2 + $0x2e8] sm:$0xff]
        %v3201 = vld [vmem:[#allocation2 + $0x2f0] sm:$0xff]
        %v3202 = vld [vmem:[#allocation2 + $0x2f8] sm:$0xff]
        %v3203 = vld [vmem:[#allocation2 + $0x300] sm:$0xff]
        %v3204 = vld [vmem:[#allocation2 + $0x308] sm:$0xff]
        %v3205 = vld [vmem:[#allocation2 + $0x310] sm:$0xff]
        %v3206 = vld [vmem:[#allocation2 + $0x318] sm:$0xff]
        %v3207 = vld [vmem:[#allocation2 + $0x320] sm:$0xff]
        %v3208 = vld [vmem:[#allocation2 + $0x328] sm:$0xff]
        %v3209 = vld [vmem:[#allocation2 + $0x330] sm:$0xff]
        %v3210 = vld [vmem:[#allocation2 + $0x338] sm:$0xff]
        %v3211 = vld [vmem:[#allocation2 + $0x340] sm:$0xff]
        %v3212 = vld [vmem:[#allocation2 + $0x348] sm:$0xff]
        %v3213 = vld [vmem:[#allocation2 + $0x350] sm:$0xff]
        %v3214 = vld [vmem:[#allocation2 + $0x358] sm:$0xff]
        %v3215 = vld [vmem:[#allocation2 + $0x360] sm:$0xff]
        %v3216 = vld [vmem:[#allocation2 + $0x368] sm:$0xff]
        %v3217 = vld [vmem:[#allocation2 + $0x370] sm:$0xff]
        %v3218 = vld [vmem:[#allocation2 + $0x378] sm:$0xff]
        %v3219 = vld [vmem:[#allocation2 + $0x380] sm:$0xff]
        %v3220 = vld [vmem:[#allocation2 + $0x388] sm:$0xff]
        %v3221 = vld [vmem:[#allocation2 + $0x390] sm:$0xff]
        %v3222 = vld [vmem:[#allocation2 + $0x398] sm:$0xff]
        %v3223 = vld [vmem:[#allocation2 + $0x3a0] sm:$0xff]
        %v3224 = vld [vmem:[#allocation2 + $0x3a8] sm:$0xff]
        %v3225 = vld [vmem:[#allocation2 + $0x3b0] sm:$0xff]
        %v3226 = vld [vmem:[#allocation2 + $0x3b8] sm:$0xff]
        %v3227 = vld [vmem:[#allocation2 + $0x3c0] sm:$0xff]
        %v3228 = vld [vmem:[#allocation2 + $0x3c8] sm:$0xff]
        %v3229 = vld [vmem:[#allocation2 + $0x3d0] sm:$0xff]
        %v3230 = vld [vmem:[#allocation2 + $0x3d8] sm:$0xff]
        %v3231 = vld [vmem:[#allocation2 + $0x3e0] sm:$0xff]
        %v3232 = vld [vmem:[#allocation2 + $0x3e8] sm:$0xff]
        %v3233 = vld [vmem:[#allocation2 + $0x3f0] sm:$0xff]
        %v3234 = vld [vmem:[#allocation2 + $0x3f8] sm:$0xff]
        %v3235 = vld [vmem:[#allocation2 + $0x400] sm:$0xff]
        %v3236 = vld [vmem:[#allocation2 + $0x408] sm:$0xff]
        %v3237 = vld [vmem:[#allocation2 + $0x410] sm:$0xff]
        %v3238 = vld [vmem:[#allocation2 + $0x418] sm:$0xff]
        %v3239 = vld [vmem:[#allocation2 + $0x420] sm:$0xff]
        %v3240 = vld [vmem:[#allocation2 + $0x428] sm:$0xff]
        %v3241 = vld [vmem:[#allocation2 + $0x430] sm:$0xff]
        %v3242 = vld [vmem:[#allocation2 + $0x438] sm:$0xff]
        %v3243 = vld [vmem:[#allocation2 + $0x440] sm:$0xff]
        %v3244 = vld [vmem:[#allocation2 + $0x448] sm:$0xff]
        %v3245 = vld [vmem:[#allocation2 + $0x450] sm:$0xff]
        %v3246 = vld [vmem:[#allocation2 + $0x458] sm:$0xff]
        %v3247 = vld [vmem:[#allocation2 + $0x460] sm:$0xff]
        %v3248 = vld [vmem:[#allocation2 + $0x468] sm:$0xff]
        %v3249 = vld [vmem:[#allocation2 + $0x470] sm:$0xff]
        %v3250 = vld [vmem:[#allocation2 + $0x478] sm:$0xff]
        %v3251 = vld [vmem:[#allocation2 + $0x480] sm:$0xff]
        %v3252 = vld [vmem:[#allocation2 + $0x488] sm:$0xff]
        %v3253 = vld [vmem:[#allocation2 + $0x490] sm:$0xff]
        %v3254 = vld [vmem:[#allocation2 + $0x498] sm:$0xff]
        %3256 = vset.pattern.permute.xlu0 0
        %3257 = vperm.xlu0 %3256, %v3095
        %v3258 = vpop.permute.xlu0 %3257
        %3261 = vset.pattern.permute.xlu0 0
        %3262 = vperm.xlu0 %3261, %v3096
        %v3263 = vpop.permute.xlu0 %3262
        %v3275 = vunpack.c.l.b16 %v3097
        %v3276 = vunpack.c.h.b16 %v3097
        %v3277 = vunpack.c.l.b16 %v3098
        %v3278 = vunpack.c.h.b16 %v3098
        %v3279 = vunpack.c.l.b16 %v3099
        %v3280 = vunpack.c.h.b16 %v3099
        %v3281 = vunpack.c.l.b16 %v3100
        %v3282 = vunpack.c.h.b16 %v3100
        %v3283 = vunpack.c.l.b16 %v3101
        %v3284 = vunpack.c.h.b16 %v3101
        %v3285 = vunpack.c.l.b16 %v3102
        %v3286 = vunpack.c.h.b16 %v3102
        %v3287 = vunpack.c.l.b16 %v3103
        %v3288 = vunpack.c.h.b16 %v3103
        %v3289 = vunpack.c.l.b16 %v3104
        %v3290 = vunpack.c.h.b16 %v3104
        %v3291 = vunpack.c.l.b16 %v3105
        %v3292 = vunpack.c.h.b16 %v3105
        %v3293 = vunpack.c.l.b16 %v3106
        %v3294 = vunpack.c.h.b16 %v3106
        %v3295 = vpack.c.b16 %v3285, %v3275
        %v3296 = vpack.c.b16 %v3286, %v3276
        %v3297 = vpack.c.b16 %v3287, %v3277
        %v3298 = vpack.c.b16 %v3288, %v3278
        %v3299 = vpack.c.b16 %v3289, %v3279
        %v3300 = vpack.c.b16 %v3290, %v3280
        %v3301 = vpack.c.b16 %v3291, %v3281
        %v3302 = vpack.c.b16 %v3292, %v3282
        %v3303 = vpack.c.b16 %v3293, %v3283
        %v3304 = vpack.c.b16 %v3294, %v3284
        %vm3314 = vcmask 261120
        %v3316 = vsel %vm3314, %v3304, 0
        %3318 = vmatprep.subr.bf16.mxu0 %v3108
        %3319 = vmatpush1.bf16.msra.mxu0 %v3107
        %3320 = vmatprep.subr.bf16.mxu0 %v3110
        %3321 = vmatpush1.bf16.msra.mxu0 %v3109
        %3322 = vmatprep.subr.bf16.mxu0 %v3112
        %3323 = vmatpush1.bf16.msra.mxu0 %v3111
        %3324 = vmatprep.subr.bf16.mxu0 %v3114
        %3325 = vmatpush1.bf16.msra.mxu0 %v3113
        %3326 = vmatprep.subr.bf16.mxu0 %v3116
        %3327 = vmatpush1.bf16.msra.mxu0 %v3115
        %3328 = vmatprep.subr.bf16.mxu0 %v3118
        %3329 = vmatpush1.bf16.msra.mxu0 %v3117
        %3330 = vmatprep.subr.bf16.mxu0 %v3120
        %3331 = vmatpush1.bf16.msra.mxu0 %v3119
        %3332 = vmatprep.subr.bf16.mxu0 %v3122
        %3333 = vmatpush1.bf16.msra.mxu0 %v3121
        %3334 = vmatprep.subr.bf16.mxu0 %v3124
        %3335 = vmatpush1.bf16.msra.mxu0 %v3123
        %3336 = vmatprep.subr.bf16.mxu0 %v3126
        %3337 = vmatpush1.bf16.msra.mxu0 %v3125
        %3338 = vmatprep.subr.bf16.mxu0 %v3128
        %3339 = vmatpush1.bf16.msra.mxu0 %v3127
        %3340 = vmatprep.subr.bf16.mxu0 %v3130
        %3341 = vmatpush1.bf16.msra.mxu0 %v3129
        %3342 = vmatprep.subr.bf16.mxu0 %v3132
        %3343 = vmatpush1.bf16.msra.mxu0 %v3131
        %3344 = vmatprep.subr.bf16.mxu0 %v3134
        %3345 = vmatpush1.bf16.msra.mxu0 %v3133
        %3346 = vmatprep.subr.bf16.mxu0 %v3136
        %3347 = vmatpush1.bf16.msra.mxu0 %v3135
        %3348 = vmatprep.subr.bf16.mxu0 %v3138
        %3349 = vmatpush1.bf16.msra.mxu0 %v3137
        %3350 = vmatprep.mubr.bf16.mxu0 %v3296
        %3351 = vmatmul.mubr.bf16.gmra.mrb[0].mxu0 %v3295
        %v3352 = vpop.f32.mrb[0].mxu0
        %v3353 = vadd.f32 %v3258, %v3352
        %v3354 = vpop.f32.mrb[0].mxu0
        %v3355 = vadd.f32 %v3258, %v3354
        %v3356 = vpop.f32.mrb[0].mxu0
        %v3357 = vadd.f32 %v3263, %v3356
        %v3358 = vpop.f32.mrb[0].mxu0
        %v3359 = vadd.f32 %v3263, %v3358
        %3360 = vdwg.mxu0
        %3361 = vmatprep.subr.bf16.mxu0 %v3140
        %3362 = vmatpush1.bf16.msra.mxu0 %v3139
        %3363 = vmatprep.subr.bf16.mxu0 %v3142
        %3364 = vmatpush1.bf16.msra.mxu0 %v3141
        %3365 = vmatprep.subr.bf16.mxu0 %v3144
        %3366 = vmatpush1.bf16.msra.mxu0 %v3143
        %3367 = vmatprep.subr.bf16.mxu0 %v3146
        %3368 = vmatpush1.bf16.msra.mxu0 %v3145
        %3369 = vmatprep.subr.bf16.mxu0 %v3148
        %3370 = vmatpush1.bf16.msra.mxu0 %v3147
        %3371 = vmatprep.subr.bf16.mxu0 %v3150
        %3372 = vmatpush1.bf16.msra.mxu0 %v3149
        %3373 = vmatprep.subr.bf16.mxu0 %v3152
        %3374 = vmatpush1.bf16.msra.mxu0 %v3151
        %3375 = vmatprep.subr.bf16.mxu0 %v3154
        %3376 = vmatpush1.bf16.msra.mxu0 %v3153
        %3377 = vmatprep.subr.bf16.mxu0 %v3156
        %3378 = vmatpush1.bf16.msra.mxu0 %v3155
        %3379 = vmatprep.subr.bf16.mxu0 %v3158
        %3380 = vmatpush1.bf16.msra.mxu0 %v3157
        %3381 = vmatprep.subr.bf16.mxu0 %v3160
        %3382 = vmatpush1.bf16.msra.mxu0 %v3159
        %3383 = vmatprep.subr.bf16.mxu0 %v3162
        %3384 = vmatpush1.bf16.msra.mxu0 %v3161
        %3385 = vmatprep.subr.bf16.mxu0 %v3164
        %3386 = vmatpush1.bf16.msra.mxu0 %v3163
        %3387 = vmatprep.subr.bf16.mxu0 %v3166
        %3388 = vmatpush1.bf16.msra.mxu0 %v3165
        %3389 = vmatprep.subr.bf16.mxu0 %v3168
        %3390 = vmatpush1.bf16.msra.mxu0 %v3167
        %3391 = vmatprep.subr.bf16.mxu0 %v3170
        %3392 = vmatpush1.bf16.msra.mxu0 %v3169
        %3393 = vmatprep.mubr.bf16.mxu0 %v3298
        %3394 = vmatmul.mubr.bf16.gmra.mrb[0].mxu0 %v3297
        %v3395 = vpop.f32.mrb[0].mxu0
        %v3396 = vadd.f32 %v3353, %v3395
        %v3397 = vpop.f32.mrb[0].mxu0
        %v3398 = vadd.f32 %v3355, %v3397
        %v3399 = vpop.f32.mrb[0].mxu0
        %v3400 = vadd.f32 %v3357, %v3399
        %v3401 = vpop.f32.mrb[0].mxu0
        %v3402 = vadd.f32 %v3359, %v3401
        %3403 = vdwg.mxu0
        %3404 = vmatprep.subr.bf16.mxu0 %v3172
        %3405 = vmatpush1.bf16.msra.mxu0 %v3171
        %3406 = vmatprep.subr.bf16.mxu0 %v3174
        %3407 = vmatpush1.bf16.msra.mxu0 %v3173
        %3408 = vmatprep.subr.bf16.mxu0 %v3176
        %3409 = vmatpush1.bf16.msra.mxu0 %v3175
        %3410 = vmatprep.subr.bf16.mxu0 %v3178
        %3411 = vmatpush1.bf16.msra.mxu0 %v3177
        %3412 = vmatprep.subr.bf16.mxu0 %v3180
        %3413 = vmatpush1.bf16.msra.mxu0 %v3179
        %3414 = vmatprep.subr.bf16.mxu0 %v3182
        %3415 = vmatpush1.bf16.msra.mxu0 %v3181
        %3416 = vmatprep.subr.bf16.mxu0 %v3184
        %3417 = vmatpush1.bf16.msra.mxu0 %v3183
        %3418 = vmatprep.subr.bf16.mxu0 %v3186
        %3419 = vmatpush1.bf16.msra.mxu0 %v3185
        %3420 = vmatprep.subr.bf16.mxu0 %v3188
        %3421 = vmatpush1.bf16.msra.mxu0 %v3187
        %3422 = vmatprep.subr.bf16.mxu0 %v3190
        %3423 = vmatpush1.bf16.msra.mxu0 %v3189
        %3424 = vmatprep.subr.bf16.mxu0 %v3192
        %3425 = vmatpush1.bf16.msra.mxu0 %v3191
        %3426 = vmatprep.subr.bf16.mxu0 %v3194
        %3427 = vmatpush1.bf16.msra.mxu0 %v3193
        %3428 = vmatprep.subr.bf16.mxu0 %v3196
        %3429 = vmatpush1.bf16.msra.mxu0 %v3195
        %3430 = vmatprep.subr.bf16.mxu0 %v3198
        %3431 = vmatpush1.bf16.msra.mxu0 %v3197
        %3432 = vmatprep.subr.bf16.mxu0 %v3200
        %3433 = vmatpush1.bf16.msra.mxu0 %v3199
        %3434 = vmatprep.subr.bf16.mxu0 %v3202
        %3435 = vmatpush1.bf16.msra.mxu0 %v3201
        %3436 = vmatprep.mubr.bf16.mxu0 %v3300
        %3437 = vmatmul.mubr.bf16.gmra.mrb[0].mxu0 %v3299
        %v3438 = vpop.f32.mrb[0].mxu0
        %v3439 = vadd.f32 %v3396, %v3438
        %v3440 = vpop.f32.mrb[0].mxu0
        %v3441 = vadd.f32 %v3398, %v3440
        %v3442 = vpop.f32.mrb[0].mxu0
        %v3443 = vadd.f32 %v3400, %v3442
        %v3444 = vpop.f32.mrb[0].mxu0
        %v3445 = vadd.f32 %v3402, %v3444
        %3446 = vdwg.mxu0
        %3447 = vmatprep.subr.bf16.mxu0 %v3204
        %3448 = vmatpush1.bf16.msra.mxu0 %v3203
        %3449 = vmatprep.subr.bf16.mxu0 %v3206
        %3450 = vmatpush1.bf16.msra.mxu0 %v3205
        %3451 = vmatprep.subr.bf16.mxu0 %v3208
        %3452 = vmatpush1.bf16.msra.mxu0 %v3207
        %3453 = vmatprep.subr.bf16.mxu0 %v3210
        %3454 = vmatpush1.bf16.msra.mxu0 %v3209
        %3455 = vmatprep.subr.bf16.mxu0 %v3212
        %3456 = vmatpush1.bf16.msra.mxu0 %v3211
        %3457 = vmatprep.subr.bf16.mxu0 %v3214
        %3458 = vmatpush1.bf16.msra.mxu0 %v3213
        %3459 = vmatprep.subr.bf16.mxu0 %v3216
        %3460 = vmatpush1.bf16.msra.mxu0 %v3215
        %3461 = vmatprep.subr.bf16.mxu0 %v3218
        %3462 = vmatpush1.bf16.msra.mxu0 %v3217
        %3463 = vmatprep.subr.bf16.mxu0 %v3220
        %3464 = vmatpush1.bf16.msra.mxu0 %v3219
        %3465 = vmatprep.subr.bf16.mxu0 %v3222
        %3466 = vmatpush1.bf16.msra.mxu0 %v3221
        %3467 = vmatprep.subr.bf16.mxu0 %v3224
        %3468 = vmatpush1.bf16.msra.mxu0 %v3223
        %3469 = vmatprep.subr.bf16.mxu0 %v3226
        %3470 = vmatpush1.bf16.msra.mxu0 %v3225
        %3471 = vmatprep.subr.bf16.mxu0 %v3228
        %3472 = vmatpush1.bf16.msra.mxu0 %v3227
        %3473 = vmatprep.subr.bf16.mxu0 %v3230
        %3474 = vmatpush1.bf16.msra.mxu0 %v3229
        %3475 = vmatprep.subr.bf16.mxu0 %v3232
        %3476 = vmatpush1.bf16.msra.mxu0 %v3231
        %3477 = vmatprep.subr.bf16.mxu0 %v3234
        %3478 = vmatpush1.bf16.msra.mxu0 %v3233
        %3479 = vmatprep.mubr.bf16.mxu0 %v3302
        %3480 = vmatmul.mubr.bf16.gmra.mrb[0].mxu0 %v3301
        %v3481 = vpop.f32.mrb[0].mxu0
        %v3482 = vadd.f32 %v3439, %v3481
        %v3483 = vpop.f32.mrb[0].mxu0
        %v3484 = vadd.f32 %v3441, %v3483
        %v3485 = vpop.f32.mrb[0].mxu0
        %v3486 = vadd.f32 %v3443, %v3485
        %v3487 = vpop.f32.mrb[0].mxu0
        %v3488 = vadd.f32 %v3445, %v3487
        %3489 = vdwg.mxu0
        %3490 = vmatprep.subr.bf16.mxu0 %v3236
        %3491 = vmatpush1.bf16.msra.mxu0 %v3235
        %3492 = vmatprep.subr.bf16.mxu0 %v3238
        %3493 = vmatpush1.bf16.msra.mxu0 %v3237
        %3494 = vmatprep.subr.bf16.mxu0 %v3240
        %3495 = vmatpush1.bf16.msra.mxu0 %v3239
        %3496 = vmatprep.subr.bf16.mxu0 %v3242
        %3497 = vmatpush1.bf16.msra.mxu0 %v3241
        %3498 = vmatprep.subr.bf16.mxu0 %v3244
        %3499 = vmatpush1.bf16.msra.mxu0 %v3243
        %3500 = vmatprep.subr.bf16.mxu0 %v3246
        %3501 = vmatpush1.bf16.msra.mxu0 %v3245
        %3502 = vmatprep.subr.bf16.mxu0 %v3248
        %3503 = vmatpush1.bf16.msra.mxu0 %v3247
        %3504 = vmatprep.subr.bf16.mxu0 %v3250
        %3505 = vmatpush1.bf16.msra.mxu0 %v3249
        %3506 = vmatprep.subr.bf16.mxu0 %v3252
        %3507 = vmatpush1.bf16.msra.mxu0 %v3251
        %3508 = vmatprep.subr.bf16.mxu0 %v3254
        %3509 = vmatpush1.bf16.msra.mxu0 %v3253
        %3510 = vmatprep.subr.bf16.mxu0 0
        %3511 = vmatpush1.bf16.msra.mxu0 0
        %3512 = vmatprep.subr.bf16.mxu0 0
        %3513 = vmatpush1.bf16.msra.mxu0 0
        %3514 = vmatprep.subr.bf16.mxu0 0
        %3515 = vmatpush1.bf16.msra.mxu0 0
        %3516 = vmatprep.subr.bf16.mxu0 0
        %3517 = vmatpush1.bf16.msra.mxu0 0
        %3518 = vmatprep.subr.bf16.mxu0 0
        %3519 = vmatpush1.bf16.msra.mxu0 0
        %3520 = vmatprep.subr.bf16.mxu0 0
        %3521 = vmatpush1.bf16.msra.mxu0 0
        %3522 = vmatprep.mubr.bf16.mxu0 %v3316
        %3523 = vmatmul.mubr.bf16.gmra.mrb[0].mxu0 %v3303
        %v3524 = vpop.f32.mrb[0].mxu0
        %v3525 = vadd.f32 %v3482, %v3524
        %v3526 = vpop.f32.mrb[0].mxu0
        %v3527 = vadd.f32 %v3484, %v3526
        %v3528 = vpop.f32.mrb[0].mxu0
        %v3529 = vadd.f32 %v3486, %v3528
        %v3530 = vpop.f32.mrb[0].mxu0
        %v3531 = vadd.f32 %v3488, %v3530
        %3532 = vdwg.mxu0
        %v3533 = vpack.c.bf16 %v3529, %v3525
        %v3534 = vpack.c.bf16 %v3531, %v3527
        %v3535 = vld [vmem:[%s5] sm:$0xf]
        %v3536 = vld [vmem:[%s5 + $0x4] sm:$0xf]
        %v3539 = vunpack.c.l.b16 %v3535
        %v3540 = vunpack.c.l.b16 %v3536
        %v3541 = vpack.c.b16 %v3540, %v3539
        %vm3542 = vcmask 130048
        %v3544 = vsel %vm3542, %v3541, 0
        %3546 = vmatprep.subr.bf16.mxu0 %v3534
        %3547 = vmatpush1.bf16.msra.mxu0 %v3533
        %3548 = vmatprep.subr.bf16.mxu0 0
        %3549 = vmatpush1.bf16.msra.mxu0 0
        %3550 = vmatprep.subr.bf16.mxu0 0
        %3551 = vmatpush1.bf16.msra.mxu0 0
        %3552 = vmatprep.subr.bf16.mxu0 0
        %3553 = vmatpush1.bf16.msra.mxu0 0
        %3554 = vmatprep.subr.bf16.mxu0 0
        %3555 = vmatpush1.bf16.msra.mxu0 0
        %3556 = vmatprep.subr.bf16.mxu0 0
        %3557 = vmatpush1.bf16.msra.mxu0 0
        %3558 = vmatprep.subr.bf16.mxu0 0
        %3559 = vmatpush1.bf16.msra.mxu0 0
        %3560 = vmatprep.subr.bf16.mxu0 0
        %3561 = vmatpush1.bf16.msra.mxu0 0
        %3562 = vmatprep.subr.bf16.mxu0 0
        %3563 = vmatpush1.bf16.msra.mxu0 0
        %3564 = vmatprep.subr.bf16.mxu0 0
        %3565 = vmatpush1.bf16.msra.mxu0 0
        %3566 = vmatprep.subr.bf16.mxu0 0
        %3567 = vmatpush1.bf16.msra.mxu0 0
        %3568 = vmatprep.subr.bf16.mxu0 0
        %3569 = vmatpush1.bf16.msra.mxu0 0
        %3570 = vmatprep.subr.bf16.mxu0 0
        %3571 = vmatpush1.bf16.msra.mxu0 0
        %3572 = vmatprep.subr.bf16.mxu0 0
        %3573 = vmatpush1.bf16.msra.mxu0 0
        %3574 = vmatprep.subr.bf16.mxu0 0
        %3575 = vmatpush1.bf16.msra.mxu0 0
        %3576 = vmatprep.subr.bf16.mxu0 0
        %3577 = vmatpush1.bf16.msra.mxu0 0
        %3578 = vmatprep.mubr.bf16.mxu0 0
        %3579 = vmatmul.mubr.bf16.gmra.mrb[0].mxu0 %v3544
        %v3580 = vpop.f32.mrb[0].mxu0
        %v3581 = vadd.f32 0.0, %v3580
        %v3582 = vpop.f32.mrb[0].mxu0
        %v3583 = vadd.f32 0.0, %v3582
        %v3584 = vpop.f32.mrb[0].mxu0
        %v3585 = vadd.f32 0.0, %v3584
        %v3586 = vpop.f32.mrb[0].mxu0
        %v3587 = vadd.f32 0.0, %v3586
        %3588 = vdwg.mxu0
        %v3589 = vpack.c.bf16 %v3585, %v3581
        %v3590 = vpack.c.bf16 %v3587, %v3583
        %3591 = vset.pattern.permute.xlu0 2
        %3592 = vperm.xlu0 %3591, %v3095
        %v3593 = vpop.permute.xlu0 %3592
        %3595 = vset.pattern.permute.xlu0 2
        %3596 = vperm.xlu0 %3595, %v3096
        %v3597 = vpop.permute.xlu0 %3596
        %v3599 = vmul.f32 %v3593, %v3525
        %v3600 = vmul.f32 %v3593, %v3527
        %v3601 = vmul.f32 %v3597, %v3529
        %v3602 = vmul.f32 %v3597, %v3531
        %v3603 = vadd.f32 %v3599, %v3601
        %v3604 = vrot.slane %v3603, 4
        %v3605 = vadd.f32 %v3603, %v3604
        %v3606 = vrot.slane %v3605, 2
        %v3607 = vadd.f32 %v3605, %v3606
        %v3608 = vrot.slane %v3607, 1
        %v3609 = vadd.f32 %v3607, %v3608
        %v3610 = vadd.f32 %v3600, %v3602
        %v3611 = vrot.slane %v3610, 4
        %v3612 = vadd.f32 %v3610, %v3611
        %v3613 = vrot.slane %v3612, 2
        %v3614 = vadd.f32 %v3612, %v3613
        %v3615 = vrot.slane %v3614, 1
        %v3616 = vadd.f32 %v3614, %v3615
        %v3617 = vld [vmem:[%s6] sm:$0xf]
        %v3618 = vld [vmem:[%s6 + $0x4] sm:$0xf]
        %3619 = vset.pattern.permute.xlu0 1
        %3620 = vperm.xlu0 %3619, %v3095
        %v3621 = vpop.permute.xlu0 %3620
        %3623 = vset.pattern.permute.xlu0 1
        %3624 = vperm.xlu0 %3623, %v3096
        %v3625 = vpop.permute.xlu0 %3624
        %v3629 = vunpack.c.l.b16 %v3617
        %v3630 = vunpack.c.l.b16 %v3618
        %v3631 = vpack.c.b16 %v3630, %v3629
        %v3633 = vsel %vm3542, %v3631, 0
        %3635 = vmatprep.subr.bf16.mxu0 %v3534
        %3636 = vmatpush1.bf16.msra.mxu0 %v3533
        %3637 = vmatprep.subr.bf16.mxu0 0
        %3638 = vmatpush1.bf16.msra.mxu0 0
        %3639 = vmatprep.subr.bf16.mxu0 0
        %3640 = vmatpush1.bf16.msra.mxu0 0
        %3641 = vmatprep.subr.bf16.mxu0 0
        %3642 = vmatpush1.bf16.msra.mxu0 0
        %3643 = vmatprep.subr.bf16.mxu0 0
        %3644 = vmatpush1.bf16.msra.mxu0 0
        %3645 = vmatprep.subr.bf16.mxu0 0
        %3646 = vmatpush1.bf16.msra.mxu0 0
        %3647 = vmatprep.subr.bf16.mxu0 0
        %3648 = vmatpush1.bf16.msra.mxu0 0
        %3649 = vmatprep.subr.bf16.mxu0 0
        %3650 = vmatpush1.bf16.msra.mxu0 0
        %3651 = vmatprep.subr.bf16.mxu0 0
        %3652 = vmatpush1.bf16.msra.mxu0 0
        %3653 = vmatprep.subr.bf16.mxu0 0
        %3654 = vmatpush1.bf16.msra.mxu0 0
        %3655 = vmatprep.subr.bf16.mxu0 0
        %3656 = vmatpush1.bf16.msra.mxu0 0
        %3657 = vmatprep.subr.bf16.mxu0 0
        %3658 = vmatpush1.bf16.msra.mxu0 0
        %3659 = vmatprep.subr.bf16.mxu0 0
        %3660 = vmatpush1.bf16.msra.mxu0 0
        %3661 = vmatprep.subr.bf16.mxu0 0
        %3662 = vmatpush1.bf16.msra.mxu0 0
        %3663 = vmatprep.subr.bf16.mxu0 0
        %3664 = vmatpush1.bf16.msra.mxu0 0
        %3665 = vmatprep.subr.bf16.mxu0 0
        %3666 = vmatpush1.bf16.msra.mxu0 0
        %3667 = vmatprep.mubr.bf16.mxu0 0
        %3668 = vmatmul.mubr.bf16.gmra.mrb[0].mxu0 %v3633
        %v3669 = vpop.f32.mrb[0].mxu0
        %v3670 = vadd.f32 %v3621, %v3669
        %v3671 = vpop.f32.mrb[0].mxu0
        %v3672 = vadd.f32 %v3621, %v3671
        %v3673 = vpop.f32.mrb[0].mxu0
        %v3674 = vadd.f32 %v3625, %v3673
        %v3675 = vpop.f32.mrb[0].mxu0
        %v3676 = vadd.f32 %v3625, %v3675
        %3677 = vdwg.mxu0
        %v3678 = vpack.c.bf16 %v3674, %v3670
        %v3679 = vpack.c.bf16 %v3676, %v3672
        %3680 = vxpose.xlu0.c.b16.start [1/8] %v3533, 128
        %3681 = vxpose.xlu0.c.b16.cont [2/8] 0, 128
        %3682 = vxpose.xlu0.c.b16.cont [3/8] 0, 128
        %3683 = vxpose.xlu0.c.b16.cont [4/8] 0, 128
        %3684 = vxpose.xlu0.c.b16.cont [5/8] 0, 128
        %3685 = vxpose.xlu0.c.b16.cont [6/8] 0, 128
        %3686 = vxpose.xlu0.c.b16.cont [7/8] 0, 128
        %3687 = vxpose.xlu0.c.b16.end [8/8] 0, 128
        %v3688 = vpop.trf.xlu0
        %v3689 = vpop.trf.xlu0
        %v3690 = vpop.trf.xlu0
        %v3691 = vpop.trf.xlu0
        %v3692 = vpop.trf.xlu0
        %v3693 = vpop.trf.xlu0
        %v3694 = vpop.trf.xlu0
        %v3695 = vpop.trf.xlu0
        %v3697 = vsel %vm3542, %v3688, 0
        %v3700 = vsel %vm3542, %v3689, 0
        %v3703 = vsel %vm3542, %v3690, 0
        %v3706 = vsel %vm3542, %v3691, 0
        %v3709 = vsel %vm3542, %v3692, 0
        %v3712 = vsel %vm3542, %v3693, 0
        %v3715 = vsel %vm3542, %v3694, 0
        %v3718 = vsel %vm3542, %v3695, 0
        %3720 = vmatprep.subr.bf16.mxu0 %v3590
        %3721 = vmatpush1.bf16.msra.mxu0 %v3589
        %3722 = vmatprep.subr.bf16.mxu0 0
        %3723 = vmatpush1.bf16.msra.mxu0 0
        %3724 = vmatprep.subr.bf16.mxu0 0
        %3725 = vmatpush1.bf16.msra.mxu0 0
        %3726 = vmatprep.subr.bf16.mxu0 0
        %3727 = vmatpush1.bf16.msra.mxu0 0
        %3728 = vmatprep.subr.bf16.mxu0 0
        %3729 = vmatpush1.bf16.msra.mxu0 0
        %3730 = vmatprep.subr.bf16.mxu0 0
        %3731 = vmatpush1.bf16.msra.mxu0 0
        %3732 = vmatprep.subr.bf16.mxu0 0
        %3733 = vmatpush1.bf16.msra.mxu0 0
        %3734 = vmatprep.subr.bf16.mxu0 0
        %3735 = vmatpush1.bf16.msra.mxu0 0
        %3736 = vmatprep.subr.bf16.mxu0 0
        %3737 = vmatpush1.bf16.msra.mxu0 0
        %3738 = vmatprep.subr.bf16.mxu0 0
        %3739 = vmatpush1.bf16.msra.mxu0 0
        %3740 = vmatprep.subr.bf16.mxu0 0
        %3741 = vmatpush1.bf16.msra.mxu0 0
        %3742 = vmatprep.subr.bf16.mxu0 0
        %3743 = vmatpush1.bf16.msra.mxu0 0
        %3744 = vmatprep.subr.bf16.mxu0 0
        %3745 = vmatpush1.bf16.msra.mxu0 0
        %3746 = vmatprep.subr.bf16.mxu0 0
        %3747 = vmatpush1.bf16.msra.mxu0 0
        %3748 = vmatprep.subr.bf16.mxu0 0
        %3749 = vmatpush1.bf16.msra.mxu0 0
        %3750 = vmatprep.subr.bf16.mxu0 0
        %3751 = vmatpush1.bf16.msra.mxu0 0
        %3752 = vmatprep.mubr.bf16.mxu0 0
        %3753 = vmatmul.mubr.bf16.gmra.mrb[0].mxu0 %v3697
        %v3754 = vpop.f32.mrb[0].mxu0
        %v3755 = vadd.f32 %v3609, %v3754
        %v3756 = vpop.f32.mrb[0].mxu0
        %v3757 = vadd.f32 %v3616, %v3756
        %v3758 = vpop.f32.mrb[0].mxu0
        %v3759 = vadd.f32 %v3609, %v3758
        %v3760 = vpop.f32.mrb[0].mxu0
        %v3761 = vadd.f32 %v3616, %v3760
        %3762 = vmatprep.mubr.bf16.mxu0 0
        %3763 = vmatmul.mubr.bf16.gmra.mrb[0].mxu0 %v3700
        %v3764 = vpop.f32.mrb[0].mxu0
        %v3765 = vadd.f32 %v3609, %v3764
        %v3766 = vpop.f32.mrb[0].mxu0
        %v3767 = vadd.f32 %v3616, %v3766
        %v3768 = vpop.f32.mrb[0].mxu0
        %v3769 = vadd.f32 %v3609, %v3768
        %v3770 = vpop.f32.mrb[0].mxu0
        %v3771 = vadd.f32 %v3616, %v3770
        %3772 = vmatprep.mubr.bf16.mxu0 0
        %3773 = vmatmul.mubr.bf16.gmra.mrb[0].mxu0 %v3703
        %v3774 = vpop.f32.mrb[0].mxu0
        %v3775 = vadd.f32 %v3609, %v3774
        %v3776 = vpop.f32.mrb[0].mxu0
        %v3777 = vadd.f32 %v3616, %v3776
        %v3778 = vpop.f32.mrb[0].mxu0
        %v3779 = vadd.f32 %v3609, %v3778
        %v3780 = vpop.f32.mrb[0].mxu0
        %v3781 = vadd.f32 %v3616, %v3780
        %3782 = vmatprep.mubr.bf16.mxu0 0
        %3783 = vmatmul.mubr.bf16.gmra.mrb[0].mxu0 %v3706
        %v3784 = vpop.f32.mrb[0].mxu0
        %v3785 = vadd.f32 %v3609, %v3784
        %v3786 = vpop.f32.mrb[0].mxu0
        %v3787 = vadd.f32 %v3616, %v3786
        %v3788 = vpop.f32.mrb[0].mxu0
        %v3789 = vadd.f32 %v3609, %v3788
        %v3790 = vpop.f32.mrb[0].mxu0
        %v3791 = vadd.f32 %v3616, %v3790
        %3792 = vmatprep.mubr.bf16.mxu0 0
        %3793 = vmatmul.mubr.bf16.gmra.mrb[0].mxu0 %v3709
        %v3794 = vpop.f32.mrb[0].mxu0
        %v3795 = vadd.f32 %v3609, %v3794
        %v3796 = vpop.f32.mrb[0].mxu0
        %v3797 = vadd.f32 %v3616, %v3796
        %v3798 = vpop.f32.mrb[0].mxu0
        %v3799 = vadd.f32 %v3609, %v3798
        %v3800 = vpop.f32.mrb[0].mxu0
        %v3801 = vadd.f32 %v3616, %v3800
        %3802 = vmatprep.mubr.bf16.mxu0 0
        %3803 = vmatmul.mubr.bf16.gmra.mrb[0].mxu0 %v3712
        %v3804 = vpop.f32.mrb[0].mxu0
        %v3805 = vadd.f32 %v3609, %v3804
        %v3806 = vpop.f32.mrb[0].mxu0
        %v3807 = vadd.f32 %v3616, %v3806
        %v3808 = vpop.f32.mrb[0].mxu0
        %v3809 = vadd.f32 %v3609, %v3808
        %v3810 = vpop.f32.mrb[0].mxu0
        %v3811 = vadd.f32 %v3616, %v3810
        %3812 = vmatprep.mubr.bf16.mxu0 0
        %3813 = vmatmul.mubr.bf16.gmra.mrb[0].mxu0 %v3715
        %v3814 = vpop.f32.mrb[0].mxu0
        %v3815 = vadd.f32 %v3609, %v3814
        %v3816 = vpop.f32.mrb[0].mxu0
        %v3817 = vadd.f32 %v3616, %v3816
        %v3818 = vpop.f32.mrb[0].mxu0
        %v3819 = vadd.f32 %v3609, %v3818
        %v3820 = vpop.f32.mrb[0].mxu0
        %v3821 = vadd.f32 %v3616, %v3820
        %3822 = vmatprep.mubr.bf16.mxu0 0
        %3823 = vmatmul.mubr.bf16.gmra.mrb[0].mxu0 %v3718
        %v3824 = vpop.f32.mrb[0].mxu0
        %v3825 = vadd.f32 %v3609, %v3824
        %v3826 = vpop.f32.mrb[0].mxu0
        %v3827 = vadd.f32 %v3616, %v3826
        %v3828 = vpop.f32.mrb[0].mxu0
        %v3829 = vadd.f32 %v3609, %v3828
        %v3830 = vpop.f32.mrb[0].mxu0
        %v3831 = vadd.f32 %v3616, %v3830
        %3832 = vdwg.mxu0
        %v3833 = vmax.f32 %v3755, %v3757
        %3834 = vmax.xlane.f32.xlu0 %v3833
        %v3835 = vpop.xlane.xlu0 %3834
        %v3836 = vmax.f32 %v3759, %v3761
        %3837 = vmax.xlane.f32.xlu0 %v3836
        %v3838 = vpop.xlane.xlu0 %3837
        %v3839 = vmax.f32 %v3765, %v3767
        %3840 = vmax.xlane.f32.xlu0 %v3839
        %v3841 = vpop.xlane.xlu0 %3840
        %v3842 = vmax.f32 %v3769, %v3771
        %3843 = vmax.xlane.f32.xlu0 %v3842
        %v3844 = vpop.xlane.xlu0 %3843
        %v3845 = vmax.f32 %v3775, %v3777
        %3846 = vmax.xlane.f32.xlu0 %v3845
        %v3847 = vpop.xlane.xlu0 %3846
        %v3848 = vmax.f32 %v3779, %v3781
        %3849 = vmax.xlane.f32.xlu0 %v3848
        %v3850 = vpop.xlane.xlu0 %3849
        %v3851 = vmax.f32 %v3785, %v3787
        %3852 = vmax.xlane.f32.xlu0 %v3851
        %v3853 = vpop.xlane.xlu0 %3852
        %v3854 = vmax.f32 %v3789, %v3791
        %3855 = vmax.xlane.f32.xlu0 %v3854
        %v3856 = vpop.xlane.xlu0 %3855
        %v3857 = vmax.f32 %v3795, %v3797
        %3858 = vmax.xlane.f32.xlu0 %v3857
        %v3859 = vpop.xlane.xlu0 %3858
        %v3860 = vmax.f32 %v3799, %v3801
        %3861 = vmax.xlane.f32.xlu0 %v3860
        %v3862 = vpop.xlane.xlu0 %3861
        %v3863 = vmax.f32 %v3805, %v3807
        %3864 = vmax.xlane.f32.xlu0 %v3863
        %v3865 = vpop.xlane.xlu0 %3864
        %v3866 = vmax.f32 %v3809, %v3811
        %3867 = vmax.xlane.f32.xlu0 %v3866
        %v3868 = vpop.xlane.xlu0 %3867
        %v3869 = vmax.f32 %v3815, %v3817
        %3870 = vmax.xlane.f32.xlu0 %v3869
        %v3871 = vpop.xlane.xlu0 %3870
        %v3872 = vmax.f32 %v3819, %v3821
        %3873 = vmax.xlane.f32.xlu0 %v3872
        %v3874 = vpop.xlane.xlu0 %3873
        %v3875 = vmax.f32 %v3825, %v3827
        %3876 = vmax.xlane.f32.xlu0 %v3875
        %v3877 = vpop.xlane.xlu0 %3876
        %v3878 = vmax.f32 %v3829, %v3831
        %3879 = vmax.xlane.f32.xlu0 %v3878
        %v3880 = vpop.xlane.xlu0 %3879
        %v3881 = vsub.f32 %v3755, %v3835
        %v3882 = vsub.f32 %v3757, %v3835
        %v3883 = vsub.f32 %v3759, %v3838
        %v3884 = vsub.f32 %v3761, %v3838
        %v3885 = vsub.f32 %v3765, %v3841
        %v3886 = vsub.f32 %v3767, %v3841
        %v3887 = vsub.f32 %v3769, %v3844
        %v3888 = vsub.f32 %v3771, %v3844
        %v3889 = vsub.f32 %v3775, %v3847
        %v3890 = vsub.f32 %v3777, %v3847
        %v3891 = vsub.f32 %v3779, %v3850
        %v3892 = vsub.f32 %v3781, %v3850
        %v3893 = vsub.f32 %v3785, %v3853
        %v3894 = vsub.f32 %v3787, %v3853
        %v3895 = vsub.f32 %v3789, %v3856
        %v3896 = vsub.f32 %v3791, %v3856
        %v3897 = vsub.f32 %v3795, %v3859
        %v3898 = vsub.f32 %v3797, %v3859
        %v3899 = vsub.f32 %v3799, %v3862
        %v3900 = vsub.f32 %v3801, %v3862
        %v3901 = vsub.f32 %v3805, %v3865
        %v3902 = vsub.f32 %v3807, %v3865
        %v3903 = vsub.f32 %v3809, %v3868
        %v3904 = vsub.f32 %v3811, %v3868
        %v3905 = vsub.f32 %v3815, %v3871
        %v3906 = vsub.f32 %v3817, %v3871
        %v3907 = vsub.f32 %v3819, %v3874
        %v3908 = vsub.f32 %v3821, %v3874
        %v3909 = vsub.f32 %v3825, %v3877
        %v3910 = vsub.f32 %v3827, %v3877
        %v3911 = vsub.f32 %v3829, %v3880
        %v3912 = vsub.f32 %v3831, %v3880
        %v3913 = vmul.f32 %v3881, 1.442695
        %v3914 = vpow.pop %v3913
        %v3915 = vmul.f32 %v3882, 1.442695
        %v3916 = vpow.pop %v3915
        %v3917 = vmul.f32 %v3883, 1.442695
        %v3918 = vpow.pop %v3917
        %v3919 = vmul.f32 %v3884, 1.442695
        %v3920 = vpow.pop %v3919
        %v3921 = vmul.f32 %v3885, 1.442695
        %v3922 = vpow.pop %v3921
        %v3923 = vmul.f32 %v3886, 1.442695
        %v3924 = vpow.pop %v3923
        %v3925 = vmul.f32 %v3887, 1.442695
        %v3926 = vpow.pop %v3925
        %v3927 = vmul.f32 %v3888, 1.442695
        %v3928 = vpow.pop %v3927
        %v3929 = vmul.f32 %v3889, 1.442695
        %v3930 = vpow.pop %v3929
        %v3931 = vmul.f32 %v3890, 1.442695
        %v3932 = vpow.pop %v3931
        %v3933 = vmul.f32 %v3891, 1.442695
        %v3934 = vpow.pop %v3933
        %v3935 = vmul.f32 %v3892, 1.442695
        %v3936 = vpow.pop %v3935
        %v3937 = vmul.f32 %v3893, 1.442695
        %v3938 = vpow.pop %v3937
        %v3939 = vmul.f32 %v3894, 1.442695
        %v3940 = vpow.pop %v3939
        %v3941 = vmul.f32 %v3895, 1.442695
        %v3942 = vpow.pop %v3941
        %v3943 = vmul.f32 %v3896, 1.442695
        %v3944 = vpow.pop %v3943
        %v3945 = vmul.f32 %v3897, 1.442695
        %v3946 = vpow.pop %v3945
        %v3947 = vmul.f32 %v3898, 1.442695
        %v3948 = vpow.pop %v3947
        %v3949 = vmul.f32 %v3899, 1.442695
        %v3950 = vpow.pop %v3949
        %v3951 = vmul.f32 %v3900, 1.442695
        %v3952 = vpow.pop %v3951
        %v3953 = vmul.f32 %v3901, 1.442695
        %v3954 = vpow.pop %v3953
        %v3955 = vmul.f32 %v3902, 1.442695
        %v3956 = vpow.pop %v3955
        %v3957 = vmul.f32 %v3903, 1.442695
        %v3958 = vpow.pop %v3957
        %v3959 = vmul.f32 %v3904, 1.442695
        %v3960 = vpow.pop %v3959
        %v3961 = vmul.f32 %v3905, 1.442695
        %v3962 = vpow.pop %v3961
        %v3963 = vmul.f32 %v3906, 1.442695
        %v3964 = vpow.pop %v3963
        %v3965 = vmul.f32 %v3907, 1.442695
        %v3966 = vpow.pop %v3965
        %v3967 = vmul.f32 %v3908, 1.442695
        %v3968 = vpow.pop %v3967
        %v3969 = vmul.f32 %v3909, 1.442695
        %v3970 = vpow.pop %v3969
        %v3971 = vmul.f32 %v3910, 1.442695
        %v3972 = vpow.pop %v3971
        %v3973 = vmul.f32 %v3911, 1.442695
        %v3974 = vpow.pop %v3973
        %v3975 = vmul.f32 %v3912, 1.442695
        %v3976 = vpow.pop %v3975
        %v3977 = vadd.f32 %v3914, %v3916
        %3978 = vadd.xlane.f32.xlu0 %v3977
        %v3979 = vpop.xlane.xlu0 %3978
        %v3980 = vadd.f32 %v3918, %v3920
        %3981 = vadd.xlane.f32.xlu0 %v3980
        %v3982 = vpop.xlane.xlu0 %3981
        %v3983 = vadd.f32 %v3922, %v3924
        %3984 = vadd.xlane.f32.xlu0 %v3983
        %v3985 = vpop.xlane.xlu0 %3984
        %v3986 = vadd.f32 %v3926, %v3928
        %3987 = vadd.xlane.f32.xlu0 %v3986
        %v3988 = vpop.xlane.xlu0 %3987
        %v3989 = vadd.f32 %v3930, %v3932
        %3990 = vadd.xlane.f32.xlu0 %v3989
        %v3991 = vpop.xlane.xlu0 %3990
        %v3992 = vadd.f32 %v3934, %v3936
        %3993 = vadd.xlane.f32.xlu0 %v3992
        %v3994 = vpop.xlane.xlu0 %3993
        %v3995 = vadd.f32 %v3938, %v3940
        %3996 = vadd.xlane.f32.xlu0 %v3995
        %v3997 = vpop.xlane.xlu0 %3996
        %v3998 = vadd.f32 %v3942, %v3944
        %3999 = vadd.xlane.f32.xlu0 %v3998
        %v4000 = vpop.xlane.xlu0 %3999
        %v4001 = vadd.f32 %v3946, %v3948
        %4002 = vadd.xlane.f32.xlu0 %v4001
        %v4003 = vpop.xlane.xlu0 %4002
        %v4004 = vadd.f32 %v3950, %v3952
        %4005 = vadd.xlane.f32.xlu0 %v4004
        %v4006 = vpop.xlane.xlu0 %4005
        %v4007 = vadd.f32 %v3954, %v3956
        %4008 = vadd.xlane.f32.xlu0 %v4007
        %v4009 = vpop.xlane.xlu0 %4008
        %v4010 = vadd.f32 %v3958, %v3960
        %4011 = vadd.xlane.f32.xlu0 %v4010
        %v4012 = vpop.xlane.xlu0 %4011
        %v4013 = vadd.f32 %v3962, %v3964
        %4014 = vadd.xlane.f32.xlu0 %v4013
        %v4015 = vpop.xlane.xlu0 %4014
        %v4016 = vadd.f32 %v3966, %v3968
        %4017 = vadd.xlane.f32.xlu0 %v4016
        %v4018 = vpop.xlane.xlu0 %4017
        %v4019 = vadd.f32 %v3970, %v3972
        %4020 = vadd.xlane.f32.xlu0 %v4019
        %v4021 = vpop.xlane.xlu0 %4020
        %v4022 = vadd.f32 %v3974, %v3976
        %4023 = vadd.xlane.f32.xlu0 %v4022
        %v4024 = vpop.xlane.xlu0 %4023
        %v4025 = vrcp.pop %v3979
        %v4026 = vrcp.pop %v3982
        %v4027 = vrcp.pop %v3985
        %v4028 = vrcp.pop %v3988
        %v4029 = vrcp.pop %v3991
        %v4030 = vrcp.pop %v3994
        %v4031 = vrcp.pop %v3997
        %v4032 = vrcp.pop %v4000
        %v4033 = vrcp.pop %v4003
        %v4034 = vrcp.pop %v4006
        %v4035 = vrcp.pop %v4009
        %v4036 = vrcp.pop %v4012
        %v4037 = vrcp.pop %v4015
        %v4038 = vrcp.pop %v4018
        %v4039 = vrcp.pop %v4021
        %v4040 = vrcp.pop %v4024
        %v4041 = vmul.f32 %v3914, %v4025
        %v4042 = vmul.f32 %v3916, %v4025
        %v4043 = vmul.f32 %v3918, %v4026
        %v4044 = vmul.f32 %v3920, %v4026
        %v4045 = vmul.f32 %v3922, %v4027
        %v4046 = vmul.f32 %v3924, %v4027
        %v4047 = vmul.f32 %v3926, %v4028
        %v4048 = vmul.f32 %v3928, %v4028
        %v4049 = vmul.f32 %v3930, %v4029
        %v4050 = vmul.f32 %v3932, %v4029
        %v4051 = vmul.f32 %v3934, %v4030
        %v4052 = vmul.f32 %v3936, %v4030
        %v4053 = vmul.f32 %v3938, %v4031
        %v4054 = vmul.f32 %v3940, %v4031
        %v4055 = vmul.f32 %v3942, %v4032
        %v4056 = vmul.f32 %v3944, %v4032
        %v4057 = vmul.f32 %v3946, %v4033
        %v4058 = vmul.f32 %v3948, %v4033
        %v4059 = vmul.f32 %v3950, %v4034
        %v4060 = vmul.f32 %v3952, %v4034
        %v4061 = vmul.f32 %v3954, %v4035
        %v4062 = vmul.f32 %v3956, %v4035
        %v4063 = vmul.f32 %v3958, %v4036
        %v4064 = vmul.f32 %v3960, %v4036
        %v4065 = vmul.f32 %v3962, %v4037
        %v4066 = vmul.f32 %v3964, %v4037
        %v4067 = vmul.f32 %v3966, %v4038
        %v4068 = vmul.f32 %v3968, %v4038
        %v4069 = vmul.f32 %v3970, %v4039
        %v4070 = vmul.f32 %v3972, %v4039
        %v4071 = vmul.f32 %v3974, %v4040
        %v4072 = vmul.f32 %v3976, %v4040
        %v4073 = vpack.c.bf16 %v4043, %v4041
        %v4074 = vpack.c.bf16 %v4044, %v4042
        %v4075 = vpack.c.bf16 %v4047, %v4045
        %v4076 = vpack.c.bf16 %v4048, %v4046
        %v4077 = vpack.c.bf16 %v4051, %v4049
        %v4078 = vpack.c.bf16 %v4052, %v4050
        %v4079 = vpack.c.bf16 %v4055, %v4053
        %v4080 = vpack.c.bf16 %v4056, %v4054
        %v4081 = vpack.c.bf16 %v4059, %v4057
        %v4082 = vpack.c.bf16 %v4060, %v4058
        %v4083 = vpack.c.bf16 %v4063, %v4061
        %v4084 = vpack.c.bf16 %v4064, %v4062
        %v4085 = vpack.c.bf16 %v4067, %v4065
        %v4086 = vpack.c.bf16 %v4068, %v4066
        %v4087 = vpack.c.bf16 %v4071, %v4069
        %v4088 = vpack.c.bf16 %v4072, %v4070
        %4089 = vmatprep.subr.bf16.mxu0 %v4074
        %4090 = vmatpush1.bf16.xpose.msra.mxu0 %v4073
        %4091 = vmatprep.subr.bf16.mxu0 %v4076
        %4092 = vmatpush1.bf16.xpose.msra.mxu0 %v4075
        %4093 = vmatprep.subr.bf16.mxu0 %v4078
        %4094 = vmatpush1.bf16.xpose.msra.mxu0 %v4077
        %4095 = vmatprep.subr.bf16.mxu0 %v4080
        %4096 = vmatpush1.bf16.xpose.msra.mxu0 %v4079
        %4097 = vmatprep.subr.bf16.mxu0 %v4082
        %4098 = vmatpush1.bf16.xpose.msra.mxu0 %v4081
        %4099 = vmatprep.subr.bf16.mxu0 %v4084
        %4100 = vmatpush1.bf16.xpose.msra.mxu0 %v4083
        %4101 = vmatprep.subr.bf16.mxu0 %v4086
        %4102 = vmatpush1.bf16.xpose.msra.mxu0 %v4085
        %4103 = vmatprep.subr.bf16.mxu0 %v4088
        %4104 = vmatpush1.bf16.xpose.msra.mxu0 %v4087
        %4105 = vmatprep.subr.bf16.mxu0 0
        %4106 = vmatpush1.bf16.xpose.msra.mxu0 0
        %4107 = vmatprep.subr.bf16.mxu0 0
        %4108 = vmatpush1.bf16.xpose.msra.mxu0 0
        %4109 = vmatprep.subr.bf16.mxu0 0
        %4110 = vmatpush1.bf16.xpose.msra.mxu0 0
        %4111 = vmatprep.subr.bf16.mxu0 0
        %4112 = vmatpush1.bf16.xpose.msra.mxu0 0
        %4113 = vmatprep.subr.bf16.mxu0 0
        %4114 = vmatpush1.bf16.xpose.msra.mxu0 0
        %4115 = vmatprep.subr.bf16.mxu0 0
        %4116 = vmatpush1.bf16.xpose.msra.mxu0 0
        %4117 = vmatprep.subr.bf16.mxu0 0
        %4118 = vmatpush1.bf16.xpose.msra.mxu0 0
        %4119 = vmatprep.subr.bf16.mxu0 0
        %4120 = vmatpush1.bf16.xpose.msra.mxu0 0
        %4121 = vmatprep.mubr.bf16.mxu0 %v3679
        %4122 = vmatmul.mubr.bf16.gmra.mrb[0].mxu0 %v3678
        %v4123 = vpop.f32.mrb[0].mxu0
        %v4124 = vadd.f32 0.0, %v4123
        %v4125 = vpop.f32.mrb[0].mxu0
        %v4126 = vpop.f32.mrb[0].mxu0
        %v4127 = vadd.f32 0.0, %v4126
        %v4128 = vpop.f32.mrb[0].mxu0
        %4129 = vdwg.mxu0
        %v4130 = vld [vmem:[%s309] sm:$0x1]
        %v4131 = vadd.f32 %v4130, 1.0
        %v4133 = vlaneseq
        %v4134 = vshrl.u32 %v4133, 7
        %v4135 = vsub.s32 0, %v4134
        %v4136 = vrot.slane %v4131, %v4135
        %v4138 = vmul.f32 %v4124, %v4136
        %v4139 = vmul.f32 %v4127, %v4136
        %4140 = vst [vmem:[%s348] sm:$0xff] %v4138
        %4141 = vst [vmem:[%s348 + $0x10] sm:$0xff] %v4139
        %4142 = vxpose.xlu0.c.b16.start [1/8] %v3534, 128
        %4143 = vxpose.xlu0.c.b16.cont [2/8] 0, 128
        %4144 = vxpose.xlu0.c.b16.cont [3/8] 0, 128
        %4145 = vxpose.xlu0.c.b16.cont [4/8] 0, 128
        %4146 = vxpose.xlu0.c.b16.cont [5/8] 0, 128
        %4147 = vxpose.xlu0.c.b16.cont [6/8] 0, 128
        %4148 = vxpose.xlu0.c.b16.cont [7/8] 0, 128
        %4149 = vxpose.xlu0.c.b16.end [8/8] 0, 128
        %v4150 = vpop.trf.xlu0
        %v4151 = vpop.trf.xlu0
        %v4152 = vpop.trf.xlu0
        %v4153 = vpop.trf.xlu0
        %v4154 = vpop.trf.xlu0
        %v4155 = vpop.trf.xlu0
        %v4156 = vpop.trf.xlu0
        %v4157 = vpop.trf.xlu0
        %v4159 = vsel %vm3542, %v4150, 0
        %v4162 = vsel %vm3542, %v4151, 0
        %v4165 = vsel %vm3542, %v4152, 0
        %v4168 = vsel %vm3542, %v4153, 0
        %v4171 = vsel %vm3542, %v4154, 0
        %v4174 = vsel %vm3542, %v4155, 0
        %v4177 = vsel %vm3542, %v4156, 0
        %v4180 = vsel %vm3542, %v4157, 0
        %4182 = vmatprep.subr.bf16.mxu0 %v3590
        %4183 = vmatpush1.bf16.msra.mxu0 %v3589
        %4184 = vmatprep.subr.bf16.mxu0 0
        %4185 = vmatpush1.bf16.msra.mxu0 0
        %4186 = vmatprep.subr.bf16.mxu0 0
        %4187 = vmatpush1.bf16.msra.mxu0 0
        %4188 = vmatprep.subr.bf16.mxu0 0
        %4189 = vmatpush1.bf16.msra.mxu0 0
        %4190 = vmatprep.subr.bf16.mxu0 0
        %4191 = vmatpush1.bf16.msra.mxu0 0
        %4192 = vmatprep.subr.bf16.mxu0 0
        %4193 = vmatpush1.bf16.msra.mxu0 0
        %4194 = vmatprep.subr.bf16.mxu0 0
        %4195 = vmatpush1.bf16.msra.mxu0 0
        %4196 = vmatprep.subr.bf16.mxu0 0
        %4197 = vmatpush1.bf16.msra.mxu0 0
        %4198 = vmatprep.subr.bf16.mxu0 0
        %4199 = vmatpush1.bf16.msra.mxu0 0
        %4200 = vmatprep.subr.bf16.mxu0 0
        %4201 = vmatpush1.bf16.msra.mxu0 0
        %4202 = vmatprep.subr.bf16.mxu0 0
        %4203 = vmatpush1.bf16.msra.mxu0 0
        %4204 = vmatprep.subr.bf16.mxu0 0
        %4205 = vmatpush1.bf16.msra.mxu0 0
        %4206 = vmatprep.subr.bf16.mxu0 0
        %4207 = vmatpush1.bf16.msra.mxu0 0
        %4208 = vmatprep.subr.bf16.mxu0 0
        %4209 = vmatpush1.bf16.msra.mxu0 0
        %4210 = vmatprep.subr.bf16.mxu0 0
        %4211 = vmatpush1.bf16.msra.mxu0 0
        %4212 = vmatprep.subr.bf16.mxu0 0
        %4213 = vmatpush1.bf16.msra.mxu0 0
        %4214 = vmatprep.mubr.bf16.mxu0 0
        %4215 = vmatmul.mubr.bf16.gmra.mrb[0].mxu0 %v4159
        %v4216 = vpop.f32.mrb[0].mxu0
        %v4217 = vadd.f32 %v3609, %v4216
        %v4218 = vpop.f32.mrb[0].mxu0
        %v4219 = vadd.f32 %v3616, %v4218
        %v4220 = vpop.f32.mrb[0].mxu0
        %v4221 = vadd.f32 %v3609, %v4220
        %v4222 = vpop.f32.mrb[0].mxu0
        %v4223 = vadd.f32 %v3616, %v4222
        %4224 = vmatprep.mubr.bf16.mxu0 0
        %4225 = vmatmul.mubr.bf16.gmra.mrb[0].mxu0 %v4162
        %v4226 = vpop.f32.mrb[0].mxu0
        %v4227 = vadd.f32 %v3609, %v4226
        %v4228 = vpop.f32.mrb[0].mxu0
        %v4229 = vadd.f32 %v3616, %v4228
        %v4230 = vpop.f32.mrb[0].mxu0
        %v4231 = vadd.f32 %v3609, %v4230
        %v4232 = vpop.f32.mrb[0].mxu0
        %v4233 = vadd.f32 %v3616, %v4232
        %4234 = vmatprep.mubr.bf16.mxu0 0
        %4235 = vmatmul.mubr.bf16.gmra.mrb[0].mxu0 %v4165
        %v4236 = vpop.f32.mrb[0].mxu0
        %v4237 = vadd.f32 %v3609, %v4236
        %v4238 = vpop.f32.mrb[0].mxu0
        %v4239 = vadd.f32 %v3616, %v4238
        %v4240 = vpop.f32.mrb[0].mxu0
        %v4241 = vadd.f32 %v3609, %v4240
        %v4242 = vpop.f32.mrb[0].mxu0
        %v4243 = vadd.f32 %v3616, %v4242
        %4244 = vmatprep.mubr.bf16.mxu0 0
        %4245 = vmatmul.mubr.bf16.gmra.mrb[0].mxu0 %v4168
        %v4246 = vpop.f32.mrb[0].mxu0
        %v4247 = vadd.f32 %v3609, %v4246
        %v4248 = vpop.f32.mrb[0].mxu0
        %v4249 = vadd.f32 %v3616, %v4248
        %v4250 = vpop.f32.mrb[0].mxu0
        %v4251 = vadd.f32 %v3609, %v4250
        %v4252 = vpop.f32.mrb[0].mxu0
        %v4253 = vadd.f32 %v3616, %v4252
        %4254 = vmatprep.mubr.bf16.mxu0 0
        %4255 = vmatmul.mubr.bf16.gmra.mrb[0].mxu0 %v4171
        %v4256 = vpop.f32.mrb[0].mxu0
        %v4257 = vadd.f32 %v3609, %v4256
        %v4258 = vpop.f32.mrb[0].mxu0
        %v4259 = vadd.f32 %v3616, %v4258
        %v4260 = vpop.f32.mrb[0].mxu0
        %v4261 = vadd.f32 %v3609, %v4260
        %v4262 = vpop.f32.mrb[0].mxu0
        %v4263 = vadd.f32 %v3616, %v4262
        %4264 = vmatprep.mubr.bf16.mxu0 0
        %4265 = vmatmul.mubr.bf16.gmra.mrb[0].mxu0 %v4174
        %v4266 = vpop.f32.mrb[0].mxu0
        %v4267 = vadd.f32 %v3609, %v4266
        %v4268 = vpop.f32.mrb[0].mxu0
        %v4269 = vadd.f32 %v3616, %v4268
        %v4270 = vpop.f32.mrb[0].mxu0
        %v4271 = vadd.f32 %v3609, %v4270
        %v4272 = vpop.f32.mrb[0].mxu0
        %v4273 = vadd.f32 %v3616, %v4272
        %4274 = vmatprep.mubr.bf16.mxu0 0
        %4275 = vmatmul.mubr.bf16.gmra.mrb[0].mxu0 %v4177
        %v4276 = vpop.f32.mrb[0].mxu0
        %v4277 = vadd.f32 %v3609, %v4276
        %v4278 = vpop.f32.mrb[0].mxu0
        %v4279 = vadd.f32 %v3616, %v4278
        %v4280 = vpop.f32.mrb[0].mxu0
        %v4281 = vadd.f32 %v3609, %v4280
        %v4282 = vpop.f32.mrb[0].mxu0
        %v4283 = vadd.f32 %v3616, %v4282
        %4284 = vmatprep.mubr.bf16.mxu0 0
        %4285 = vmatmul.mubr.bf16.gmra.mrb[0].mxu0 %v4180
        %v4286 = vpop.f32.mrb[0].mxu0
        %v4287 = vadd.f32 %v3609, %v4286
        %v4288 = vpop.f32.mrb[0].mxu0
        %v4289 = vadd.f32 %v3616, %v4288
        %v4290 = vpop.f32.mrb[0].mxu0
        %v4291 = vadd.f32 %v3609, %v4290
        %v4292 = vpop.f32.mrb[0].mxu0
        %v4293 = vadd.f32 %v3616, %v4292
        %4294 = vdwg.mxu0
        %v4295 = vmax.f32 %v4217, %v4219
        %4296 = vmax.xlane.f32.xlu0 %v4295
        %v4297 = vpop.xlane.xlu0 %4296
        %v4298 = vmax.f32 %v4221, %v4223
        %4299 = vmax.xlane.f32.xlu0 %v4298
        %v4300 = vpop.xlane.xlu0 %4299
        %v4301 = vmax.f32 %v4227, %v4229
        %4302 = vmax.xlane.f32.xlu0 %v4301
        %v4303 = vpop.xlane.xlu0 %4302
        %v4304 = vmax.f32 %v4231, %v4233
        %4305 = vmax.xlane.f32.xlu0 %v4304
        %v4306 = vpop.xlane.xlu0 %4305
        %v4307 = vmax.f32 %v4237, %v4239
        %4308 = vmax.xlane.f32.xlu0 %v4307
        %v4309 = vpop.xlane.xlu0 %4308
        %v4310 = vmax.f32 %v4241, %v4243
        %4311 = vmax.xlane.f32.xlu0 %v4310
        %v4312 = vpop.xlane.xlu0 %4311
        %v4313 = vmax.f32 %v4247, %v4249
        %4314 = vmax.xlane.f32.xlu0 %v4313
        %v4315 = vpop.xlane.xlu0 %4314
        %v4316 = vmax.f32 %v4251, %v4253
        %4317 = vmax.xlane.f32.xlu0 %v4316
        %v4318 = vpop.xlane.xlu0 %4317
        %v4319 = vmax.f32 %v4257, %v4259
        %4320 = vmax.xlane.f32.xlu0 %v4319
        %v4321 = vpop.xlane.xlu0 %4320
        %v4322 = vmax.f32 %v4261, %v4263
        %4323 = vmax.xlane.f32.xlu0 %v4322
        %v4324 = vpop.xlane.xlu0 %4323
        %v4325 = vmax.f32 %v4267, %v4269
        %4326 = vmax.xlane.f32.xlu0 %v4325
        %v4327 = vpop.xlane.xlu0 %4326
        %v4328 = vmax.f32 %v4271, %v4273
        %4329 = vmax.xlane.f32.xlu0 %v4328
        %v4330 = vpop.xlane.xlu0 %4329
        %v4331 = vmax.f32 %v4277, %v4279
        %4332 = vmax.xlane.f32.xlu0 %v4331
        %v4333 = vpop.xlane.xlu0 %4332
        %v4334 = vmax.f32 %v4281, %v4283
        %4335 = vmax.xlane.f32.xlu0 %v4334
        %v4336 = vpop.xlane.xlu0 %4335
        %v4337 = vmax.f32 %v4287, %v4289
        %4338 = vmax.xlane.f32.xlu0 %v4337
        %v4339 = vpop.xlane.xlu0 %4338
        %v4340 = vmax.f32 %v4291, %v4293
        %4341 = vmax.xlane.f32.xlu0 %v4340
        %v4342 = vpop.xlane.xlu0 %4341
        %v4343 = vsub.f32 %v4217, %v4297
        %v4344 = vsub.f32 %v4219, %v4297
        %v4345 = vsub.f32 %v4221, %v4300
        %v4346 = vsub.f32 %v4223, %v4300
        %v4347 = vsub.f32 %v4227, %v4303
        %v4348 = vsub.f32 %v4229, %v4303
        %v4349 = vsub.f32 %v4231, %v4306
        %v4350 = vsub.f32 %v4233, %v4306
        %v4351 = vsub.f32 %v4237, %v4309
        %v4352 = vsub.f32 %v4239, %v4309
        %v4353 = vsub.f32 %v4241, %v4312
        %v4354 = vsub.f32 %v4243, %v4312
        %v4355 = vsub.f32 %v4247, %v4315
        %v4356 = vsub.f32 %v4249, %v4315
        %v4357 = vsub.f32 %v4251, %v4318
        %v4358 = vsub.f32 %v4253, %v4318
        %v4359 = vsub.f32 %v4257, %v4321
        %v4360 = vsub.f32 %v4259, %v4321
        %v4361 = vsub.f32 %v4261, %v4324
        %v4362 = vsub.f32 %v4263, %v4324
        %v4363 = vsub.f32 %v4267, %v4327
        %v4364 = vsub.f32 %v4269, %v4327
        %v4365 = vsub.f32 %v4271, %v4330
        %v4366 = vsub.f32 %v4273, %v4330
        %v4367 = vsub.f32 %v4277, %v4333
        %v4368 = vsub.f32 %v4279, %v4333
        %v4369 = vsub.f32 %v4281, %v4336
        %v4370 = vsub.f32 %v4283, %v4336
        %v4371 = vsub.f32 %v4287, %v4339
        %v4372 = vsub.f32 %v4289, %v4339
        %v4373 = vsub.f32 %v4291, %v4342
        %v4374 = vsub.f32 %v4293, %v4342
        %v4375 = vmul.f32 %v4343, 1.442695
        %v4376 = vpow.pop %v4375
        %v4377 = vmul.f32 %v4344, 1.442695
        %v4378 = vpow.pop %v4377
        %v4379 = vmul.f32 %v4345, 1.442695
        %v4380 = vpow.pop %v4379
        %v4381 = vmul.f32 %v4346, 1.442695
        %v4382 = vpow.pop %v4381
        %v4383 = vmul.f32 %v4347, 1.442695
        %v4384 = vpow.pop %v4383
        %v4385 = vmul.f32 %v4348, 1.442695
        %v4386 = vpow.pop %v4385
        %v4387 = vmul.f32 %v4349, 1.442695
        %v4388 = vpow.pop %v4387
        %v4389 = vmul.f32 %v4350, 1.442695
        %v4390 = vpow.pop %v4389
        %v4391 = vmul.f32 %v4351, 1.442695
        %v4392 = vpow.pop %v4391
        %v4393 = vmul.f32 %v4352, 1.442695
        %v4394 = vpow.pop %v4393
        %v4395 = vmul.f32 %v4353, 1.442695
        %v4396 = vpow.pop %v4395
        %v4397 = vmul.f32 %v4354, 1.442695
        %v4398 = vpow.pop %v4397
        %v4399 = vmul.f32 %v4355, 1.442695
        %v4400 = vpow.pop %v4399
        %v4401 = vmul.f32 %v4356, 1.442695
        %v4402 = vpow.pop %v4401
        %v4403 = vmul.f32 %v4357, 1.442695
        %v4404 = vpow.pop %v4403
        %v4405 = vmul.f32 %v4358, 1.442695
        %v4406 = vpow.pop %v4405
        %v4407 = vmul.f32 %v4359, 1.442695
        %v4408 = vpow.pop %v4407
        %v4409 = vmul.f32 %v4360, 1.442695
        %v4410 = vpow.pop %v4409
        %v4411 = vmul.f32 %v4361, 1.442695
        %v4412 = vpow.pop %v4411
        %v4413 = vmul.f32 %v4362, 1.442695
        %v4414 = vpow.pop %v4413
        %v4415 = vmul.f32 %v4363, 1.442695
        %v4416 = vpow.pop %v4415
        %v4417 = vmul.f32 %v4364, 1.442695
        %v4418 = vpow.pop %v4417
        %v4419 = vmul.f32 %v4365, 1.442695
        %v4420 = vpow.pop %v4419
        %v4421 = vmul.f32 %v4366, 1.442695
        %v4422 = vpow.pop %v4421
        %v4423 = vmul.f32 %v4367, 1.442695
        %v4424 = vpow.pop %v4423
        %v4425 = vmul.f32 %v4368, 1.442695
        %v4426 = vpow.pop %v4425
        %v4427 = vmul.f32 %v4369, 1.442695
        %v4428 = vpow.pop %v4427
        %v4429 = vmul.f32 %v4370, 1.442695
        %v4430 = vpow.pop %v4429
        %v4431 = vmul.f32 %v4371, 1.442695
        %v4432 = vpow.pop %v4431
        %v4433 = vmul.f32 %v4372, 1.442695
        %v4434 = vpow.pop %v4433
        %v4435 = vmul.f32 %v4373, 1.442695
        %v4436 = vpow.pop %v4435
        %v4437 = vmul.f32 %v4374, 1.442695
        %v4438 = vpow.pop %v4437
        %v4439 = vadd.f32 %v4376, %v4378
        %4440 = vadd.xlane.f32.xlu0 %v4439
        %v4441 = vpop.xlane.xlu0 %4440
        %v4442 = vadd.f32 %v4380, %v4382
        %4443 = vadd.xlane.f32.xlu0 %v4442
        %v4444 = vpop.xlane.xlu0 %4443
        %v4445 = vadd.f32 %v4384, %v4386
        %4446 = vadd.xlane.f32.xlu0 %v4445
        %v4447 = vpop.xlane.xlu0 %4446
        %v4448 = vadd.f32 %v4388, %v4390
        %4449 = vadd.xlane.f32.xlu0 %v4448
        %v4450 = vpop.xlane.xlu0 %4449
        %v4451 = vadd.f32 %v4392, %v4394
        %4452 = vadd.xlane.f32.xlu0 %v4451
        %v4453 = vpop.xlane.xlu0 %4452
        %v4454 = vadd.f32 %v4396, %v4398
        %4455 = vadd.xlane.f32.xlu0 %v4454
        %v4456 = vpop.xlane.xlu0 %4455
        %v4457 = vadd.f32 %v4400, %v4402
        %4458 = vadd.xlane.f32.xlu0 %v4457
        %v4459 = vpop.xlane.xlu0 %4458
        %v4460 = vadd.f32 %v4404, %v4406
        %4461 = vadd.xlane.f32.xlu0 %v4460
        %v4462 = vpop.xlane.xlu0 %4461
        %v4463 = vadd.f32 %v4408, %v4410
        %4464 = vadd.xlane.f32.xlu0 %v4463
        %v4465 = vpop.xlane.xlu0 %4464
        %v4466 = vadd.f32 %v4412, %v4414
        %4467 = vadd.xlane.f32.xlu0 %v4466
        %v4468 = vpop.xlane.xlu0 %4467
        %v4469 = vadd.f32 %v4416, %v4418
        %4470 = vadd.xlane.f32.xlu0 %v4469
        %v4471 = vpop.xlane.xlu0 %4470
        %v4472 = vadd.f32 %v4420, %v4422
        %4473 = vadd.xlane.f32.xlu0 %v4472
        %v4474 = vpop.xlane.xlu0 %4473
        %v4475 = vadd.f32 %v4424, %v4426
        %4476 = vadd.xlane.f32.xlu0 %v4475
        %v4477 = vpop.xlane.xlu0 %4476
        %v4478 = vadd.f32 %v4428, %v4430
        %4479 = vadd.xlane.f32.xlu0 %v4478
        %v4480 = vpop.xlane.xlu0 %4479
        %v4481 = vadd.f32 %v4432, %v4434
        %4482 = vadd.xlane.f32.xlu0 %v4481
        %v4483 = vpop.xlane.xlu0 %4482
        %v4484 = vadd.f32 %v4436, %v4438
        %4485 = vadd.xlane.f32.xlu0 %v4484
        %v4486 = vpop.xlane.xlu0 %4485
        %v4487 = vrcp.pop %v4441
        %v4488 = vrcp.pop %v4444
        %v4489 = vrcp.pop %v4447
        %v4490 = vrcp.pop %v4450
        %v4491 = vrcp.pop %v4453
        %v4492 = vrcp.pop %v4456
        %v4493 = vrcp.pop %v4459
        %v4494 = vrcp.pop %v4462
        %v4495 = vrcp.pop %v4465
        %v4496 = vrcp.pop %v4468
        %v4497 = vrcp.pop %v4471
        %v4498 = vrcp.pop %v4474
        %v4499 = vrcp.pop %v4477
        %v4500 = vrcp.pop %v4480
        %v4501 = vrcp.pop %v4483
        %v4502 = vrcp.pop %v4486
        %v4503 = vmul.f32 %v4376, %v4487
        %v4504 = vmul.f32 %v4378, %v4487
        %v4505 = vmul.f32 %v4380, %v4488
        %v4506 = vmul.f32 %v4382, %v4488
        %v4507 = vmul.f32 %v4384, %v4489
        %v4508 = vmul.f32 %v4386, %v4489
        %v4509 = vmul.f32 %v4388, %v4490
        %v4510 = vmul.f32 %v4390, %v4490
        %v4511 = vmul.f32 %v4392, %v4491
        %v4512 = vmul.f32 %v4394, %v4491
        %v4513 = vmul.f32 %v4396, %v4492
        %v4514 = vmul.f32 %v4398, %v4492
        %v4515 = vmul.f32 %v4400, %v4493
        %v4516 = vmul.f32 %v4402, %v4493
        %v4517 = vmul.f32 %v4404, %v4494
        %v4518 = vmul.f32 %v4406, %v4494
        %v4519 = vmul.f32 %v4408, %v4495
        %v4520 = vmul.f32 %v4410, %v4495
        %v4521 = vmul.f32 %v4412, %v4496
        %v4522 = vmul.f32 %v4414, %v4496
        %v4523 = vmul.f32 %v4416, %v4497
        %v4524 = vmul.f32 %v4418, %v4497
        %v4525 = vmul.f32 %v4420, %v4498
        %v4526 = vmul.f32 %v4422, %v4498
        %v4527 = vmul.f32 %v4424, %v4499
        %v4528 = vmul.f32 %v4426, %v4499
        %v4529 = vmul.f32 %v4428, %v4500
        %v4530 = vmul.f32 %v4430, %v4500
        %v4531 = vmul.f32 %v4432, %v4501
        %v4532 = vmul.f32 %v4434, %v4501
        %v4533 = vmul.f32 %v4436, %v4502
        %v4534 = vmul.f32 %v4438, %v4502
        %v4535 = vpack.c.bf16 %v4505, %v4503
        %v4536 = vpack.c.bf16 %v4506, %v4504
        %v4537 = vpack.c.bf16 %v4509, %v4507
        %v4538 = vpack.c.bf16 %v4510, %v4508
        %v4539 = vpack.c.bf16 %v4513, %v4511
        %v4540 = vpack.c.bf16 %v4514, %v4512
        %v4541 = vpack.c.bf16 %v4517, %v4515
        %v4542 = vpack.c.bf16 %v4518, %v4516
        %v4543 = vpack.c.bf16 %v4521, %v4519
        %v4544 = vpack.c.bf16 %v4522, %v4520
        %v4545 = vpack.c.bf16 %v4525, %v4523
        %v4546 = vpack.c.bf16 %v4526, %v4524
        %v4547 = vpack.c.bf16 %v4529, %v4527
        %v4548 = vpack.c.bf16 %v4530, %v4528
        %v4549 = vpack.c.bf16 %v4533, %v4531
        %v4550 = vpack.c.bf16 %v4534, %v4532
        %4551 = vmatprep.subr.bf16.mxu0 %v4536
        %4552 = vmatpush1.bf16.xpose.msra.mxu0 %v4535
        %4553 = vmatprep.subr.bf16.mxu0 %v4538
        %4554 = vmatpush1.bf16.xpose.msra.mxu0 %v4537
        %4555 = vmatprep.subr.bf16.mxu0 %v4540
        %4556 = vmatpush1.bf16.xpose.msra.mxu0 %v4539
        %4557 = vmatprep.subr.bf16.mxu0 %v4542
        %4558 = vmatpush1.bf16.xpose.msra.mxu0 %v4541
        %4559 = vmatprep.subr.bf16.mxu0 %v4544
        %4560 = vmatpush1.bf16.xpose.msra.mxu0 %v4543
        %4561 = vmatprep.subr.bf16.mxu0 %v4546
        %4562 = vmatpush1.bf16.xpose.msra.mxu0 %v4545
        %4563 = vmatprep.subr.bf16.mxu0 %v4548
        %4564 = vmatpush1.bf16.xpose.msra.mxu0 %v4547
        %4565 = vmatprep.subr.bf16.mxu0 %v4550
        %4566 = vmatpush1.bf16.xpose.msra.mxu0 %v4549
        %4567 = vmatprep.subr.bf16.mxu0 0
        %4568 = vmatpush1.bf16.xpose.msra.mxu0 0
        %4569 = vmatprep.subr.bf16.mxu0 0
        %4570 = vmatpush1.bf16.xpose.msra.mxu0 0
        %4571 = vmatprep.subr.bf16.mxu0 0
        %4572 = vmatpush1.bf16.xpose.msra.mxu0 0
        %4573 = vmatprep.subr.bf16.mxu0 0
        %4574 = vmatpush1.bf16.xpose.msra.mxu0 0
        %4575 = vmatprep.subr.bf16.mxu0 0
        %4576 = vmatpush1.bf16.xpose.msra.mxu0 0
        %4577 = vmatprep.subr.bf16.mxu0 0
        %4578 = vmatpush1.bf16.xpose.msra.mxu0 0
        %4579 = vmatprep.subr.bf16.mxu0 0
        %4580 = vmatpush1.bf16.xpose.msra.mxu0 0
        %4581 = vmatprep.subr.bf16.mxu0 0
        %4582 = vmatpush1.bf16.xpose.msra.mxu0 0
        %4583 = vmatprep.mubr.bf16.mxu0 %v3679
        %4584 = vmatmul.mubr.bf16.gmra.mrb[0].mxu0 %v3678
        %v4585 = vpop.f32.mrb[0].mxu0
        %v4586 = vadd.f32 0.0, %v4585
        %v4587 = vpop.f32.mrb[0].mxu0
        %v4588 = vpop.f32.mrb[0].mxu0
        %v4589 = vadd.f32 0.0, %v4588
        %v4590 = vpop.f32.mrb[0].mxu0
        %4591 = vdwg.mxu0
        %v4592 = vld [vmem:[%s309 + $0x1] sm:$0x1]
        %v4593 = vadd.f32 %v4592, 1.0
        %v4595 = vlaneseq
        %v4596 = vshrl.u32 %v4595, 7
        %v4597 = vsub.s32 0, %v4596
        %v4598 = vrot.slane %v4593, %v4597
        %v4600 = vmul.f32 %v4586, %v4598
        %v4601 = vmul.f32 %v4589, %v4598
        %4602 = vst [vmem:[%s348 + $0x8] sm:$0xff] %v4600
        %4603 = vst [vmem:[%s348 + $0x18] sm:$0xff] %v4601
        %s4604 = sand.u32 %s192, 1
        %s4605 = scalar_lea.sflag [#allocation5], %s4604
        %s4606 = sand.u32 %s192, 1
        %s4607 = smul.addr %s4606, 32
        %s4608 = scalar_lea.vmem [#allocation9], %s4607
        // Predicated region
        $region61: #{tpu_custom_call.1} parent=47 // pred_check
          %p4609 = pneg %p202
        $region62: #{tpu_custom_call.1} parent=47 // pred_check_branch
          %4611 = sbr.rel (%p4609) target = $region64
        $region63: #{tpu_custom_call.1} parent=47 // pred_region
          %s4613 = ssub.s32 512, 512
          %4614 = vsyncadd %s4605, %s4613
          %s4615 = smul.addr %s27, 4
          %s4616 = smul.addr %s4615, 128
          %s4617 = scalar_lea.hbm %s7, %s4616
          %s4618 = sshll.u32 %s4608, 4
          %s4619 = int_to_ptr.vmem [resolvable:$true] %s4618
          %4624 = dma.vmem_to_hbm [thread:$0]  %s4619, 512, %s4617, %s4605, 256, 256, 16
        $region64: #{tpu_custom_call.1} parent=47 // pred_fallthru
          _
      $region48: #{tpu_custom_call.1} parent=5 // pred_fallthru
        _
      %p4625 = scmp.le.s32.totalorder 2, %s22
      // Predicated region
      $region65: #{tpu_custom_call.1} parent=5 // pred_check
        %p4626 = pneg %p4625
      $region66: #{tpu_custom_call.1} parent=5 // pred_check_branch
        %4628 = sbr.rel (%p4626) target = $region68
      $region67: #{tpu_custom_call.1} parent=5 // pred_region
        %s4629 = ssub.s32 %s22, 2
        // Predicated region
        $region69: #{tpu_custom_call.1} parent=67 // pred_check
          %p4630 = pneg %p208
        $region70: #{tpu_custom_call.1} parent=67 // pred_check_branch
          %4632 = sbr.rel (%p4630) target = $region72
        $region71: #{tpu_custom_call.1} parent=67 // pred_region
          %s4633 = sand.u32 %s193, 1
          %s4634 = scalar_lea.sflag [#allocation5], %s4633
          %s4635 = sand.u32 %s193, 1
          %s4636 = smul.addr %s4635, 32
          %s4637 = scalar_lea.vmem [#allocation9], %s4636
          %4638 = dma.done %s4634, 512
        $region72: #{tpu_custom_call.1} parent=67 // pred_fallthru
          _
      $region68: #{tpu_custom_call.1} parent=5 // pred_fallthru
        _
    $region6: #{tpu_custom_call.1} parent=1 // loop_footer
      %s26 = sadd.s32 1, %s22
    $region7: #{tpu_custom_call.1} parent=1 // loop_footer_branch
      %21 = sbr.rel target = $region3
    $region8: #{tpu_custom_call.1} parent=1 // loop_exit
      _
    %4639 = vsyncpa [#allocation4], 1
    %s4640 = scalar_lea.sflag [#allocation4], 1
    %4641 = vsyncpa %s4640, 1
    %4642 = vsyncpa [#allocation7], 1
    %s4643 = scalar_lea.sflag [#allocation7], 1
    %4644 = vsyncpa %s4643, 1
    %4645 = vsyncpa [#allocation5], 1
    %s4646 = scalar_lea.sflag [#allocation5], 1
    %4647 = vsyncpa %s4646, 1

</llo_original>
